<compile_context>
chip_gen: v7x
topology: tpu7x:2x2x1
jax: 0.10.0
libtpu: 0.0.40
codegen_flags: <defaults>
</compile_context>

<pallas_src>
import numpy as np
import jax
import jax.numpy as jnp
from jax.experimental import pallas as pl
from jax.experimental.pallas import tpu as pltpu

# Geometry fixed by the module: 1x28x28 -> conv5x5 (10 ch) -> 24x24 -> maxpool2 -> 12x12.
_IMG = 28
_K = 5
_P = (_IMG - _K + 1) // 2       # 12 pooled positions per axis
_CH = 10
_BAND = 6 * _IMG                # 168: input pixels feeding one pooled row (rows 2i..2i+5)
_NPOS = 4                       # the four (r, s) positions inside each 2x2 pool window
_GW = 128                       # per-pool-shift column group width (10*12=120 padded to 128)
_HID = 50
_OUT = 10
_HPAD = 128                     # fc1 hidden width padded to a full lane tile
_OPAD = 128                     # logits padded to a full lane tile (dense output stores)


def _round_up(n, m):
    return ((n + m - 1) // m) * m


def _vmem_limit_bytes():
    """Per-chip scoped-VMEM budget (don't inherit a v7x cap on v5e/v6e).
    The kernel itself needs < 6 MiB, so this is pure headroom."""
    try:
        cap = pltpu.get_tpu_info().vmem_capacity_bytes   # 128 MiB v5e/v6e, 64 MiB v7x
        return min(cap // 2, 96 * 1024 * 1024)
    except Exception:
        return 32 * 1024 * 1024


# ---------------- fused Pallas kernel --------------------------------------------------

def _fused_cnn_kernel(x_ref, wb_ref, bc_ref, w1_ref, b1_ref, w2_ref, b2_ref,
                      o_ref, pooled_ref):
    """x_ref:  (bt, 784) f32 raw pixels (flattened 28x28), cast to bf16 in-kernel.
    wb_ref: (168, 512) bf16 shared row-band conv weight (4 shift groups x 128 cols).
    bc_ref: (1, 128) f32 conv bias per (channel, pooled-col) lane (cols 120..127 zero).
    w1_ref: (1536, 128) bf16 fc1, rows permuted to the kernel's (row, ch, col) layout.
    b1_ref: (1, 128) f32.   w2_ref: (128, 128) bf16.   b2_ref: (1, 128) f32.
    o_ref:  (bt, 128) f32 logits (cols 0..9 real).
    pooled_ref: (bt, 1536) bf16 VMEM scratch with the pooled + relu activations."""
    wb = wb_ref[...]
    bc = bc_ref[...]
    # 12 pooled rows; fully static unroll (trip count 12, static slice offsets).
    for i in range(_P):
        # Input rows 2i..2i+5 = 168 contiguous pixels of the flattened image.
        xi = x_ref[:, i * 2 * _IMG: i * 2 * _IMG + _BAND].astype(jnp.bfloat16)
        # Conv for all 10 channels, 12 pooled cols, 4 pool shifts of this row: ONE matmul.
        t = jnp.dot(xi, wb, preferred_element_type=jnp.float32)          # (bt, 512) f32
        # 2x2 max-pool = max over the four 128-lane shift groups (VPU).
        m = jnp.maximum(jnp.maximum(t[:, 0 * _GW:1 * _GW], t[:, 1 * _GW:2 * _GW]),
                        jnp.maximum(t[:, 2 * _GW:3 * _GW], t[:, 3 * _GW:4 * _GW]))
        # Bias once after the max (identical across shifts), relu, store bf16 for fc1.
        pooled_ref[:, i * _GW:(i + 1) * _GW] = (
            jnp.maximum(m + bc, 0.0).astype(jnp.bfloat16))
    # fc1 + relu, fc2 (bf16 operands, f32 accumulation); all widths 128-lane dense.
    h = jnp.dot(pooled_ref[...], w1_ref[...],
                preferred_element_type=jnp.float32) + b1_ref[...]
    h = jnp.maximum(h, 0.0)
    o_ref[...] = jnp.dot(h.astype(jnp.bfloat16), w2_ref[...],
                         preferred_element_type=jnp.float32) + b2_ref[...]


# ---------------- one-time parameter re-layout (host side) -----------------------------

def prepare_params(params):
    """Returns (wb bf16 (168, 512), bc f32 (1, 128), w1 bf16 (1536, 128),
    b1 f32 (1, 128), w2 bf16 (128, 128), b2 f32 (1, 128)).

    wb[row, g*128 + c*12 + j] = conv_w[c, 0, di, dj] with row = (r+di)*28 + (2j+s+dj)
    for shift g = (r, s); i.e. the 5x5 kernel of channel c placed at every pooled column
    j and pool shift, expressed in band-local pixel offsets (identical for every pooled
    row).  The pooled scratch column order is therefore (row i)*128 + c*12 + j, and w1
    is permuted so it matches PyTorch's CHW flatten (c*144 + i*12 + j)."""
    conv_w, conv_b, fc1_w, fc1_b, fc2_w, fc2_b = [np.asarray(p, np.float32) for p in params]

    wb = np.zeros((_BAND, _NPOS * _GW), np.float32)
    for g, (r, s) in enumerate(((0, 0), (0, 1), (1, 0), (1, 1))):
        for c in range(_CH):
            for j in range(_P):
                col = g * _GW + c * _P + j
                for di in range(_K):
                    for dj in range(_K):
                        wb[(r + di) * _IMG + (2 * j + s + dj), col] = conv_w[c, 0, di, dj]

    bc = np.zeros((1, _GW), np.float32)
    for c in range(_CH):
        bc[0, c * _P:(c + 1) * _P] = conv_b[c]

    w1 = np.zeros((_P * _GW, _HPAD), np.float32)
    for c in range(_CH):
        for i in range(_P):
            for j in range(_P):
                w1[i * _GW + c * _P + j, :_HID] = fc1_w[:, c * _P * _P + i * _P + j]
    b1 = np.zeros((1, _HPAD), np.float32)
    b1[0, :_HID] = fc1_b

    w2 = np.zeros((_HPAD, _OPAD), np.float32)
    w2[:_HID, :_OUT] = fc2_w.T
    b2 = np.zeros((1, _OPAD), np.float32)
    b2[0, :_OUT] = fc2_b

    return (jnp.asarray(wb, jnp.bfloat16), jnp.asarray(bc, jnp.float32),
            jnp.asarray(w1, jnp.bfloat16), jnp.asarray(b1, jnp.float32),
            jnp.asarray(w2, jnp.bfloat16), jnp.asarray(b2, jnp.float32))


# ---------------- forward wrapper -------------------------------------------------------

def simple_cnn_forward(x, prepared, *, batch_tile=256):
    """x: (B, 1, 28, 28) f32 NCHW -> (B, 10) f32 logits via a single fused Pallas kernel."""
    wb, bc, w1, b1, w2, b2 = prepared
    B = x.shape[0]
    # Batch tile: multiple of 8, capped at batch_tile, aimed at >= 2 grid steps so the
    # "parallel" batch axis can shard across both TensorCores on v7x.
    bt = min(batch_tile, max(8, _round_up(pl.cdiv(B, 2), 8)))
    Bp = pl.cdiv(B, bt) * bt
    xf = x.reshape(B, _IMG * _IMG)                 # stays f32; the bf16 cast is in-kernel
    if Bp != B:
        xf = jnp.pad(xf, ((0, Bp - B), (0, 0)))

    def resident(a):  # weights/biases: constant block index -> stay resident in VMEM
        return pl.BlockSpec(a.shape, lambda i: (0, 0))

    flops = 2 * Bp * (_P * _BAND * (_NPOS * _GW) + (_P * _GW) * _HPAD + _HPAD * _OPAD)
    bytes_accessed = (Bp * _IMG * _IMG * 4 + Bp * _OPAD * 4
                      + (wb.size + w1.size + w2.size) * 2
                      + (bc.size + b1.size + b2.size) * 4)

    out = pl.pallas_call(
        _fused_cnn_kernel,
        out_shape=jax.ShapeDtypeStruct((Bp, _OPAD), jnp.float32),
        grid_spec=pltpu.PrefetchScalarGridSpec(
            num_scalar_prefetch=0,
            grid=(Bp // bt,),
            in_specs=[
                pl.BlockSpec((bt, _IMG * _IMG), lambda i: (i, 0)),
                resident(wb), resident(bc), resident(w1),
                resident(b1), resident(w2), resident(b2),
            ],
            out_specs=pl.BlockSpec((bt, _OPAD), lambda i: (i, 0)),
            scratch_shapes=[pltpu.VMEM((bt, _P * _GW), jnp.bfloat16)],
        ),
        compiler_params=pltpu.CompilerParams(
            dimension_semantics=("parallel",),        # batch tiles shard across v7x's 2 TCs
            vmem_limit_bytes=_vmem_limit_bytes(),     # per-chip budget; kernel uses < 6 MiB
        ),
        cost_estimate=pl.CostEstimate(flops=flops, transcendentals=0,
                                      bytes_accessed=bytes_accessed),
    )(xf, wb, bc, w1, b1, w2, b2)
    return out[:B, :_OUT]


# ---------------- pure-JAX reference (PyTorch semantics, f32) ---------------------------

def reference_forward(x, params):
    conv_w, conv_b, fc1_w, fc1_b, fc2_w, fc2_b = params
    y = jax.lax.conv_general_dilated(
        x, conv_w, window_strides=(1, 1), padding="VALID",
        dimension_numbers=("NCHW", "OIHW", "NCHW"))
    y = jnp.maximum(y + conv_b.reshape(1, _CH, 1, 1), 0.0)
    y = jax.lax.reduce_window(y, -jnp.inf, jax.lax.max,
                              window_dimensions=(1, 1, 2, 2),
                              window_strides=(1, 1, 2, 2), padding="VALID")
    flat = y.reshape(x.shape[0], -1)                  # (B, 10*12*12) CHW order
    h = jnp.maximum(flat @ fc1_w.T + fc1_b, 0.0)
    return h @ fc2_w.T + fc2_b


# ---------------- main -------------------------------------------------------------------

if __name__ == "__main__":
    key = jax.random.PRNGKey(0)
    ks = jax.random.split(key, 7)
    B = 2

    # Deterministic synthetic parameters (PyTorch shapes).
    x = jax.random.normal(ks[0], (B, 1, 28, 28), jnp.float32)
    conv_w = 0.10 * jax.random.normal(ks[1], (10, 1, 5, 5), jnp.float32)
    conv_b = 0.10 * jax.random.normal(ks[2], (10,), jnp.float32)
    fc1_w = 0.05 * jax.random.normal(ks[3], (50, 10 * 12 * 12), jnp.float32)
    fc1_b = 0.05 * jax.random.normal(ks[4], (50,), jnp.float32)
    fc2_w = 0.10 * jax.random.normal(ks[5], (10, 50), jnp.float32)
    fc2_b = 0.10 * jax.random.normal(ks[6], (10,), jnp.float32)
    params = (conv_w, conv_b, fc1_w, fc1_b, fc2_w, fc2_b)

    prepared = prepare_params(params)                 # one-time weight re-layout

    out = jax.block_until_ready(simple_cnn_forward(x, prepared))
    ref = jax.block_until_ready(reference_forward(x, params))

    assert out.shape == (B, 10)
    # Tolerance reflects bf16 MXU operands (f32 accumulation); logic errors would be >> this.
    np.testing.assert_allclose(np.asarray(out), np.asarray(ref), rtol=1e-2, atol=2e-2)
    print("KERNEL_OK")
</pallas_src>

<mosaic_0001>
module attributes {stable_mosaic.version = 11 : i64} {
  func.func @_fused_cnn_kernel(%arg0: i32, %arg1: memref<8x784xf32, #tpu.memory_space<vmem>>, %arg2: memref<168x512xbf16, #tpu.memory_space<vmem>>, %arg3: memref<1x128xf32, #tpu.memory_space<vmem>>, %arg4: memref<1536x128xbf16, #tpu.memory_space<vmem>>, %arg5: memref<1x128xf32, #tpu.memory_space<vmem>>, %arg6: memref<128x128xbf16, #tpu.memory_space<vmem>>, %arg7: memref<1x128xf32, #tpu.memory_space<vmem>>, %arg8: memref<8x128xf32, #tpu.memory_space<vmem>>, %arg9: memref<8x1536xbf16, #tpu.memory_space<vmem>>) attributes {dimension_semantics = [#tpu.dimension_semantics<parallel>], iteration_bounds = array<i64: 1>, scalar_prefetch = 0 : i64, scratch_operands = 1 : i64, tpu.core_type = #tpu.core_type<tc>, window_params = [{transform_indices = @transform_0, window_bounds = array<i64: 8, 784>}, {pipeline_mode = #tpu.pipeline_mode<synchronous>, transform_indices = @transform_1, window_bounds = array<i64: 168, 512>}, {pipeline_mode = #tpu.pipeline_mode<synchronous>, transform_indices = @transform_2, window_bounds = array<i64: 1, 128>}, {pipeline_mode = #tpu.pipeline_mode<synchronous>, transform_indices = @transform_3, window_bounds = array<i64: 1536, 128>}, {pipeline_mode = #tpu.pipeline_mode<synchronous>, transform_indices = @transform_4, window_bounds = array<i64: 1, 128>}, {pipeline_mode = #tpu.pipeline_mode<synchronous>, transform_indices = @transform_5, window_bounds = array<i64: 128, 128>}, {pipeline_mode = #tpu.pipeline_mode<synchronous>, transform_indices = @transform_6, window_bounds = array<i64: 1, 128>}, {transform_indices = @transform_7, window_bounds = array<i64: 8, 128>}]} {
    %c0 = arith.constant 0 : index
    %c0_0 = arith.constant 0 : index
    %0 = vector.load %arg2[%c0, %c0_0] : memref<168x512xbf16, #tpu.memory_space<vmem>>, vector<168x512xbf16>
    %c0_1 = arith.constant 0 : index
    %c0_2 = arith.constant 0 : index
    %1 = vector.load %arg3[%c0_1, %c0_2] : memref<1x128xf32, #tpu.memory_space<vmem>>, vector<1x128xf32>
    %c0_3 = arith.constant 0 : index
    %c0_4 = arith.constant 0 : index
    %2 = vector.load %arg1[%c0_3, %c0_4] : memref<8x784xf32, #tpu.memory_space<vmem>>, vector<8x168xf32>
    %3 = arith.truncf %2 : vector<8x168xf32> to vector<8x168xbf16>
    %cst = arith.constant dense<0.000000e+00> : vector<8x512xf32>
    %4 = tpu.matmul %3, %0, %cst {dimension_numbers = #tpu.dot_dimension_numbers<[1], [0], [0], [1], [0, 0, 1, 1], [], []>} : vector<8x168xbf16>, vector<168x512xbf16>, vector<8x512xf32> -> vector<8x512xf32>
    %5 = vector.extract_strided_slice %4 {offsets = [0, 0], sizes = [8, 128], strides = [1, 1]} : vector<8x512xf32> to vector<8x128xf32>
    %6 = vector.extract_strided_slice %4 {offsets = [0, 128], sizes = [8, 128], strides = [1, 1]} : vector<8x512xf32> to vector<8x128xf32>
    %7 = arith.maximumf %5, %6 : vector<8x128xf32>
    %8 = vector.extract_strided_slice %4 {offsets = [0, 256], sizes = [8, 128], strides = [1, 1]} : vector<8x512xf32> to vector<8x128xf32>
    %9 = vector.extract_strided_slice %4 {offsets = [0, 384], sizes = [8, 128], strides = [1, 1]} : vector<8x512xf32> to vector<8x128xf32>
    %10 = arith.maximumf %8, %9 : vector<8x128xf32>
    %11 = arith.maximumf %7, %10 : vector<8x128xf32>
    %12 = vector.broadcast %1 : vector<1x128xf32> to vector<8x128xf32>
    %13 = arith.addf %11, %12 : vector<8x128xf32>
    %cst_5 = arith.constant 0.000000e+00 : f32
    %14 = vector.broadcast %cst_5 : f32 to vector<8x128xf32>
    %15 = arith.maximumf %13, %14 : vector<8x128xf32>
    %16 = arith.truncf %15 : vector<8x128xf32> to vector<8x128xbf16>
    %c0_6 = arith.constant 0 : index
    %c0_7 = arith.constant 0 : index
    %17 = vector.load %arg9[%c0_6, %c0_7] : memref<8x1536xbf16, #tpu.memory_space<vmem>>, vector<8x128xbf16>
    tpu.vector_store %arg9[%c0_6, %c0_7], %16 {strides = array<i32>} : memref<8x1536xbf16, #tpu.memory_space<vmem>>, vector<8x128xbf16>,
    %c0_8 = arith.constant 0 : index
    %c56 = arith.constant 56 : index
    %18 = vector.load %arg1[%c0_8, %c56] : memref<8x784xf32, #tpu.memory_space<vmem>>, vector<8x168xf32>
    %19 = arith.truncf %18 : vector<8x168xf32> to vector<8x168xbf16>
    %cst_9 = arith.constant dense<0.000000e+00> : vector<8x512xf32>
    %20 = tpu.matmul %19, %0, %cst_9 {dimension_numbers = #tpu.dot_dimension_numbers<[1], [0], [0], [1], [0, 0, 1, 1], [], []>} : vector<8x168xbf16>, vector<168x512xbf16>, vector<8x512xf32> -> vector<8x512xf32>
    %21 = vector.extract_strided_slice %20 {offsets = [0, 0], sizes = [8, 128], strides = [1, 1]} : vector<8x512xf32> to vector<8x128xf32>
    %22 = vector.extract_strided_slice %20 {offsets = [0, 128], sizes = [8, 128], strides = [1, 1]} : vector<8x512xf32> to vector<8x128xf32>
    %23 = arith.maximumf %21, %22 : vector<8x128xf32>
    %24 = vector.extract_strided_slice %20 {offsets = [0, 256], sizes = [8, 128], strides = [1, 1]} : vector<8x512xf32> to vector<8x128xf32>
    %25 = vector.extract_strided_slice %20 {offsets = [0, 384], sizes = [8, 128], strides = [1, 1]} : vector<8x512xf32> to vector<8x128xf32>
    %26 = arith.maximumf %24, %25 : vector<8x128xf32>
    %27 = arith.maximumf %23, %26 : vector<8x128xf32>
    %28 = vector.broadcast %1 : vector<1x128xf32> to vector<8x128xf32>
    %29 = arith.addf %27, %28 : vector<8x128xf32>
    %cst_10 = arith.constant 0.000000e+00 : f32
    %30 = vector.broadcast %cst_10 : f32 to vector<8x128xf32>
    %31 = arith.maximumf %29, %30 : vector<8x128xf32>
    %32 = arith.truncf %31 : vector<8x128xf32> to vector<8x128xbf16>
    %c0_11 = arith.constant 0 : index
    %c128 = arith.constant 128 : index
    %33 = vector.load %arg9[%c0_11, %c128] : memref<8x1536xbf16, #tpu.memory_space<vmem>>, vector<8x128xbf16>
    tpu.vector_store %arg9[%c0_11, %c128], %32 {strides = array<i32>} : memref<8x1536xbf16, #tpu.memory_space<vmem>>, vector<8x128xbf16>,
    %c0_12 = arith.constant 0 : index
    %c112 = arith.constant 112 : index
    %34 = vector.load %arg1[%c0_12, %c112] : memref<8x784xf32, #tpu.memory_space<vmem>>, vector<8x168xf32>
    %35 = arith.truncf %34 : vector<8x168xf32> to vector<8x168xbf16>
    %cst_13 = arith.constant dense<0.000000e+00> : vector<8x512xf32>
    %36 = tpu.matmul %35, %0, %cst_13 {dimension_numbers = #tpu.dot_dimension_numbers<[1], [0], [0], [1], [0, 0, 1, 1], [], []>} : vector<8x168xbf16>, vector<168x512xbf16>, vector<8x512xf32> -> vector<8x512xf32>
    %37 = vector.extract_strided_slice %36 {offsets = [0, 0], sizes = [8, 128], strides = [1, 1]} : vector<8x512xf32> to vector<8x128xf32>
    %38 = vector.extract_strided_slice %36 {offsets = [0, 128], sizes = [8, 128], strides = [1, 1]} : vector<8x512xf32> to vector<8x128xf32>
    %39 = arith.maximumf %37, %38 : vector<8x128xf32>
    %40 = vector.extract_strided_slice %36 {offsets = [0, 256], sizes = [8, 128], strides = [1, 1]} : vector<8x512xf32> to vector<8x128xf32>
    %41 = vector.extract_strided_slice %36 {offsets = [0, 384], sizes = [8, 128], strides = [1, 1]} : vector<8x512xf32> to vector<8x128xf32>
    %42 = arith.maximumf %40, %41 : vector<8x128xf32>
    %43 = arith.maximumf %39, %42 : vector<8x128xf32>
    %44 = vector.broadcast %1 : vector<1x128xf32> to vector<8x128xf32>
    %45 = arith.addf %43, %44 : vector<8x128xf32>
    %cst_14 = arith.constant 0.000000e+00 : f32
    %46 = vector.broadcast %cst_14 : f32 to vector<8x128xf32>
    %47 = arith.maximumf %45, %46 : vector<8x128xf32>
    %48 = arith.truncf %47 : vector<8x128xf32> to vector<8x128xbf16>
    %c0_15 = arith.constant 0 : index
    %c256 = arith.constant 256 : index
    %49 = vector.load %arg9[%c0_15, %c256] : memref<8x1536xbf16, #tpu.memory_space<vmem>>, vector<8x128xbf16>
    tpu.vector_store %arg9[%c0_15, %c256], %48 {strides = array<i32>} : memref<8x1536xbf16, #tpu.memory_space<vmem>>, vector<8x128xbf16>,
    %c0_16 = arith.constant 0 : index
    %c168 = arith.constant 168 : index
    %50 = vector.load %arg1[%c0_16, %c168] : memref<8x784xf32, #tpu.memory_space<vmem>>, vector<8x168xf32>
    %51 = arith.truncf %50 : vector<8x168xf32> to vector<8x168xbf16>
    %cst_17 = arith.constant dense<0.000000e+00> : vector<8x512xf32>
    %52 = tpu.matmul %51, %0, %cst_17 {dimension_numbers = #tpu.dot_dimension_numbers<[1], [0], [0], [1], [0, 0, 1, 1], [], []>} : vector<8x168xbf16>, vector<168x512xbf16>, vector<8x512xf32> -> vector<8x512xf32>
    %53 = vector.extract_strided_slice %52 {offsets = [0, 0], sizes = [8, 128], strides = [1, 1]} : vector<8x512xf32> to vector<8x128xf32>
    %54 = vector.extract_strided_slice %52 {offsets = [0, 128], sizes = [8, 128], strides = [1, 1]} : vector<8x512xf32> to vector<8x128xf32>
    %55 = arith.maximumf %53, %54 : vector<8x128xf32>
    %56 = vector.extract_strided_slice %52 {offsets = [0, 256], sizes = [8, 128], strides = [1, 1]} : vector<8x512xf32> to vector<8x128xf32>
    %57 = vector.extract_strided_slice %52 {offsets = [0, 384], sizes = [8, 128], strides = [1, 1]} : vector<8x512xf32> to vector<8x128xf32>
    %58 = arith.maximumf %56, %57 : vector<8x128xf32>
    %59 = arith.maximumf %55, %58 : vector<8x128xf32>
    %60 = vector.broadcast %1 : vector<1x128xf32> to vector<8x128xf32>
    %61 = arith.addf %59, %60 : vector<8x128xf32>
    %cst_18 = arith.constant 0.000000e+00 : f32
    %62 = vector.broadcast %cst_18 : f32 to vector<8x128xf32>
    %63 = arith.maximumf %61, %62 : vector<8x128xf32>
    %64 = arith.truncf %63 : vector<8x128xf32> to vector<8x128xbf16>
    %c0_19 = arith.constant 0 : index
    %c384 = arith.constant 384 : index
    %65 = vector.load %arg9[%c0_19, %c384] : memref<8x1536xbf16, #tpu.memory_space<vmem>>, vector<8x128xbf16>
    tpu.vector_store %arg9[%c0_19, %c384], %64 {strides = array<i32>} : memref<8x1536xbf16, #tpu.memory_space<vmem>>, vector<8x128xbf16>,
    %c0_20 = arith.constant 0 : index
    %c224 = arith.constant 224 : index
    %66 = vector.load %arg1[%c0_20, %c224] : memref<8x784xf32, #tpu.memory_space<vmem>>, vector<8x168xf32>
    %67 = arith.truncf %66 : vector<8x168xf32> to vector<8x168xbf16>
    %cst_21 = arith.constant dense<0.000000e+00> : vector<8x512xf32>
    %68 = tpu.matmul %67, %0, %cst_21 {dimension_numbers = #tpu.dot_dimension_numbers<[1], [0], [0], [1], [0, 0, 1, 1], [], []>} : vector<8x168xbf16>, vector<168x512xbf16>, vector<8x512xf32> -> vector<8x512xf32>
    %69 = vector.extract_strided_slice %68 {offsets = [0, 0], sizes = [8, 128], strides = [1, 1]} : vector<8x512xf32> to vector<8x128xf32>
    %70 = vector.extract_strided_slice %68 {offsets = [0, 128], sizes = [8, 128], strides = [1, 1]} : vector<8x512xf32> to vector<8x128xf32>
    %71 = arith.maximumf %69, %70 : vector<8x128xf32>
    %72 = vector.extract_strided_slice %68 {offsets = [0, 256], sizes = [8, 128], strides = [1, 1]} : vector<8x512xf32> to vector<8x128xf32>
    %73 = vector.extract_strided_slice %68 {offsets = [0, 384], sizes = [8, 128], strides = [1, 1]} : vector<8x512xf32> to vector<8x128xf32>
    %74 = arith.maximumf %72, %73 : vector<8x128xf32>
    %75 = arith.maximumf %71, %74 : vector<8x128xf32>
    %76 = vector.broadcast %1 : vector<1x128xf32> to vector<8x128xf32>
    %77 = arith.addf %75, %76 : vector<8x128xf32>
    %cst_22 = arith.constant 0.000000e+00 : f32
    %78 = vector.broadcast %cst_22 : f32 to vector<8x128xf32>
    %79 = arith.maximumf %77, %78 : vector<8x128xf32>
    %80 = arith.truncf %79 : vector<8x128xf32> to vector<8x128xbf16>
    %c0_23 = arith.constant 0 : index
    %c512 = arith.constant 512 : index
    %81 = vector.load %arg9[%c0_23, %c512] : memref<8x1536xbf16, #tpu.memory_space<vmem>>, vector<8x128xbf16>
    tpu.vector_store %arg9[%c0_23, %c512], %80 {strides = array<i32>} : memref<8x1536xbf16, #tpu.memory_space<vmem>>, vector<8x128xbf16>,
    %c0_24 = arith.constant 0 : index
    %c280 = arith.constant 280 : index
    %82 = vector.load %arg1[%c0_24, %c280] : memref<8x784xf32, #tpu.memory_space<vmem>>, vector<8x168xf32>
    %83 = arith.truncf %82 : vector<8x168xf32> to vector<8x168xbf16>
    %cst_25 = arith.constant dense<0.000000e+00> : vector<8x512xf32>
    %84 = tpu.matmul %83, %0, %cst_25 {dimension_numbers = #tpu.dot_dimension_numbers<[1], [0], [0], [1], [0, 0, 1, 1], [], []>} : vector<8x168xbf16>, vector<168x512xbf16>, vector<8x512xf32> -> vector<8x512xf32>
    %85 = vector.extract_strided_slice %84 {offsets = [0, 0], sizes = [8, 128], strides = [1, 1]} : vector<8x512xf32> to vector<8x128xf32>
    %86 = vector.extract_strided_slice %84 {offsets = [0, 128], sizes = [8, 128], strides = [1, 1]} : vector<8x512xf32> to vector<8x128xf32>
    %87 = arith.maximumf %85, %86 : vector<8x128xf32>
    %88 = vector.extract_strided_slice %84 {offsets = [0, 256], sizes = [8, 128], strides = [1, 1]} : vector<8x512xf32> to vector<8x128xf32>
    %89 = vector.extract_strided_slice %84 {offsets = [0, 384], sizes = [8, 128], strides = [1, 1]} : vector<8x512xf32> to vector<8x128xf32>
    %90 = arith.maximumf %88, %89 : vector<8x128xf32>
    %91 = arith.maximumf %87, %90 : vector<8x128xf32>
    %92 = vector.broadcast %1 : vector<1x128xf32> to vector<8x128xf32>
    %93 = arith.addf %91, %92 : vector<8x128xf32>
    %cst_26 = arith.constant 0.000000e+00 : f32
    %94 = vector.broadcast %cst_26 : f32 to vector<8x128xf32>
    %95 = arith.maximumf %93, %94 : vector<8x128xf32>
    %96 = arith.truncf %95 : vector<8x128xf32> to vector<8x128xbf16>
    %c0_27 = arith.constant 0 : index
    %c640 = arith.constant 640 : index
    %97 = vector.load %arg9[%c0_27, %c640] : memref<8x1536xbf16, #tpu.memory_space<vmem>>, vector<8x128xbf16>
    tpu.vector_store %arg9[%c0_27, %c640], %96 {strides = array<i32>} : memref<8x1536xbf16, #tpu.memory_space<vmem>>, vector<8x128xbf16>,
    %c0_28 = arith.constant 0 : index
    %c336 = arith.constant 336 : index
    %98 = vector.load %arg1[%c0_28, %c336] : memref<8x784xf32, #tpu.memory_space<vmem>>, vector<8x168xf32>
    %99 = arith.truncf %98 : vector<8x168xf32> to vector<8x168xbf16>
    %cst_29 = arith.constant dense<0.000000e+00> : vector<8x512xf32>
    %100 = tpu.matmul %99, %0, %cst_29 {dimension_numbers = #tpu.dot_dimension_numbers<[1], [0], [0], [1], [0, 0, 1, 1], [], []>} : vector<8x168xbf16>, vector<168x512xbf16>, vector<8x512xf32> -> vector<8x512xf32>
    %101 = vector.extract_strided_slice %100 {offsets = [0, 0], sizes = [8, 128], strides = [1, 1]} : vector<8x512xf32> to vector<8x128xf32>
    %102 = vector.extract_strided_slice %100 {offsets = [0, 128], sizes = [8, 128], strides = [1, 1]} : vector<8x512xf32> to vector<8x128xf32>
    %103 = arith.maximumf %101, %102 : vector<8x128xf32>
    %104 = vector.extract_strided_slice %100 {offsets = [0, 256], sizes = [8, 128], strides = [1, 1]} : vector<8x512xf32> to vector<8x128xf32>
    %105 = vector.extract_strided_slice %100 {offsets = [0, 384], sizes = [8, 128], strides = [1, 1]} : vector<8x512xf32> to vector<8x128xf32>
    %106 = arith.maximumf %104, %105 : vector<8x128xf32>
    %107 = arith.maximumf %103, %106 : vector<8x128xf32>
    %108 = vector.broadcast %1 : vector<1x128xf32> to vector<8x128xf32>
    %109 = arith.addf %107, %108 : vector<8x128xf32>
    %cst_30 = arith.constant 0.000000e+00 : f32
    %110 = vector.broadcast %cst_30 : f32 to vector<8x128xf32>
    %111 = arith.maximumf %109, %110 : vector<8x128xf32>
    %112 = arith.truncf %111 : vector<8x128xf32> to vector<8x128xbf16>
    %c0_31 = arith.constant 0 : index
    %c768 = arith.constant 768 : index
    %113 = vector.load %arg9[%c0_31, %c768] : memref<8x1536xbf16, #tpu.memory_space<vmem>>, vector<8x128xbf16>
    tpu.vector_store %arg9[%c0_31, %c768], %112 {strides = array<i32>} : memref<8x1536xbf16, #tpu.memory_space<vmem>>, vector<8x128xbf16>,
    %c0_32 = arith.constant 0 : index
    %c392 = arith.constant 392 : index
    %114 = vector.load %arg1[%c0_32, %c392] : memref<8x784xf32, #tpu.memory_space<vmem>>, vector<8x168xf32>
    %115 = arith.truncf %114 : vector<8x168xf32> to vector<8x168xbf16>
    %cst_33 = arith.constant dense<0.000000e+00> : vector<8x512xf32>
    %116 = tpu.matmul %115, %0, %cst_33 {dimension_numbers = #tpu.dot_dimension_numbers<[1], [0], [0], [1], [0, 0, 1, 1], [], []>} : vector<8x168xbf16>, vector<168x512xbf16>, vector<8x512xf32> -> vector<8x512xf32>
    %117 = vector.extract_strided_slice %116 {offsets = [0, 0], sizes = [8, 128], strides = [1, 1]} : vector<8x512xf32> to vector<8x128xf32>
    %118 = vector.extract_strided_slice %116 {offsets = [0, 128], sizes = [8, 128], strides = [1, 1]} : vector<8x512xf32> to vector<8x128xf32>
    %119 = arith.maximumf %117, %118 : vector<8x128xf32>
    %120 = vector.extract_strided_slice %116 {offsets = [0, 256], sizes = [8, 128], strides = [1, 1]} : vector<8x512xf32> to vector<8x128xf32>
    %121 = vector.extract_strided_slice %116 {offsets = [0, 384], sizes = [8, 128], strides = [1, 1]} : vector<8x512xf32> to vector<8x128xf32>
    %122 = arith.maximumf %120, %121 : vector<8x128xf32>
    %123 = arith.maximumf %119, %122 : vector<8x128xf32>
    %124 = vector.broadcast %1 : vector<1x128xf32> to vector<8x128xf32>
    %125 = arith.addf %123, %124 : vector<8x128xf32>
    %cst_34 = arith.constant 0.000000e+00 : f32
    %126 = vector.broadcast %cst_34 : f32 to vector<8x128xf32>
    %127 = arith.maximumf %125, %126 : vector<8x128xf32>
    %128 = arith.truncf %127 : vector<8x128xf32> to vector<8x128xbf16>
    %c0_35 = arith.constant 0 : index
    %c896 = arith.constant 896 : index
    %129 = vector.load %arg9[%c0_35, %c896] : memref<8x1536xbf16, #tpu.memory_space<vmem>>, vector<8x128xbf16>
    tpu.vector_store %arg9[%c0_35, %c896], %128 {strides = array<i32>} : memref<8x1536xbf16, #tpu.memory_space<vmem>>, vector<8x128xbf16>,
    %c0_36 = arith.constant 0 : index
    %c448 = arith.constant 448 : index
    %130 = vector.load %arg1[%c0_36, %c448] : memref<8x784xf32, #tpu.memory_space<vmem>>, vector<8x168xf32>
    %131 = arith.truncf %130 : vector<8x168xf32> to vector<8x168xbf16>
    %cst_37 = arith.constant dense<0.000000e+00> : vector<8x512xf32>
    %132 = tpu.matmul %131, %0, %cst_37 {dimension_numbers = #tpu.dot_dimension_numbers<[1], [0], [0], [1], [0, 0, 1, 1], [], []>} : vector<8x168xbf16>, vector<168x512xbf16>, vector<8x512xf32> -> vector<8x512xf32>
    %133 = vector.extract_strided_slice %132 {offsets = [0, 0], sizes = [8, 128], strides = [1, 1]} : vector<8x512xf32> to vector<8x128xf32>
    %134 = vector.extract_strided_slice %132 {offsets = [0, 128], sizes = [8, 128], strides = [1, 1]} : vector<8x512xf32> to vector<8x128xf32>
    %135 = arith.maximumf %133, %134 : vector<8x128xf32>
    %136 = vector.extract_strided_slice %132 {offsets = [0, 256], sizes = [8, 128], strides = [1, 1]} : vector<8x512xf32> to vector<8x128xf32>
    %137 = vector.extract_strided_slice %132 {offsets = [0, 384], sizes = [8, 128], strides = [1, 1]} : vector<8x512xf32> to vector<8x128xf32>
    %138 = arith.maximumf %136, %137 : vector<8x128xf32>
    %139 = arith.maximumf %135, %138 : vector<8x128xf32>
    %140 = vector.broadcast %1 : vector<1x128xf32> to vector<8x128xf32>
    %141 = arith.addf %139, %140 : vector<8x128xf32>
    %cst_38 = arith.constant 0.000000e+00 : f32
    %142 = vector.broadcast %cst_38 : f32 to vector<8x128xf32>
    %143 = arith.maximumf %141, %142 : vector<8x128xf32>
    %144 = arith.truncf %143 : vector<8x128xf32> to vector<8x128xbf16>
    %c0_39 = arith.constant 0 : index
    %c1024 = arith.constant 1024 : index
    %145 = vector.load %arg9[%c0_39, %c1024] : memref<8x1536xbf16, #tpu.memory_space<vmem>>, vector<8x128xbf16>
    tpu.vector_store %arg9[%c0_39, %c1024], %144 {strides = array<i32>} : memref<8x1536xbf16, #tpu.memory_space<vmem>>, vector<8x128xbf16>,
    %c0_40 = arith.constant 0 : index
    %c504 = arith.constant 504 : index
    %146 = vector.load %arg1[%c0_40, %c504] : memref<8x784xf32, #tpu.memory_space<vmem>>, vector<8x168xf32>
    %147 = arith.truncf %146 : vector<8x168xf32> to vector<8x168xbf16>
    %cst_41 = arith.constant dense<0.000000e+00> : vector<8x512xf32>
    %148 = tpu.matmul %147, %0, %cst_41 {dimension_numbers = #tpu.dot_dimension_numbers<[1], [0], [0], [1], [0, 0, 1, 1], [], []>} : vector<8x168xbf16>, vector<168x512xbf16>, vector<8x512xf32> -> vector<8x512xf32>
    %149 = vector.extract_strided_slice %148 {offsets = [0, 0], sizes = [8, 128], strides = [1, 1]} : vector<8x512xf32> to vector<8x128xf32>
    %150 = vector.extract_strided_slice %148 {offsets = [0, 128], sizes = [8, 128], strides = [1, 1]} : vector<8x512xf32> to vector<8x128xf32>
    %151 = arith.maximumf %149, %150 : vector<8x128xf32>
    %152 = vector.extract_strided_slice %148 {offsets = [0, 256], sizes = [8, 128], strides = [1, 1]} : vector<8x512xf32> to vector<8x128xf32>
    %153 = vector.extract_strided_slice %148 {offsets = [0, 384], sizes = [8, 128], strides = [1, 1]} : vector<8x512xf32> to vector<8x128xf32>
    %154 = arith.maximumf %152, %153 : vector<8x128xf32>
    %155 = arith.maximumf %151, %154 : vector<8x128xf32>
    %156 = vector.broadcast %1 : vector<1x128xf32> to vector<8x128xf32>
    %157 = arith.addf %155, %156 : vector<8x128xf32>
    %cst_42 = arith.constant 0.000000e+00 : f32
    %158 = vector.broadcast %cst_42 : f32 to vector<8x128xf32>
    %159 = arith.maximumf %157, %158 : vector<8x128xf32>
    %160 = arith.truncf %159 : vector<8x128xf32> to vector<8x128xbf16>
    %c0_43 = arith.constant 0 : index
    %c1152 = arith.constant 1152 : index
    %161 = vector.load %arg9[%c0_43, %c1152] : memref<8x1536xbf16, #tpu.memory_space<vmem>>, vector<8x128xbf16>
    tpu.vector_store %arg9[%c0_43, %c1152], %160 {strides = array<i32>} : memref<8x1536xbf16, #tpu.memory_space<vmem>>, vector<8x128xbf16>,
    %c0_44 = arith.constant 0 : index
    %c560 = arith.constant 560 : index
    %162 = vector.load %arg1[%c0_44, %c560] : memref<8x784xf32, #tpu.memory_space<vmem>>, vector<8x168xf32>
    %163 = arith.truncf %162 : vector<8x168xf32> to vector<8x168xbf16>
    %cst_45 = arith.constant dense<0.000000e+00> : vector<8x512xf32>
    %164 = tpu.matmul %163, %0, %cst_45 {dimension_numbers = #tpu.dot_dimension_numbers<[1], [0], [0], [1], [0, 0, 1, 1], [], []>} : vector<8x168xbf16>, vector<168x512xbf16>, vector<8x512xf32> -> vector<8x512xf32>
    %165 = vector.extract_strided_slice %164 {offsets = [0, 0], sizes = [8, 128], strides = [1, 1]} : vector<8x512xf32> to vector<8x128xf32>
    %166 = vector.extract_strided_slice %164 {offsets = [0, 128], sizes = [8, 128], strides = [1, 1]} : vector<8x512xf32> to vector<8x128xf32>
    %167 = arith.maximumf %165, %166 : vector<8x128xf32>
    %168 = vector.extract_strided_slice %164 {offsets = [0, 256], sizes = [8, 128], strides = [1, 1]} : vector<8x512xf32> to vector<8x128xf32>
    %169 = vector.extract_strided_slice %164 {offsets = [0, 384], sizes = [8, 128], strides = [1, 1]} : vector<8x512xf32> to vector<8x128xf32>
    %170 = arith.maximumf %168, %169 : vector<8x128xf32>
    %171 = arith.maximumf %167, %170 : vector<8x128xf32>
    %172 = vector.broadcast %1 : vector<1x128xf32> to vector<8x128xf32>
    %173 = arith.addf %171, %172 : vector<8x128xf32>
    %cst_46 = arith.constant 0.000000e+00 : f32
    %174 = vector.broadcast %cst_46 : f32 to vector<8x128xf32>
    %175 = arith.maximumf %173, %174 : vector<8x128xf32>
    %176 = arith.truncf %175 : vector<8x128xf32> to vector<8x128xbf16>
    %c0_47 = arith.constant 0 : index
    %c1280 = arith.constant 1280 : index
    %177 = vector.load %arg9[%c0_47, %c1280] : memref<8x1536xbf16, #tpu.memory_space<vmem>>, vector<8x128xbf16>
    tpu.vector_store %arg9[%c0_47, %c1280], %176 {strides = array<i32>} : memref<8x1536xbf16, #tpu.memory_space<vmem>>, vector<8x128xbf16>,
    %c0_48 = arith.constant 0 : index
    %c616 = arith.constant 616 : index
    %178 = vector.load %arg1[%c0_48, %c616] : memref<8x784xf32, #tpu.memory_space<vmem>>, vector<8x168xf32>
    %179 = arith.truncf %178 : vector<8x168xf32> to vector<8x168xbf16>
    %cst_49 = arith.constant dense<0.000000e+00> : vector<8x512xf32>
    %180 = tpu.matmul %179, %0, %cst_49 {dimension_numbers = #tpu.dot_dimension_numbers<[1], [0], [0], [1], [0, 0, 1, 1], [], []>} : vector<8x168xbf16>, vector<168x512xbf16>, vector<8x512xf32> -> vector<8x512xf32>
    %181 = vector.extract_strided_slice %180 {offsets = [0, 0], sizes = [8, 128], strides = [1, 1]} : vector<8x512xf32> to vector<8x128xf32>
    %182 = vector.extract_strided_slice %180 {offsets = [0, 128], sizes = [8, 128], strides = [1, 1]} : vector<8x512xf32> to vector<8x128xf32>
    %183 = arith.maximumf %181, %182 : vector<8x128xf32>
    %184 = vector.extract_strided_slice %180 {offsets = [0, 256], sizes = [8, 128], strides = [1, 1]} : vector<8x512xf32> to vector<8x128xf32>
    %185 = vector.extract_strided_slice %180 {offsets = [0, 384], sizes = [8, 128], strides = [1, 1]} : vector<8x512xf32> to vector<8x128xf32>
    %186 = arith.maximumf %184, %185 : vector<8x128xf32>
    %187 = arith.maximumf %183, %186 : vector<8x128xf32>
    %188 = vector.broadcast %1 : vector<1x128xf32> to vector<8x128xf32>
    %189 = arith.addf %187, %188 : vector<8x128xf32>
    %cst_50 = arith.constant 0.000000e+00 : f32
    %190 = vector.broadcast %cst_50 : f32 to vector<8x128xf32>
    %191 = arith.maximumf %189, %190 : vector<8x128xf32>
    %192 = arith.truncf %191 : vector<8x128xf32> to vector<8x128xbf16>
    %c0_51 = arith.constant 0 : index
    %c1408 = arith.constant 1408 : index
    %193 = vector.load %arg9[%c0_51, %c1408] : memref<8x1536xbf16, #tpu.memory_space<vmem>>, vector<8x128xbf16>
    tpu.vector_store %arg9[%c0_51, %c1408], %192 {strides = array<i32>} : memref<8x1536xbf16, #tpu.memory_space<vmem>>, vector<8x128xbf16>,
    %c0_52 = arith.constant 0 : index
    %c0_53 = arith.constant 0 : index
    %194 = vector.load %arg9[%c0_52, %c0_53] : memref<8x1536xbf16, #tpu.memory_space<vmem>>, vector<8x1536xbf16>
    %c0_54 = arith.constant 0 : index
    %c0_55 = arith.constant 0 : index
    %195 = vector.load %arg4[%c0_54, %c0_55] : memref<1536x128xbf16, #tpu.memory_space<vmem>>, vector<1536x128xbf16>
    %cst_56 = arith.constant dense<0.000000e+00> : vector<8x128xf32>
    %196 = tpu.matmul %194, %195, %cst_56 {dimension_numbers = #tpu.dot_dimension_numbers<[1], [0], [0], [1], [0, 0, 1, 1], [], []>} : vector<8x1536xbf16>, vector<1536x128xbf16>, vector<8x128xf32> -> vector<8x128xf32>
    %c0_57 = arith.constant 0 : index
    %c0_58 = arith.constant 0 : index
    %197 = vector.load %arg5[%c0_57, %c0_58] : memref<1x128xf32, #tpu.memory_space<vmem>>, vector<1x128xf32>
    %198 = vector.broadcast %197 : vector<1x128xf32> to vector<8x128xf32>
    %199 = arith.addf %196, %198 : vector<8x128xf32>
    %cst_59 = arith.constant 0.000000e+00 : f32
    %200 = vector.broadcast %cst_59 : f32 to vector<8x128xf32>
    %201 = arith.maximumf %199, %200 : vector<8x128xf32>
    %202 = arith.truncf %201 : vector<8x128xf32> to vector<8x128xbf16>
    %c0_60 = arith.constant 0 : index
    %c0_61 = arith.constant 0 : index
    %203 = vector.load %arg6[%c0_60, %c0_61] : memref<128x128xbf16, #tpu.memory_space<vmem>>, vector<128x128xbf16>
    %cst_62 = arith.constant dense<0.000000e+00> : vector<8x128xf32>
    %204 = tpu.matmul %202, %203, %cst_62 {dimension_numbers = #tpu.dot_dimension_numbers<[1], [0], [0], [1], [0, 0, 1, 1], [], []>} : vector<8x128xbf16>, vector<128x128xbf16>, vector<8x128xf32> -> vector<8x128xf32>
    %c0_63 = arith.constant 0 : index
    %c0_64 = arith.constant 0 : index
    %205 = vector.load %arg7[%c0_63, %c0_64] : memref<1x128xf32, #tpu.memory_space<vmem>>, vector<1x128xf32>
    %206 = vector.broadcast %205 : vector<1x128xf32> to vector<8x128xf32>
    %207 = arith.addf %204, %206 : vector<8x128xf32>
    %c0_65 = arith.constant 0 : index
    %c0_66 = arith.constant 0 : index
    %208 = vector.load %arg8[%c0_65, %c0_66] : memref<8x128xf32, #tpu.memory_space<vmem>>, vector<8x128xf32>
    tpu.vector_store %arg8[%c0_65, %c0_66], %207 {strides = array<i32>} : memref<8x128xf32, #tpu.memory_space<vmem>>, vector<8x128xf32>,
    return
  }
  func.func @transform_0(%arg0: i32) -> (i32, i32) {
    %c0_i32 = arith.constant 0 : i32
    %c0_i32_0 = arith.constant 0 : i32
    return %arg0, %c0_i32 : i32, i32
  }
  func.func @transform_1(%arg0: i32) -> (i32, i32) {
    %c0_i32 = arith.constant 0 : i32
    %c0_i32_0 = arith.constant 0 : i32
    %c0_i32_1 = arith.constant 0 : i32
    return %c0_i32, %c0_i32_0 : i32, i32
  }
  func.func @transform_2(%arg0: i32) -> (i32, i32) {
    %c0_i32 = arith.constant 0 : i32
    %c0_i32_0 = arith.constant 0 : i32
    %c0_i32_1 = arith.constant 0 : i32
    return %c0_i32, %c0_i32_0 : i32, i32
  }
  func.func @transform_3(%arg0: i32) -> (i32, i32) {
    %c0_i32 = arith.constant 0 : i32
    %c0_i32_0 = arith.constant 0 : i32
    %c0_i32_1 = arith.constant 0 : i32
    return %c0_i32, %c0_i32_0 : i32, i32
  }
  func.func @transform_4(%arg0: i32) -> (i32, i32) {
    %c0_i32 = arith.constant 0 : i32
    %c0_i32_0 = arith.constant 0 : i32
    %c0_i32_1 = arith.constant 0 : i32
    return %c0_i32, %c0_i32_0 : i32, i32
  }
  func.func @transform_5(%arg0: i32) -> (i32, i32) {
    %c0_i32 = arith.constant 0 : i32
    %c0_i32_0 = arith.constant 0 : i32
    %c0_i32_1 = arith.constant 0 : i32
    return %c0_i32, %c0_i32_0 : i32, i32
  }
  func.func @transform_6(%arg0: i32) -> (i32, i32) {
    %c0_i32 = arith.constant 0 : i32
    %c0_i32_0 = arith.constant 0 : i32
    %c0_i32_1 = arith.constant 0 : i32
    return %c0_i32, %c0_i32_0 : i32, i32
  }
  func.func @transform_7(%arg0: i32) -> (i32, i32) {
    %c0_i32 = arith.constant 0 : i32
    %c0_i32_0 = arith.constant 0 : i32
    return %arg0, %c0_i32 : i32, i32
  }
}

</mosaic_0001>

<llo_original>
// kernel: tpu_custom_call.1
$region0: #{tpu_custom_call.1}
  #allocation0 [shape = 'u32[]', space=smem, size = 0x4, offset = 0x4, fixed_abs, tag = 'smem constant byte address 0x4 - core index']
  #allocation1 [shape = 'u32[144,128]{1,0:T(1,128)}', space=vmem, size = 0x12000, scoped, tag = 'internal scratch']
  #allocation2 [shape = 'bf16[8,1536]{1,0:T(8,128)(2,1)}', space=vmem, size = 0x6000, scoped, tag = 'scratch operand']
  %s0 = inlined_call_operand.hbm [shape: f32[8,784], index: 0, kind: input, shape index: {}]
  %s1 = inlined_call_operand.hbm [shape: bf16[168,512], index: 1, kind: input, shape index: {}]
  %s2 = inlined_call_operand.vmem [shape: f32[1,128], index: 2, kind: input, shape index: {}]
  %s3 = inlined_call_operand.hbm [shape: bf16[1536,128], index: 3, kind: input, shape index: {}]
  %s4 = inlined_call_operand.vmem [shape: f32[1,128], index: 4, kind: input, shape index: {}]
  %s5 = inlined_call_operand.hbm [shape: bf16[128,128], index: 5, kind: input, shape index: {}]
  %s6 = inlined_call_operand.vmem [shape: f32[1,128], index: 6, kind: input, shape index: {}]
  %s7 = inlined_call_operand.hbm [shape: f32[8,128], index: 7, kind: output, shape index: {}]
  %s8 = sld [smem:[#allocation0]]
  $region54: #{tpu_custom_call.1} parent=0
    _
  %s10 = ssub.s32 1, %s8
  %s11 = scalar_select 0, %s10, %s8
  $region1: #{tpu_custom_call.1} parent=0
    #allocation3 [shape = 'u8[28672]{0}', space=vmem, size = 0x7000, scoped, tag = 'input window, operand 0, single buffered']
    #allocation4 [shape = 's32[1]{0}', space=sflag, size = 0x4, scoped, tag = 'scoped memory for tpu_custom_call.1']
    #allocation5 [shape = 's32[1]{0}', space=sflag, size = 0x4, scoped, tag = 'scoped memory for tpu_custom_call.1']
    #allocation6 [shape = 'u8[172032]{0}', space=vmem, size = 0x2a000, scoped, tag = 'input window, operand 1, single buffered']
    #allocation7 [shape = 's32[1]{0}', space=sflag, size = 0x4, scoped, tag = 'scoped memory for tpu_custom_call.1']
    #allocation8 [shape = 'u8[393216]{0}', space=vmem, size = 0x60000, scoped, tag = 'input window, operand 3, single buffered']
    #allocation9 [shape = 'u8[32768]{0}', space=vmem, size = 0x8000, scoped, tag = 'input window, operand 5, single buffered']
    #allocation10 [shape = 's32[1]{0}', space=sflag, size = 0x4, scoped, tag = 'scoped memory for tpu_custom_call.1']
    #allocation11 [shape = 'u8[4096]{0}', space=vmem, size = 0x1000, scoped, tag = 'output window, operand 0, single buffered']
    %12 = vsyncpa [#allocation4], 0
    %13 = vsyncpa [#allocation7], 0
    %14 = vsyncpa [#allocation10], 0
    %15 = vsyncpa [#allocation5], 0
    // Predicated region
    $region2: #{tpu_custom_call.1} parent=1 // pred_check
      _
    $region3: #{tpu_custom_call.1} parent=1 // pred_check_branch
      %17 = sbr.rel (0) target = $region5
    $region4: #{tpu_custom_call.1} parent=1 // pred_region
      %s19 = ssub.s32 896, 896
      %20 = vsyncadd [#allocation4], %s19
      %s22 = sshll.u32 [#allocation3], 4
      %s23 = int_to_ptr.vmem [resolvable:$true] %s22
      %25 = dma.hbm_to_vmem [thread:$0]  %s0, 896, %s23, [#allocation4]
    $region5: #{tpu_custom_call.1} parent=1 // pred_fallthru
      _
    // Predicated region
    $region6: #{tpu_custom_call.1} parent=1 // pred_check
      _
    $region7: #{tpu_custom_call.1} parent=1 // pred_check_branch
      %27 = sbr.rel (0) target = $region9
    $region8: #{tpu_custom_call.1} parent=1 // pred_region
      %s29 = ssub.s32 5376, 5376
      %30 = vsyncadd [#allocation7], %s29
      %s31 = sshll.u32 [#allocation6], 4
      %s32 = int_to_ptr.vmem [resolvable:$true] %s31
      %37 = dma.hbm_to_vmem [thread:$0]  %s1, 5376, %s32, [#allocation7], 256, 256, 16
    $region9: #{tpu_custom_call.1} parent=1 // pred_fallthru
      _
    // Predicated region
    $region10: #{tpu_custom_call.1} parent=1 // pred_check
      _
    $region11: #{tpu_custom_call.1} parent=1 // pred_check_branch
      %39 = sbr.rel (0) target = $region13
    $region12: #{tpu_custom_call.1} parent=1 // pred_region
      _
    $region13: #{tpu_custom_call.1} parent=1 // pred_fallthru
      _
    // Predicated region
    $region14: #{tpu_custom_call.1} parent=1 // pred_check
      _
    $region15: #{tpu_custom_call.1} parent=1 // pred_check_branch
      %41 = sbr.rel (0) target = $region17
    $region16: #{tpu_custom_call.1} parent=1 // pred_region
      %s43 = ssub.s32 12288, 12288
      %44 = vsyncadd [#allocation7], %s43
      %s45 = sshll.u32 [#allocation8], 4
      %s46 = int_to_ptr.vmem [resolvable:$true] %s45
      %51 = dma.hbm_to_vmem [thread:$0]  %s3, 12288, %s46, [#allocation7], 64, 64, 4
    $region17: #{tpu_custom_call.1} parent=1 // pred_fallthru
      _
    // Predicated region
    $region18: #{tpu_custom_call.1} parent=1 // pred_check
      _
    $region19: #{tpu_custom_call.1} parent=1 // pred_check_branch
      %53 = sbr.rel (0) target = $region21
    $region20: #{tpu_custom_call.1} parent=1 // pred_region
      _
    $region21: #{tpu_custom_call.1} parent=1 // pred_fallthru
      _
    // Predicated region
    $region22: #{tpu_custom_call.1} parent=1 // pred_check
      _
    $region23: #{tpu_custom_call.1} parent=1 // pred_check_branch
      %55 = sbr.rel (0) target = $region25
    $region24: #{tpu_custom_call.1} parent=1 // pred_region
      %s57 = ssub.s32 1024, 1024
      %58 = vsyncadd [#allocation10], %s57
      %s59 = sshll.u32 [#allocation9], 4
      %s60 = int_to_ptr.vmem [resolvable:$true] %s59
      %65 = dma.hbm_to_vmem [thread:$0]  %s5, 1024, %s60, [#allocation10], 64, 64, 4
    $region25: #{tpu_custom_call.1} parent=1 // pred_fallthru
      _
    // Predicated region
    $region26: #{tpu_custom_call.1} parent=1 // pred_check
      _
    $region27: #{tpu_custom_call.1} parent=1 // pred_check_branch
      %67 = sbr.rel (0) target = $region29
    $region28: #{tpu_custom_call.1} parent=1 // pred_region
      _
    $region29: #{tpu_custom_call.1} parent=1 // pred_fallthru
      _
    // Predicated region
    $region30: #{tpu_custom_call.1} parent=1 // pred_check
      _
    $region31: #{tpu_custom_call.1} parent=1 // pred_check_branch
      %69 = sbr.rel (0) target = $region33
    $region32: #{tpu_custom_call.1} parent=1 // pred_region
      %70 = dma.done [#allocation4], 896
    $region33: #{tpu_custom_call.1} parent=1 // pred_fallthru
      _
    // Predicated region
    $region34: #{tpu_custom_call.1} parent=1 // pred_check
      _
    $region35: #{tpu_custom_call.1} parent=1 // pred_check_branch
      %72 = sbr.rel (0) target = $region37
    $region36: #{tpu_custom_call.1} parent=1 // pred_region
      %73 = dma.done [#allocation7], 5376
    $region37: #{tpu_custom_call.1} parent=1 // pred_fallthru
      _
    // Predicated region
    $region38: #{tpu_custom_call.1} parent=1 // pred_check
      _
    $region39: #{tpu_custom_call.1} parent=1 // pred_check_branch
      %75 = sbr.rel (0) target = $region41
    $region40: #{tpu_custom_call.1} parent=1 // pred_region
      %76 = dma.done [#allocation7], 12288
    $region41: #{tpu_custom_call.1} parent=1 // pred_fallthru
      _
    // Predicated region
    $region42: #{tpu_custom_call.1} parent=1 // pred_check
      _
    $region43: #{tpu_custom_call.1} parent=1 // pred_check_branch
      %78 = sbr.rel (0) target = $region45
    $region44: #{tpu_custom_call.1} parent=1 // pred_region
      %79 = dma.done [#allocation10], 1024
    $region45: #{tpu_custom_call.1} parent=1 // pred_fallthru
      _
    %v81 = vld [vmem:[#allocation6] sm:$0xff]
    %v82 = vld [vmem:[#allocation6 + $0x8] sm:$0xff]
    %v83 = vld [vmem:[#allocation6 + $0x10] sm:$0xff]
    %v84 = vld [vmem:[#allocation6 + $0x18] sm:$0xff]
    %v85 = vld [vmem:[#allocation6 + $0x20] sm:$0xff]
    %v86 = vld [vmem:[#allocation6 + $0x28] sm:$0xff]
    %v87 = vld [vmem:[#allocation6 + $0x30] sm:$0xff]
    %v88 = vld [vmem:[#allocation6 + $0x38] sm:$0xff]
    %v89 = vld [vmem:[#allocation6 + $0x40] sm:$0xff]
    %v90 = vld [vmem:[#allocation6 + $0x48] sm:$0xff]
    %v91 = vld [vmem:[#allocation6 + $0x50] sm:$0xff]
    %v92 = vld [vmem:[#allocation6 + $0x58] sm:$0xff]
    %v93 = vld [vmem:[#allocation6 + $0x60] sm:$0xff]
    %v94 = vld [vmem:[#allocation6 + $0x68] sm:$0xff]
    %v95 = vld [vmem:[#allocation6 + $0x70] sm:$0xff]
    %v96 = vld [vmem:[#allocation6 + $0x78] sm:$0xff]
    %v97 = vld [vmem:[#allocation6 + $0x80] sm:$0xff]
    %v98 = vld [vmem:[#allocation6 + $0x88] sm:$0xff]
    %v99 = vld [vmem:[#allocation6 + $0x90] sm:$0xff]
    %v100 = vld [vmem:[#allocation6 + $0x98] sm:$0xff]
    %v101 = vld [vmem:[#allocation6 + $0xa0] sm:$0xff]
    %v102 = vld [vmem:[#allocation6 + $0xa8] sm:$0xff]
    %v103 = vld [vmem:[#allocation6 + $0xb0] sm:$0xff]
    %v104 = vld [vmem:[#allocation6 + $0xb8] sm:$0xff]
    %v105 = vld [vmem:[#allocation6 + $0xc0] sm:$0xff]
    %v106 = vld [vmem:[#allocation6 + $0xc8] sm:$0xff]
    %v107 = vld [vmem:[#allocation6 + $0xd0] sm:$0xff]
    %v108 = vld [vmem:[#allocation6 + $0xd8] sm:$0xff]
    %v109 = vld [vmem:[#allocation6 + $0xe0] sm:$0xff]
    %v110 = vld [vmem:[#allocation6 + $0xe8] sm:$0xff]
    %v111 = vld [vmem:[#allocation6 + $0xf0] sm:$0xff]
    %v112 = vld [vmem:[#allocation6 + $0xf8] sm:$0xff]
    %v113 = vld [vmem:[#allocation6 + $0x100] sm:$0xff]
    %v114 = vld [vmem:[#allocation6 + $0x108] sm:$0xff]
    %v115 = vld [vmem:[#allocation6 + $0x110] sm:$0xff]
    %v116 = vld [vmem:[#allocation6 + $0x118] sm:$0xff]
    %v117 = vld [vmem:[#allocation6 + $0x120] sm:$0xff]
    %v118 = vld [vmem:[#allocation6 + $0x128] sm:$0xff]
    %v119 = vld [vmem:[#allocation6 + $0x130] sm:$0xff]
    %v120 = vld [vmem:[#allocation6 + $0x138] sm:$0xff]
    %v121 = vld [vmem:[#allocation6 + $0x140] sm:$0xff]
    %v122 = vld [vmem:[#allocation6 + $0x148] sm:$0xff]
    %v123 = vld [vmem:[%s2] sm:$0x1]
    %v124 = vld [vmem:[#allocation3] sm:$0xff]
    %v125 = vld [vmem:[#allocation3 + $0x8] sm:$0xff]
    %v126 = vpack.c.bf16 %v124, %v124
    %v127 = vpack.c.bf16 %v125, %v125
    %v170 = vunpack.c.l.b16 %v81
    %v171 = vunpack.c.h.b16 %v81
    %v172 = vunpack.c.l.b16 %v82
    %v173 = vunpack.c.h.b16 %v82
    %v174 = vunpack.c.l.b16 %v83
    %v175 = vunpack.c.h.b16 %v83
    %v176 = vunpack.c.l.b16 %v84
    %v177 = vunpack.c.h.b16 %v84
    %v178 = vunpack.c.l.b16 %v85
    %v179 = vunpack.c.h.b16 %v85
    %v180 = vunpack.c.l.b16 %v86
    %v181 = vunpack.c.h.b16 %v86
    %v182 = vunpack.c.l.b16 %v87
    %v183 = vunpack.c.h.b16 %v87
    %v184 = vunpack.c.l.b16 %v88
    %v185 = vunpack.c.h.b16 %v88
    %v186 = vunpack.c.l.b16 %v89
    %v187 = vunpack.c.h.b16 %v89
    %v188 = vunpack.c.l.b16 %v90
    %v189 = vunpack.c.h.b16 %v90
    %v190 = vunpack.c.l.b16 %v91
    %v191 = vunpack.c.h.b16 %v91
    %v192 = vunpack.c.l.b16 %v92
    %v193 = vunpack.c.h.b16 %v92
    %v194 = vunpack.c.l.b16 %v93
    %v195 = vunpack.c.h.b16 %v93
    %v196 = vunpack.c.l.b16 %v94
    %v197 = vunpack.c.h.b16 %v94
    %v198 = vunpack.c.l.b16 %v95
    %v199 = vunpack.c.h.b16 %v95
    %v200 = vunpack.c.l.b16 %v96
    %v201 = vunpack.c.h.b16 %v96
    %v202 = vunpack.c.l.b16 %v97
    %v203 = vunpack.c.h.b16 %v97
    %v204 = vunpack.c.l.b16 %v98
    %v205 = vunpack.c.h.b16 %v98
    %v206 = vunpack.c.l.b16 %v99
    %v207 = vunpack.c.h.b16 %v99
    %v208 = vunpack.c.l.b16 %v100
    %v209 = vunpack.c.h.b16 %v100
    %v210 = vunpack.c.l.b16 %v101
    %v211 = vunpack.c.h.b16 %v101
    %v212 = vunpack.c.l.b16 %v102
    %v213 = vunpack.c.h.b16 %v102
    %v214 = vunpack.c.l.b16 %v103
    %v215 = vunpack.c.h.b16 %v103
    %v216 = vunpack.c.l.b16 %v104
    %v217 = vunpack.c.h.b16 %v104
    %v218 = vunpack.c.l.b16 %v105
    %v219 = vunpack.c.h.b16 %v105
    %v220 = vunpack.c.l.b16 %v106
    %v221 = vunpack.c.h.b16 %v106
    %v222 = vunpack.c.l.b16 %v107
    %v223 = vunpack.c.h.b16 %v107
    %v224 = vunpack.c.l.b16 %v108
    %v225 = vunpack.c.h.b16 %v108
    %v226 = vunpack.c.l.b16 %v109
    %v227 = vunpack.c.h.b16 %v109
    %v228 = vunpack.c.l.b16 %v110
    %v229 = vunpack.c.h.b16 %v110
    %v230 = vunpack.c.l.b16 %v111
    %v231 = vunpack.c.h.b16 %v111
    %v232 = vunpack.c.l.b16 %v112
    %v233 = vunpack.c.h.b16 %v112
    %v234 = vunpack.c.l.b16 %v113
    %v235 = vunpack.c.h.b16 %v113
    %v236 = vunpack.c.l.b16 %v114
    %v237 = vunpack.c.h.b16 %v114
    %v238 = vunpack.c.l.b16 %v115
    %v239 = vunpack.c.h.b16 %v115
    %v240 = vunpack.c.l.b16 %v116
    %v241 = vunpack.c.h.b16 %v116
    %v242 = vunpack.c.l.b16 %v117
    %v243 = vunpack.c.h.b16 %v117
    %v244 = vunpack.c.l.b16 %v118
    %v245 = vunpack.c.h.b16 %v118
    %v246 = vunpack.c.l.b16 %v119
    %v247 = vunpack.c.h.b16 %v119
    %v248 = vunpack.c.l.b16 %v120
    %v249 = vunpack.c.h.b16 %v120
    %v250 = vunpack.c.l.b16 %v121
    %v251 = vunpack.c.h.b16 %v121
    %v252 = vunpack.c.l.b16 %v122
    %v253 = vunpack.c.h.b16 %v122
    %v254 = vpack.c.b16 %v174, %v170
    %v255 = vpack.c.b16 %v175, %v171
    %v256 = vpack.c.b16 %v176, %v172
    %v257 = vpack.c.b16 %v177, %v173
    %v258 = vpack.c.b16 %v182, %v178
    %v259 = vpack.c.b16 %v183, %v179
    %v260 = vpack.c.b16 %v184, %v180
    %v261 = vpack.c.b16 %v185, %v181
    %v262 = vpack.c.b16 %v190, %v186
    %v263 = vpack.c.b16 %v191, %v187
    %v264 = vpack.c.b16 %v192, %v188
    %v265 = vpack.c.b16 %v193, %v189
    %v266 = vpack.c.b16 %v198, %v194
    %v267 = vpack.c.b16 %v199, %v195
    %v268 = vpack.c.b16 %v200, %v196
    %v269 = vpack.c.b16 %v201, %v197
    %v270 = vpack.c.b16 %v206, %v202
    %v271 = vpack.c.b16 %v207, %v203
    %v272 = vpack.c.b16 %v208, %v204
    %v273 = vpack.c.b16 %v209, %v205
    %v274 = vpack.c.b16 %v214, %v210
    %v275 = vpack.c.b16 %v215, %v211
    %v276 = vpack.c.b16 %v216, %v212
    %v277 = vpack.c.b16 %v217, %v213
    %v278 = vpack.c.b16 %v222, %v218
    %v279 = vpack.c.b16 %v223, %v219
    %v280 = vpack.c.b16 %v224, %v220
    %v281 = vpack.c.b16 %v225, %v221
    %v282 = vpack.c.b16 %v230, %v226
    %v283 = vpack.c.b16 %v231, %v227
    %v284 = vpack.c.b16 %v232, %v228
    %v285 = vpack.c.b16 %v233, %v229
    %v286 = vpack.c.b16 %v238, %v234
    %v287 = vpack.c.b16 %v239, %v235
    %v288 = vpack.c.b16 %v240, %v236
    %v289 = vpack.c.b16 %v241, %v237
    %v290 = vpack.c.b16 %v246, %v242
    %v291 = vpack.c.b16 %v247, %v243
    %v292 = vpack.c.b16 %v248, %v244
    %v293 = vpack.c.b16 %v249, %v245
    %v294 = vpack.c.b16 %v250, %v250
    %v295 = vpack.c.b16 %v251, %v251
    %v296 = vpack.c.b16 %v252, %v252
    %v297 = vpack.c.b16 %v253, %v253
    %vm338 = vcmask 326656
    %v340 = vsel %vm338, %v127, 0
    %vm342 = vcmask 1043456
    %v344 = vsel %vm342, %v294, 0
    %v347 = vsel %vm342, %v295, 0
    %v350 = vsel %vm342, %v296, 0
    %v353 = vsel %vm342, %v297, 0
    %355 = vmatprep.subr.bf16.mxu0 %v255
    %356 = vmatpush1.bf16.msra.mxu0 %v254
    %357 = vmatprep.subr.bf16.mxu0 %v259
    %358 = vmatpush1.bf16.msra.mxu0 %v258
    %359 = vmatprep.subr.bf16.mxu0 %v263
    %360 = vmatpush1.bf16.msra.mxu0 %v262
    %361 = vmatprep.subr.bf16.mxu0 %v267
    %362 = vmatpush1.bf16.msra.mxu0 %v266
    %363 = vmatprep.subr.bf16.mxu0 %v271
    %364 = vmatpush1.bf16.msra.mxu0 %v270
    %365 = vmatprep.subr.bf16.mxu0 %v275
    %366 = vmatpush1.bf16.msra.mxu0 %v274
    %367 = vmatprep.subr.bf16.mxu0 %v279
    %368 = vmatpush1.bf16.msra.mxu0 %v278
    %369 = vmatprep.subr.bf16.mxu0 %v283
    %370 = vmatpush1.bf16.msra.mxu0 %v282
    %371 = vmatprep.subr.bf16.mxu0 %v287
    %372 = vmatpush1.bf16.msra.mxu0 %v286
    %373 = vmatprep.subr.bf16.mxu0 %v291
    %374 = vmatpush1.bf16.msra.mxu0 %v290
    %375 = vmatprep.subr.bf16.mxu0 %v347
    %376 = vmatpush1.bf16.msra.mxu0 %v344
    %377 = vmatprep.subr.bf16.mxu0 0
    %378 = vmatpush1.bf16.msra.mxu0 0
    %379 = vmatprep.subr.bf16.mxu0 0
    %380 = vmatpush1.bf16.msra.mxu0 0
    %381 = vmatprep.subr.bf16.mxu0 0
    %382 = vmatpush1.bf16.msra.mxu0 0
    %383 = vmatprep.subr.bf16.mxu0 0
    %384 = vmatpush1.bf16.msra.mxu0 0
    %385 = vmatprep.subr.bf16.mxu0 0
    %386 = vmatpush1.bf16.msra.mxu0 0
    %387 = vmatprep.mubr.bf16.mxu0 %v340
    %388 = vmatmul.mubr.bf16.gmra.mrb[0].mxu0 %v126
    %v389 = vpop.f32.mrb[0].mxu0
    %v390 = vadd.f32 0.0, %v389
    %v391 = vpop.f32.mrb[0].mxu0
    %v392 = vadd.f32 0.0, %v391
    %v393 = vpop.f32.mrb[0].mxu0
    %v394 = vpop.f32.mrb[0].mxu0
    %395 = vdwg.mxu0
    %396 = vmatprep.subr.bf16.mxu0 %v257
    %397 = vmatpush1.bf16.msra.mxu0 %v256
    %398 = vmatprep.subr.bf16.mxu0 %v261
    %399 = vmatpush1.bf16.msra.mxu0 %v260
    %400 = vmatprep.subr.bf16.mxu0 %v265
    %401 = vmatpush1.bf16.msra.mxu0 %v264
    %402 = vmatprep.subr.bf16.mxu0 %v269
    %403 = vmatpush1.bf16.msra.mxu0 %v268
    %404 = vmatprep.subr.bf16.mxu0 %v273
    %405 = vmatpush1.bf16.msra.mxu0 %v272
    %406 = vmatprep.subr.bf16.mxu0 %v277
    %407 = vmatpush1.bf16.msra.mxu0 %v276
    %408 = vmatprep.subr.bf16.mxu0 %v281
    %409 = vmatpush1.bf16.msra.mxu0 %v280
    %410 = vmatprep.subr.bf16.mxu0 %v285
    %411 = vmatpush1.bf16.msra.mxu0 %v284
    %412 = vmatprep.subr.bf16.mxu0 %v289
    %413 = vmatpush1.bf16.msra.mxu0 %v288
    %414 = vmatprep.subr.bf16.mxu0 %v293
    %415 = vmatpush1.bf16.msra.mxu0 %v292
    %416 = vmatprep.subr.bf16.mxu0 %v353
    %417 = vmatpush1.bf16.msra.mxu0 %v350
    %418 = vmatprep.subr.bf16.mxu0 0
    %419 = vmatpush1.bf16.msra.mxu0 0
    %420 = vmatprep.subr.bf16.mxu0 0
    %421 = vmatpush1.bf16.msra.mxu0 0
    %422 = vmatprep.subr.bf16.mxu0 0
    %423 = vmatpush1.bf16.msra.mxu0 0
    %424 = vmatprep.subr.bf16.mxu0 0
    %425 = vmatpush1.bf16.msra.mxu0 0
    %426 = vmatprep.subr.bf16.mxu0 0
    %427 = vmatpush1.bf16.msra.mxu0 0
    %428 = vmatprep.mubr.bf16.mxu0 %v340
    %429 = vmatmul.mubr.bf16.gmra.mrb[0].mxu0 %v126
    %v430 = vpop.f32.mrb[0].mxu0
    %v431 = vadd.f32 0.0, %v430
    %v432 = vpop.f32.mrb[0].mxu0
    %v433 = vadd.f32 0.0, %v432
    %v434 = vpop.f32.mrb[0].mxu0
    %v435 = vpop.f32.mrb[0].mxu0
    %436 = vdwg.mxu0
    %v437 = vmax.f32 %v390, %v392
    %v438 = vmax.f32 %v431, %v433
    %v439 = vmax.f32 %v437, %v438
    %v441 = vlaneseq
    %v442 = vshrl.u32 %v441, 7
    %v443 = vsub.s32 0, %v442
    %v444 = vrot.slane %v123, %v443
    %v446 = vadd.f32 %v439, %v444
    %v447 = vmax.f32 %v446, 0.0
    %v448 = vpack.c.bf16 %v447, %v447
    %449 = vst [vmem:[#allocation2] sm:$0xf] %v448
    %v450 = vld [vmem:[#allocation3] sm:$0xff]
    %v451 = vld [vmem:[#allocation3 + $0x8] sm:$0xff]
    %v452 = vpack.c.bf16 %v450, %v450
    %v453 = vpack.c.bf16 %v451, %v451
    %456 = vrot.lane.b32.xlu0 %v452, 72
    %v457 = vpop.permute.xlu0 %456
    %458 = vrot.lane.b32.xlu0 %v453, 72
    %v459 = vpop.permute.xlu0 %458
    %vm460 = vcmask 588800
    %v461 = vsel %vm460, %v457, %v459
    %v464 = vsel %vm338, %v459, 0
    %466 = vmatprep.subr.bf16.mxu0 %v255
    %467 = vmatpush1.bf16.msra.mxu0 %v254
    %468 = vmatprep.subr.bf16.mxu0 %v259
    %469 = vmatpush1.bf16.msra.mxu0 %v258
    %470 = vmatprep.subr.bf16.mxu0 %v263
    %471 = vmatpush1.bf16.msra.mxu0 %v262
    %472 = vmatprep.subr.bf16.mxu0 %v267
    %473 = vmatpush1.bf16.msra.mxu0 %v266
    %474 = vmatprep.subr.bf16.mxu0 %v271
    %475 = vmatpush1.bf16.msra.mxu0 %v270
    %476 = vmatprep.subr.bf16.mxu0 %v275
    %477 = vmatpush1.bf16.msra.mxu0 %v274
    %478 = vmatprep.subr.bf16.mxu0 %v279
    %479 = vmatpush1.bf16.msra.mxu0 %v278
    %480 = vmatprep.subr.bf16.mxu0 %v283
    %481 = vmatpush1.bf16.msra.mxu0 %v282
    %482 = vmatprep.subr.bf16.mxu0 %v287
    %483 = vmatpush1.bf16.msra.mxu0 %v286
    %484 = vmatprep.subr.bf16.mxu0 %v291
    %485 = vmatpush1.bf16.msra.mxu0 %v290
    %486 = vmatprep.subr.bf16.mxu0 %v347
    %487 = vmatpush1.bf16.msra.mxu0 %v344
    %488 = vmatprep.subr.bf16.mxu0 0
    %489 = vmatpush1.bf16.msra.mxu0 0
    %490 = vmatprep.subr.bf16.mxu0 0
    %491 = vmatpush1.bf16.msra.mxu0 0
    %492 = vmatprep.subr.bf16.mxu0 0
    %493 = vmatpush1.bf16.msra.mxu0 0
    %494 = vmatprep.subr.bf16.mxu0 0
    %495 = vmatpush1.bf16.msra.mxu0 0
    %496 = vmatprep.subr.bf16.mxu0 0
    %497 = vmatpush1.bf16.msra.mxu0 0
    %498 = vmatprep.mubr.bf16.mxu0 %v464
    %499 = vmatmul.mubr.bf16.gmra.mrb[0].mxu0 %v461
    %v500 = vpop.f32.mrb[0].mxu0
    %v501 = vadd.f32 0.0, %v500
    %v502 = vpop.f32.mrb[0].mxu0
    %v503 = vadd.f32 0.0, %v502
    %v504 = vpop.f32.mrb[0].mxu0
    %v505 = vpop.f32.mrb[0].mxu0
    %506 = vdwg.mxu0
    %507 = vmatprep.subr.bf16.mxu0 %v257
    %508 = vmatpush1.bf16.msra.mxu0 %v256
    %509 = vmatprep.subr.bf16.mxu0 %v261
    %510 = vmatpush1.bf16.msra.mxu0 %v260
    %511 = vmatprep.subr.bf16.mxu0 %v265
    %512 = vmatpush1.bf16.msra.mxu0 %v264
    %513 = vmatprep.subr.bf16.mxu0 %v269
    %514 = vmatpush1.bf16.msra.mxu0 %v268
    %515 = vmatprep.subr.bf16.mxu0 %v273
    %516 = vmatpush1.bf16.msra.mxu0 %v272
    %517 = vmatprep.subr.bf16.mxu0 %v277
    %518 = vmatpush1.bf16.msra.mxu0 %v276
    %519 = vmatprep.subr.bf16.mxu0 %v281
    %520 = vmatpush1.bf16.msra.mxu0 %v280
    %521 = vmatprep.subr.bf16.mxu0 %v285
    %522 = vmatpush1.bf16.msra.mxu0 %v284
    %523 = vmatprep.subr.bf16.mxu0 %v289
    %524 = vmatpush1.bf16.msra.mxu0 %v288
    %525 = vmatprep.subr.bf16.mxu0 %v293
    %526 = vmatpush1.bf16.msra.mxu0 %v292
    %527 = vmatprep.subr.bf16.mxu0 %v353
    %528 = vmatpush1.bf16.msra.mxu0 %v350
    %529 = vmatprep.subr.bf16.mxu0 0
    %530 = vmatpush1.bf16.msra.mxu0 0
    %531 = vmatprep.subr.bf16.mxu0 0
    %532 = vmatpush1.bf16.msra.mxu0 0
    %533 = vmatprep.subr.bf16.mxu0 0
    %534 = vmatpush1.bf16.msra.mxu0 0
    %535 = vmatprep.subr.bf16.mxu0 0
    %536 = vmatpush1.bf16.msra.mxu0 0
    %537 = vmatprep.subr.bf16.mxu0 0
    %538 = vmatpush1.bf16.msra.mxu0 0
    %539 = vmatprep.mubr.bf16.mxu0 %v464
    %540 = vmatmul.mubr.bf16.gmra.mrb[0].mxu0 %v461
    %v541 = vpop.f32.mrb[0].mxu0
    %v542 = vadd.f32 0.0, %v541
    %v543 = vpop.f32.mrb[0].mxu0
    %v544 = vadd.f32 0.0, %v543
    %v545 = vpop.f32.mrb[0].mxu0
    %v546 = vpop.f32.mrb[0].mxu0
    %547 = vdwg.mxu0
    %v548 = vmax.f32 %v501, %v503
    %v549 = vmax.f32 %v542, %v544
    %v550 = vmax.f32 %v548, %v549
    %v551 = vadd.f32 %v550, %v444
    %v552 = vmax.f32 %v551, 0.0
    %v553 = vpack.c.bf16 %v552, %v552
    %554 = vst [vmem:[#allocation2 + $0x4] sm:$0xf] %v553
    %v555 = vld [vmem:[#allocation3] sm:$0xff]
    %v556 = vld [vmem:[#allocation3 + $0x8] sm:$0xff]
    %v557 = vld [vmem:[#allocation3 + $0x10] sm:$0xff]
    %v558 = vpack.c.bf16 %v555, %v555
    %v559 = vpack.c.bf16 %v556, %v556
    %v560 = vpack.c.bf16 %v557, %v557
    %564 = vrot.lane.b32.xlu0 %v558, 16
    %v565 = vpop.permute.xlu0 %564
    %566 = vrot.lane.b32.xlu0 %v559, 16
    %v567 = vpop.permute.xlu0 %566
    %568 = vrot.lane.b32.xlu0 %v560, 16
    %v569 = vpop.permute.xlu0 %568
    %vm570 = vcmask 130048
    %v571 = vsel %vm570, %v565, %v567
    %v572 = vsel %vm570, %v567, %v569
    %v575 = vsel %vm338, %v572, 0
    %577 = vmatprep.subr.bf16.mxu0 %v255
    %578 = vmatpush1.bf16.msra.mxu0 %v254
    %579 = vmatprep.subr.bf16.mxu0 %v259
    %580 = vmatpush1.bf16.msra.mxu0 %v258
    %581 = vmatprep.subr.bf16.mxu0 %v263
    %582 = vmatpush1.bf16.msra.mxu0 %v262
    %583 = vmatprep.subr.bf16.mxu0 %v267
    %584 = vmatpush1.bf16.msra.mxu0 %v266
    %585 = vmatprep.subr.bf16.mxu0 %v271
    %586 = vmatpush1.bf16.msra.mxu0 %v270
    %587 = vmatprep.subr.bf16.mxu0 %v275
    %588 = vmatpush1.bf16.msra.mxu0 %v274
    %589 = vmatprep.subr.bf16.mxu0 %v279
    %590 = vmatpush1.bf16.msra.mxu0 %v278
    %591 = vmatprep.subr.bf16.mxu0 %v283
    %592 = vmatpush1.bf16.msra.mxu0 %v282
    %593 = vmatprep.subr.bf16.mxu0 %v287
    %594 = vmatpush1.bf16.msra.mxu0 %v286
    %595 = vmatprep.subr.bf16.mxu0 %v291
    %596 = vmatpush1.bf16.msra.mxu0 %v290
    %597 = vmatprep.subr.bf16.mxu0 %v347
    %598 = vmatpush1.bf16.msra.mxu0 %v344
    %599 = vmatprep.subr.bf16.mxu0 0
    %600 = vmatpush1.bf16.msra.mxu0 0
    %601 = vmatprep.subr.bf16.mxu0 0
    %602 = vmatpush1.bf16.msra.mxu0 0
    %603 = vmatprep.subr.bf16.mxu0 0
    %604 = vmatpush1.bf16.msra.mxu0 0
    %605 = vmatprep.subr.bf16.mxu0 0
    %606 = vmatpush1.bf16.msra.mxu0 0
    %607 = vmatprep.subr.bf16.mxu0 0
    %608 = vmatpush1.bf16.msra.mxu0 0
    %609 = vmatprep.mubr.bf16.mxu0 %v575
    %610 = vmatmul.mubr.bf16.gmra.mrb[0].mxu0 %v571
    %v611 = vpop.f32.mrb[0].mxu0
    %v612 = vadd.f32 0.0, %v611
    %v613 = vpop.f32.mrb[0].mxu0
    %v614 = vadd.f32 0.0, %v613
    %v615 = vpop.f32.mrb[0].mxu0
    %v616 = vpop.f32.mrb[0].mxu0
    %617 = vdwg.mxu0
    %618 = vmatprep.subr.bf16.mxu0 %v257
    %619 = vmatpush1.bf16.msra.mxu0 %v256
    %620 = vmatprep.subr.bf16.mxu0 %v261
    %621 = vmatpush1.bf16.msra.mxu0 %v260
    %622 = vmatprep.subr.bf16.mxu0 %v265
    %623 = vmatpush1.bf16.msra.mxu0 %v264
    %624 = vmatprep.subr.bf16.mxu0 %v269
    %625 = vmatpush1.bf16.msra.mxu0 %v268
    %626 = vmatprep.subr.bf16.mxu0 %v273
    %627 = vmatpush1.bf16.msra.mxu0 %v272
    %628 = vmatprep.subr.bf16.mxu0 %v277
    %629 = vmatpush1.bf16.msra.mxu0 %v276
    %630 = vmatprep.subr.bf16.mxu0 %v281
    %631 = vmatpush1.bf16.msra.mxu0 %v280
    %632 = vmatprep.subr.bf16.mxu0 %v285
    %633 = vmatpush1.bf16.msra.mxu0 %v284
    %634 = vmatprep.subr.bf16.mxu0 %v289
    %635 = vmatpush1.bf16.msra.mxu0 %v288
    %636 = vmatprep.subr.bf16.mxu0 %v293
    %637 = vmatpush1.bf16.msra.mxu0 %v292
    %638 = vmatprep.subr.bf16.mxu0 %v353
    %639 = vmatpush1.bf16.msra.mxu0 %v350
    %640 = vmatprep.subr.bf16.mxu0 0
    %641 = vmatpush1.bf16.msra.mxu0 0
    %642 = vmatprep.subr.bf16.mxu0 0
    %643 = vmatpush1.bf16.msra.mxu0 0
    %644 = vmatprep.subr.bf16.mxu0 0
    %645 = vmatpush1.bf16.msra.mxu0 0
    %646 = vmatprep.subr.bf16.mxu0 0
    %647 = vmatpush1.bf16.msra.mxu0 0
    %648 = vmatprep.subr.bf16.mxu0 0
    %649 = vmatpush1.bf16.msra.mxu0 0
    %650 = vmatprep.mubr.bf16.mxu0 %v575
    %651 = vmatmul.mubr.bf16.gmra.mrb[0].mxu0 %v571
    %v652 = vpop.f32.mrb[0].mxu0
    %v653 = vadd.f32 0.0, %v652
    %v654 = vpop.f32.mrb[0].mxu0
    %v655 = vadd.f32 0.0, %v654
    %v656 = vpop.f32.mrb[0].mxu0
    %v657 = vpop.f32.mrb[0].mxu0
    %658 = vdwg.mxu0
    %v659 = vmax.f32 %v612, %v614
    %v660 = vmax.f32 %v653, %v655
    %v661 = vmax.f32 %v659, %v660
    %v662 = vadd.f32 %v661, %v444
    %v663 = vmax.f32 %v662, 0.0
    %v664 = vpack.c.bf16 %v663, %v663
    %665 = vst [vmem:[#allocation2 + $0x8] sm:$0xf] %v664
    %v666 = vld [vmem:[#allocation3 + $0x8] sm:$0xff]
    %v667 = vld [vmem:[#allocation3 + $0x10] sm:$0xff]
    %v668 = vpack.c.bf16 %v666, %v666
    %v669 = vpack.c.bf16 %v667, %v667
    %672 = vrot.lane.b32.xlu0 %v668, 88
    %v673 = vpop.permute.xlu0 %672
    %674 = vrot.lane.b32.xlu0 %v669, 88
    %v675 = vpop.permute.xlu0 %674
    %vm676 = vcmask 719872
    %v677 = vsel %vm676, %v673, %v675
    %v680 = vsel %vm338, %v675, 0
    %682 = vmatprep.subr.bf16.mxu0 %v255
    %683 = vmatpush1.bf16.msra.mxu0 %v254
    %684 = vmatprep.subr.bf16.mxu0 %v259
    %685 = vmatpush1.bf16.msra.mxu0 %v258
    %686 = vmatprep.subr.bf16.mxu0 %v263
    %687 = vmatpush1.bf16.msra.mxu0 %v262
    %688 = vmatprep.subr.bf16.mxu0 %v267
    %689 = vmatpush1.bf16.msra.mxu0 %v266
    %690 = vmatprep.subr.bf16.mxu0 %v271
    %691 = vmatpush1.bf16.msra.mxu0 %v270
    %692 = vmatprep.subr.bf16.mxu0 %v275
    %693 = vmatpush1.bf16.msra.mxu0 %v274
    %694 = vmatprep.subr.bf16.mxu0 %v279
    %695 = vmatpush1.bf16.msra.mxu0 %v278
    %696 = vmatprep.subr.bf16.mxu0 %v283
    %697 = vmatpush1.bf16.msra.mxu0 %v282
    %698 = vmatprep.subr.bf16.mxu0 %v287
    %699 = vmatpush1.bf16.msra.mxu0 %v286
    %700 = vmatprep.subr.bf16.mxu0 %v291
    %701 = vmatpush1.bf16.msra.mxu0 %v290
    %702 = vmatprep.subr.bf16.mxu0 %v347
    %703 = vmatpush1.bf16.msra.mxu0 %v344
    %704 = vmatprep.subr.bf16.mxu0 0
    %705 = vmatpush1.bf16.msra.mxu0 0
    %706 = vmatprep.subr.bf16.mxu0 0
    %707 = vmatpush1.bf16.msra.mxu0 0
    %708 = vmatprep.subr.bf16.mxu0 0
    %709 = vmatpush1.bf16.msra.mxu0 0
    %710 = vmatprep.subr.bf16.mxu0 0
    %711 = vmatpush1.bf16.msra.mxu0 0
    %712 = vmatprep.subr.bf16.mxu0 0
    %713 = vmatpush1.bf16.msra.mxu0 0
    %714 = vmatprep.mubr.bf16.mxu0 %v680
    %715 = vmatmul.mubr.bf16.gmra.mrb[0].mxu0 %v677
    %v716 = vpop.f32.mrb[0].mxu0
    %v717 = vadd.f32 0.0, %v716
    %v718 = vpop.f32.mrb[0].mxu0
    %v719 = vadd.f32 0.0, %v718
    %v720 = vpop.f32.mrb[0].mxu0
    %v721 = vpop.f32.mrb[0].mxu0
    %722 = vdwg.mxu0
    %723 = vmatprep.subr.bf16.mxu0 %v257
    %724 = vmatpush1.bf16.msra.mxu0 %v256
    %725 = vmatprep.subr.bf16.mxu0 %v261
    %726 = vmatpush1.bf16.msra.mxu0 %v260
    %727 = vmatprep.subr.bf16.mxu0 %v265
    %728 = vmatpush1.bf16.msra.mxu0 %v264
    %729 = vmatprep.subr.bf16.mxu0 %v269
    %730 = vmatpush1.bf16.msra.mxu0 %v268
    %731 = vmatprep.subr.bf16.mxu0 %v273
    %732 = vmatpush1.bf16.msra.mxu0 %v272
    %733 = vmatprep.subr.bf16.mxu0 %v277
    %734 = vmatpush1.bf16.msra.mxu0 %v276
    %735 = vmatprep.subr.bf16.mxu0 %v281
    %736 = vmatpush1.bf16.msra.mxu0 %v280
    %737 = vmatprep.subr.bf16.mxu0 %v285
    %738 = vmatpush1.bf16.msra.mxu0 %v284
    %739 = vmatprep.subr.bf16.mxu0 %v289
    %740 = vmatpush1.bf16.msra.mxu0 %v288
    %741 = vmatprep.subr.bf16.mxu0 %v293
    %742 = vmatpush1.bf16.msra.mxu0 %v292
    %743 = vmatprep.subr.bf16.mxu0 %v353
    %744 = vmatpush1.bf16.msra.mxu0 %v350
    %745 = vmatprep.subr.bf16.mxu0 0
    %746 = vmatpush1.bf16.msra.mxu0 0
    %747 = vmatprep.subr.bf16.mxu0 0
    %748 = vmatpush1.bf16.msra.mxu0 0
    %749 = vmatprep.subr.bf16.mxu0 0
    %750 = vmatpush1.bf16.msra.mxu0 0
    %751 = vmatprep.subr.bf16.mxu0 0
    %752 = vmatpush1.bf16.msra.mxu0 0
    %753 = vmatprep.subr.bf16.mxu0 0
    %754 = vmatpush1.bf16.msra.mxu0 0
    %755 = vmatprep.mubr.bf16.mxu0 %v680
    %756 = vmatmul.mubr.bf16.gmra.mrb[0].mxu0 %v677
    %v757 = vpop.f32.mrb[0].mxu0
    %v758 = vadd.f32 0.0, %v757
    %v759 = vpop.f32.mrb[0].mxu0
    %v760 = vadd.f32 0.0, %v759
    %v761 = vpop.f32.mrb[0].mxu0
    %v762 = vpop.f32.mrb[0].mxu0
    %763 = vdwg.mxu0
    %v764 = vmax.f32 %v717, %v719
    %v765 = vmax.f32 %v758, %v760
    %v766 = vmax.f32 %v764, %v765
    %v767 = vadd.f32 %v766, %v444
    %v768 = vmax.f32 %v767, 0.0
    %v769 = vpack.c.bf16 %v768, %v768
    %770 = vst [vmem:[#allocation2 + $0xc] sm:$0xf] %v769
    %v771 = vld [vmem:[#allocation3 + $0x8] sm:$0xff]
    %v772 = vld [vmem:[#allocation3 + $0x10] sm:$0xff]
    %v773 = vld [vmem:[#allocation3 + $0x18] sm:$0xff]
    %v774 = vpack.c.bf16 %v771, %v771
    %v775 = vpack.c.bf16 %v772, %v772
    %v776 = vpack.c.bf16 %v773, %v773
    %780 = vrot.lane.b32.xlu0 %v774, 32
    %v781 = vpop.permute.xlu0 %780
    %782 = vrot.lane.b32.xlu0 %v775, 32
    %v783 = vpop.permute.xlu0 %782
    %784 = vrot.lane.b32.xlu0 %v776, 32
    %v785 = vpop.permute.xlu0 %784
    %vm786 = vcmask 261120
    %v787 = vsel %vm786, %v781, %v783
    %v788 = vsel %vm786, %v783, %v785
    %v791 = vsel %vm338, %v788, 0
    %793 = vmatprep.subr.bf16.mxu0 %v255
    %794 = vmatpush1.bf16.msra.mxu0 %v254
    %795 = vmatprep.subr.bf16.mxu0 %v259
    %796 = vmatpush1.bf16.msra.mxu0 %v258
    %797 = vmatprep.subr.bf16.mxu0 %v263
    %798 = vmatpush1.bf16.msra.mxu0 %v262
    %799 = vmatprep.subr.bf16.mxu0 %v267
    %800 = vmatpush1.bf16.msra.mxu0 %v266
    %801 = vmatprep.subr.bf16.mxu0 %v271
    %802 = vmatpush1.bf16.msra.mxu0 %v270
    %803 = vmatprep.subr.bf16.mxu0 %v275
    %804 = vmatpush1.bf16.msra.mxu0 %v274
    %805 = vmatprep.subr.bf16.mxu0 %v279
    %806 = vmatpush1.bf16.msra.mxu0 %v278
    %807 = vmatprep.subr.bf16.mxu0 %v283
    %808 = vmatpush1.bf16.msra.mxu0 %v282
    %809 = vmatprep.subr.bf16.mxu0 %v287
    %810 = vmatpush1.bf16.msra.mxu0 %v286
    %811 = vmatprep.subr.bf16.mxu0 %v291
    %812 = vmatpush1.bf16.msra.mxu0 %v290
    %813 = vmatprep.subr.bf16.mxu0 %v347
    %814 = vmatpush1.bf16.msra.mxu0 %v344
    %815 = vmatprep.subr.bf16.mxu0 0
    %816 = vmatpush1.bf16.msra.mxu0 0
    %817 = vmatprep.subr.bf16.mxu0 0
    %818 = vmatpush1.bf16.msra.mxu0 0
    %819 = vmatprep.subr.bf16.mxu0 0
    %820 = vmatpush1.bf16.msra.mxu0 0
    %821 = vmatprep.subr.bf16.mxu0 0
    %822 = vmatpush1.bf16.msra.mxu0 0
    %823 = vmatprep.subr.bf16.mxu0 0
    %824 = vmatpush1.bf16.msra.mxu0 0
    %825 = vmatprep.mubr.bf16.mxu0 %v791
    %826 = vmatmul.mubr.bf16.gmra.mrb[0].mxu0 %v787
    %v827 = vpop.f32.mrb[0].mxu0
    %v828 = vadd.f32 0.0, %v827
    %v829 = vpop.f32.mrb[0].mxu0
    %v830 = vadd.f32 0.0, %v829
    %v831 = vpop.f32.mrb[0].mxu0
    %v832 = vpop.f32.mrb[0].mxu0
    %833 = vdwg.mxu0
    %834 = vmatprep.subr.bf16.mxu0 %v257
    %835 = vmatpush1.bf16.msra.mxu0 %v256
    %836 = vmatprep.subr.bf16.mxu0 %v261
    %837 = vmatpush1.bf16.msra.mxu0 %v260
    %838 = vmatprep.subr.bf16.mxu0 %v265
    %839 = vmatpush1.bf16.msra.mxu0 %v264
    %840 = vmatprep.subr.bf16.mxu0 %v269
    %841 = vmatpush1.bf16.msra.mxu0 %v268
    %842 = vmatprep.subr.bf16.mxu0 %v273
    %843 = vmatpush1.bf16.msra.mxu0 %v272
    %844 = vmatprep.subr.bf16.mxu0 %v277
    %845 = vmatpush1.bf16.msra.mxu0 %v276
    %846 = vmatprep.subr.bf16.mxu0 %v281
    %847 = vmatpush1.bf16.msra.mxu0 %v280
    %848 = vmatprep.subr.bf16.mxu0 %v285
    %849 = vmatpush1.bf16.msra.mxu0 %v284
    %850 = vmatprep.subr.bf16.mxu0 %v289
    %851 = vmatpush1.bf16.msra.mxu0 %v288
    %852 = vmatprep.subr.bf16.mxu0 %v293
    %853 = vmatpush1.bf16.msra.mxu0 %v292
    %854 = vmatprep.subr.bf16.mxu0 %v353
    %855 = vmatpush1.bf16.msra.mxu0 %v350
    %856 = vmatprep.subr.bf16.mxu0 0
    %857 = vmatpush1.bf16.msra.mxu0 0
    %858 = vmatprep.subr.bf16.mxu0 0
    %859 = vmatpush1.bf16.msra.mxu0 0
    %860 = vmatprep.subr.bf16.mxu0 0
    %861 = vmatpush1.bf16.msra.mxu0 0
    %862 = vmatprep.subr.bf16.mxu0 0
    %863 = vmatpush1.bf16.msra.mxu0 0
    %864 = vmatprep.subr.bf16.mxu0 0
    %865 = vmatpush1.bf16.msra.mxu0 0
    %866 = vmatprep.mubr.bf16.mxu0 %v791
    %867 = vmatmul.mubr.bf16.gmra.mrb[0].mxu0 %v787
    %v868 = vpop.f32.mrb[0].mxu0
    %v869 = vadd.f32 0.0, %v868
    %v870 = vpop.f32.mrb[0].mxu0
    %v871 = vadd.f32 0.0, %v870
    %v872 = vpop.f32.mrb[0].mxu0
    %v873 = vpop.f32.mrb[0].mxu0
    %874 = vdwg.mxu0
    %v875 = vmax.f32 %v828, %v830
    %v876 = vmax.f32 %v869, %v871
    %v877 = vmax.f32 %v875, %v876
    %v878 = vadd.f32 %v877, %v444
    %v879 = vmax.f32 %v878, 0.0
    %v880 = vpack.c.bf16 %v879, %v879
    %881 = vst [vmem:[#allocation2 + $0x10] sm:$0xf] %v880
    %v882 = vld [vmem:[#allocation3 + $0x10] sm:$0xff]
    %v883 = vld [vmem:[#allocation3 + $0x18] sm:$0xff]
    %v884 = vpack.c.bf16 %v882, %v882
    %v885 = vpack.c.bf16 %v883, %v883
    %888 = vrot.lane.b32.xlu0 %v884, 104
    %v889 = vpop.permute.xlu0 %888
    %890 = vrot.lane.b32.xlu0 %v885, 104
    %v891 = vpop.permute.xlu0 %890
    %vm892 = vcmask 850944
    %v893 = vsel %vm892, %v889, %v891
    %v896 = vsel %vm338, %v891, 0
    %898 = vmatprep.subr.bf16.mxu0 %v255
    %899 = vmatpush1.bf16.msra.mxu0 %v254
    %900 = vmatprep.subr.bf16.mxu0 %v259
    %901 = vmatpush1.bf16.msra.mxu0 %v258
    %902 = vmatprep.subr.bf16.mxu0 %v263
    %903 = vmatpush1.bf16.msra.mxu0 %v262
    %904 = vmatprep.subr.bf16.mxu0 %v267
    %905 = vmatpush1.bf16.msra.mxu0 %v266
    %906 = vmatprep.subr.bf16.mxu0 %v271
    %907 = vmatpush1.bf16.msra.mxu0 %v270
    %908 = vmatprep.subr.bf16.mxu0 %v275
    %909 = vmatpush1.bf16.msra.mxu0 %v274
    %910 = vmatprep.subr.bf16.mxu0 %v279
    %911 = vmatpush1.bf16.msra.mxu0 %v278
    %912 = vmatprep.subr.bf16.mxu0 %v283
    %913 = vmatpush1.bf16.msra.mxu0 %v282
    %914 = vmatprep.subr.bf16.mxu0 %v287
    %915 = vmatpush1.bf16.msra.mxu0 %v286
    %916 = vmatprep.subr.bf16.mxu0 %v291
    %917 = vmatpush1.bf16.msra.mxu0 %v290
    %918 = vmatprep.subr.bf16.mxu0 %v347
    %919 = vmatpush1.bf16.msra.mxu0 %v344
    %920 = vmatprep.subr.bf16.mxu0 0
    %921 = vmatpush1.bf16.msra.mxu0 0
    %922 = vmatprep.subr.bf16.mxu0 0
    %923 = vmatpush1.bf16.msra.mxu0 0
    %924 = vmatprep.subr.bf16.mxu0 0
    %925 = vmatpush1.bf16.msra.mxu0 0
    %926 = vmatprep.subr.bf16.mxu0 0
    %927 = vmatpush1.bf16.msra.mxu0 0
    %928 = vmatprep.subr.bf16.mxu0 0
    %929 = vmatpush1.bf16.msra.mxu0 0
    %930 = vmatprep.mubr.bf16.mxu0 %v896
    %931 = vmatmul.mubr.bf16.gmra.mrb[0].mxu0 %v893
    %v932 = vpop.f32.mrb[0].mxu0
    %v933 = vadd.f32 0.0, %v932
    %v934 = vpop.f32.mrb[0].mxu0
    %v935 = vadd.f32 0.0, %v934
    %v936 = vpop.f32.mrb[0].mxu0
    %v937 = vpop.f32.mrb[0].mxu0
    %938 = vdwg.mxu0
    %939 = vmatprep.subr.bf16.mxu0 %v257
    %940 = vmatpush1.bf16.msra.mxu0 %v256
    %941 = vmatprep.subr.bf16.mxu0 %v261
    %942 = vmatpush1.bf16.msra.mxu0 %v260
    %943 = vmatprep.subr.bf16.mxu0 %v265
    %944 = vmatpush1.bf16.msra.mxu0 %v264
    %945 = vmatprep.subr.bf16.mxu0 %v269
    %946 = vmatpush1.bf16.msra.mxu0 %v268
    %947 = vmatprep.subr.bf16.mxu0 %v273
    %948 = vmatpush1.bf16.msra.mxu0 %v272
    %949 = vmatprep.subr.bf16.mxu0 %v277
    %950 = vmatpush1.bf16.msra.mxu0 %v276
    %951 = vmatprep.subr.bf16.mxu0 %v281
    %952 = vmatpush1.bf16.msra.mxu0 %v280
    %953 = vmatprep.subr.bf16.mxu0 %v285
    %954 = vmatpush1.bf16.msra.mxu0 %v284
    %955 = vmatprep.subr.bf16.mxu0 %v289
    %956 = vmatpush1.bf16.msra.mxu0 %v288
    %957 = vmatprep.subr.bf16.mxu0 %v293
    %958 = vmatpush1.bf16.msra.mxu0 %v292
    %959 = vmatprep.subr.bf16.mxu0 %v353
    %960 = vmatpush1.bf16.msra.mxu0 %v350
    %961 = vmatprep.subr.bf16.mxu0 0
    %962 = vmatpush1.bf16.msra.mxu0 0
    %963 = vmatprep.subr.bf16.mxu0 0
    %964 = vmatpush1.bf16.msra.mxu0 0
    %965 = vmatprep.subr.bf16.mxu0 0
    %966 = vmatpush1.bf16.msra.mxu0 0
    %967 = vmatprep.subr.bf16.mxu0 0
    %968 = vmatpush1.bf16.msra.mxu0 0
    %969 = vmatprep.subr.bf16.mxu0 0
    %970 = vmatpush1.bf16.msra.mxu0 0
    %971 = vmatprep.mubr.bf16.mxu0 %v896
    %972 = vmatmul.mubr.bf16.gmra.mrb[0].mxu0 %v893
    %v973 = vpop.f32.mrb[0].mxu0
    %v974 = vadd.f32 0.0, %v973
    %v975 = vpop.f32.mrb[0].mxu0
    %v976 = vadd.f32 0.0, %v975
    %v977 = vpop.f32.mrb[0].mxu0
    %v978 = vpop.f32.mrb[0].mxu0
    %979 = vdwg.mxu0
    %v980 = vmax.f32 %v933, %v935
    %v981 = vmax.f32 %v974, %v976
    %v982 = vmax.f32 %v980, %v981
    %v983 = vadd.f32 %v982, %v444
    %v984 = vmax.f32 %v983, 0.0
    %v985 = vpack.c.bf16 %v984, %v984
    %986 = vst [vmem:[#allocation2 + $0x14] sm:$0xf] %v985
    %v987 = vld [vmem:[#allocation3 + $0x10] sm:$0xff]
    %v988 = vld [vmem:[#allocation3 + $0x18] sm:$0xff]
    %v989 = vpack.c.bf16 %v987, %v987
    %v990 = vpack.c.bf16 %v988, %v988
    %993 = vrot.lane.b32.xlu0 %v989, 48
    %v994 = vpop.permute.xlu0 %993
    %995 = vrot.lane.b32.xlu0 %v990, 48
    %v996 = vpop.permute.xlu0 %995
    %vm997 = vcmask 392192
    %v998 = vsel %vm997, %v994, %v996
    %v1001 = vsel %vm338, %v996, 0
    %1003 = vmatprep.subr.bf16.mxu0 %v255
    %1004 = vmatpush1.bf16.msra.mxu0 %v254
    %1005 = vmatprep.subr.bf16.mxu0 %v259
    %1006 = vmatpush1.bf16.msra.mxu0 %v258
    %1007 = vmatprep.subr.bf16.mxu0 %v263
    %1008 = vmatpush1.bf16.msra.mxu0 %v262
    %1009 = vmatprep.subr.bf16.mxu0 %v267
    %1010 = vmatpush1.bf16.msra.mxu0 %v266
    %1011 = vmatprep.subr.bf16.mxu0 %v271
    %1012 = vmatpush1.bf16.msra.mxu0 %v270
    %1013 = vmatprep.subr.bf16.mxu0 %v275
    %1014 = vmatpush1.bf16.msra.mxu0 %v274
    %1015 = vmatprep.subr.bf16.mxu0 %v279
    %1016 = vmatpush1.bf16.msra.mxu0 %v278
    %1017 = vmatprep.subr.bf16.mxu0 %v283
    %1018 = vmatpush1.bf16.msra.mxu0 %v282
    %1019 = vmatprep.subr.bf16.mxu0 %v287
    %1020 = vmatpush1.bf16.msra.mxu0 %v286
    %1021 = vmatprep.subr.bf16.mxu0 %v291
    %1022 = vmatpush1.bf16.msra.mxu0 %v290
    %1023 = vmatprep.subr.bf16.mxu0 %v347
    %1024 = vmatpush1.bf16.msra.mxu0 %v344
    %1025 = vmatprep.subr.bf16.mxu0 0
    %1026 = vmatpush1.bf16.msra.mxu0 0
    %1027 = vmatprep.subr.bf16.mxu0 0
    %1028 = vmatpush1.bf16.msra.mxu0 0
    %1029 = vmatprep.subr.bf16.mxu0 0
    %1030 = vmatpush1.bf16.msra.mxu0 0
    %1031 = vmatprep.subr.bf16.mxu0 0
    %1032 = vmatpush1.bf16.msra.mxu0 0
    %1033 = vmatprep.subr.bf16.mxu0 0
    %1034 = vmatpush1.bf16.msra.mxu0 0
    %1035 = vmatprep.mubr.bf16.mxu0 %v1001
    %1036 = vmatmul.mubr.bf16.gmra.mrb[0].mxu0 %v998
    %v1037 = vpop.f32.mrb[0].mxu0
    %v1038 = vadd.f32 0.0, %v1037
    %v1039 = vpop.f32.mrb[0].mxu0
    %v1040 = vadd.f32 0.0, %v1039
    %v1041 = vpop.f32.mrb[0].mxu0
    %v1042 = vpop.f32.mrb[0].mxu0
    %1043 = vdwg.mxu0
    %1044 = vmatprep.subr.bf16.mxu0 %v257
    %1045 = vmatpush1.bf16.msra.mxu0 %v256
    %1046 = vmatprep.subr.bf16.mxu0 %v261
    %1047 = vmatpush1.bf16.msra.mxu0 %v260
    %1048 = vmatprep.subr.bf16.mxu0 %v265
    %1049 = vmatpush1.bf16.msra.mxu0 %v264
    %1050 = vmatprep.subr.bf16.mxu0 %v269
    %1051 = vmatpush1.bf16.msra.mxu0 %v268
    %1052 = vmatprep.subr.bf16.mxu0 %v273
    %1053 = vmatpush1.bf16.msra.mxu0 %v272
    %1054 = vmatprep.subr.bf16.mxu0 %v277
    %1055 = vmatpush1.bf16.msra.mxu0 %v276
    %1056 = vmatprep.subr.bf16.mxu0 %v281
    %1057 = vmatpush1.bf16.msra.mxu0 %v280
    %1058 = vmatprep.subr.bf16.mxu0 %v285
    %1059 = vmatpush1.bf16.msra.mxu0 %v284
    %1060 = vmatprep.subr.bf16.mxu0 %v289
    %1061 = vmatpush1.bf16.msra.mxu0 %v288
    %1062 = vmatprep.subr.bf16.mxu0 %v293
    %1063 = vmatpush1.bf16.msra.mxu0 %v292
    %1064 = vmatprep.subr.bf16.mxu0 %v353
    %1065 = vmatpush1.bf16.msra.mxu0 %v350
    %1066 = vmatprep.subr.bf16.mxu0 0
    %1067 = vmatpush1.bf16.msra.mxu0 0
    %1068 = vmatprep.subr.bf16.mxu0 0
    %1069 = vmatpush1.bf16.msra.mxu0 0
    %1070 = vmatprep.subr.bf16.mxu0 0
    %1071 = vmatpush1.bf16.msra.mxu0 0
    %1072 = vmatprep.subr.bf16.mxu0 0
    %1073 = vmatpush1.bf16.msra.mxu0 0
    %1074 = vmatprep.subr.bf16.mxu0 0
    %1075 = vmatpush1.bf16.msra.mxu0 0
    %1076 = vmatprep.mubr.bf16.mxu0 %v1001
    %1077 = vmatmul.mubr.bf16.gmra.mrb[0].mxu0 %v998
    %v1078 = vpop.f32.mrb[0].mxu0
    %v1079 = vadd.f32 0.0, %v1078
    %v1080 = vpop.f32.mrb[0].mxu0
    %v1081 = vadd.f32 0.0, %v1080
    %v1082 = vpop.f32.mrb[0].mxu0
    %v1083 = vpop.f32.mrb[0].mxu0
    %1084 = vdwg.mxu0
    %v1085 = vmax.f32 %v1038, %v1040
    %v1086 = vmax.f32 %v1079, %v1081
    %v1087 = vmax.f32 %v1085, %v1086
    %v1088 = vadd.f32 %v1087, %v444
    %v1089 = vmax.f32 %v1088, 0.0
    %v1090 = vpack.c.bf16 %v1089, %v1089
    %1091 = vst [vmem:[#allocation2 + $0x18] sm:$0xf] %v1090
    %v1092 = vld [vmem:[#allocation3 + $0x18] sm:$0xff]
    %v1093 = vld [vmem:[#allocation3 + $0x20] sm:$0xff]
    %v1094 = vpack.c.bf16 %v1092, %v1092
    %v1095 = vpack.c.bf16 %v1093, %v1093
    %1098 = vrot.lane.b32.xlu0 %v1094, 120
    %v1099 = vpop.permute.xlu0 %1098
    %1100 = vrot.lane.b32.xlu0 %v1095, 120
    %v1101 = vpop.permute.xlu0 %1100
    %vm1102 = vcmask 982016
    %v1103 = vsel %vm1102, %v1099, %v1101
    %v1106 = vsel %vm338, %v1101, 0
    %1108 = vmatprep.subr.bf16.mxu0 %v255
    %1109 = vmatpush1.bf16.msra.mxu0 %v254
    %1110 = vmatprep.subr.bf16.mxu0 %v259
    %1111 = vmatpush1.bf16.msra.mxu0 %v258
    %1112 = vmatprep.subr.bf16.mxu0 %v263
    %1113 = vmatpush1.bf16.msra.mxu0 %v262
    %1114 = vmatprep.subr.bf16.mxu0 %v267
    %1115 = vmatpush1.bf16.msra.mxu0 %v266
    %1116 = vmatprep.subr.bf16.mxu0 %v271
    %1117 = vmatpush1.bf16.msra.mxu0 %v270
    %1118 = vmatprep.subr.bf16.mxu0 %v275
    %1119 = vmatpush1.bf16.msra.mxu0 %v274
    %1120 = vmatprep.subr.bf16.mxu0 %v279
    %1121 = vmatpush1.bf16.msra.mxu0 %v278
    %1122 = vmatprep.subr.bf16.mxu0 %v283
    %1123 = vmatpush1.bf16.msra.mxu0 %v282
    %1124 = vmatprep.subr.bf16.mxu0 %v287
    %1125 = vmatpush1.bf16.msra.mxu0 %v286
    %1126 = vmatprep.subr.bf16.mxu0 %v291
    %1127 = vmatpush1.bf16.msra.mxu0 %v290
    %1128 = vmatprep.subr.bf16.mxu0 %v347
    %1129 = vmatpush1.bf16.msra.mxu0 %v344
    %1130 = vmatprep.subr.bf16.mxu0 0
    %1131 = vmatpush1.bf16.msra.mxu0 0
    %1132 = vmatprep.subr.bf16.mxu0 0
    %1133 = vmatpush1.bf16.msra.mxu0 0
    %1134 = vmatprep.subr.bf16.mxu0 0
    %1135 = vmatpush1.bf16.msra.mxu0 0
    %1136 = vmatprep.subr.bf16.mxu0 0
    %1137 = vmatpush1.bf16.msra.mxu0 0
    %1138 = vmatprep.subr.bf16.mxu0 0
    %1139 = vmatpush1.bf16.msra.mxu0 0
    %1140 = vmatprep.mubr.bf16.mxu0 %v1106
    %1141 = vmatmul.mubr.bf16.gmra.mrb[0].mxu0 %v1103
    %v1142 = vpop.f32.mrb[0].mxu0
    %v1143 = vadd.f32 0.0, %v1142
    %v1144 = vpop.f32.mrb[0].mxu0
    %v1145 = vadd.f32 0.0, %v1144
    %v1146 = vpop.f32.mrb[0].mxu0
    %v1147 = vpop.f32.mrb[0].mxu0
    %1148 = vdwg.mxu0
    %1149 = vmatprep.subr.bf16.mxu0 %v257
    %1150 = vmatpush1.bf16.msra.mxu0 %v256
    %1151 = vmatprep.subr.bf16.mxu0 %v261
    %1152 = vmatpush1.bf16.msra.mxu0 %v260
    %1153 = vmatprep.subr.bf16.mxu0 %v265
    %1154 = vmatpush1.bf16.msra.mxu0 %v264
    %1155 = vmatprep.subr.bf16.mxu0 %v269
    %1156 = vmatpush1.bf16.msra.mxu0 %v268
    %1157 = vmatprep.subr.bf16.mxu0 %v273
    %1158 = vmatpush1.bf16.msra.mxu0 %v272
    %1159 = vmatprep.subr.bf16.mxu0 %v277
    %1160 = vmatpush1.bf16.msra.mxu0 %v276
    %1161 = vmatprep.subr.bf16.mxu0 %v281
    %1162 = vmatpush1.bf16.msra.mxu0 %v280
    %1163 = vmatprep.subr.bf16.mxu0 %v285
    %1164 = vmatpush1.bf16.msra.mxu0 %v284
    %1165 = vmatprep.subr.bf16.mxu0 %v289
    %1166 = vmatpush1.bf16.msra.mxu0 %v288
    %1167 = vmatprep.subr.bf16.mxu0 %v293
    %1168 = vmatpush1.bf16.msra.mxu0 %v292
    %1169 = vmatprep.subr.bf16.mxu0 %v353
    %1170 = vmatpush1.bf16.msra.mxu0 %v350
    %1171 = vmatprep.subr.bf16.mxu0 0
    %1172 = vmatpush1.bf16.msra.mxu0 0
    %1173 = vmatprep.subr.bf16.mxu0 0
    %1174 = vmatpush1.bf16.msra.mxu0 0
    %1175 = vmatprep.subr.bf16.mxu0 0
    %1176 = vmatpush1.bf16.msra.mxu0 0
    %1177 = vmatprep.subr.bf16.mxu0 0
    %1178 = vmatpush1.bf16.msra.mxu0 0
    %1179 = vmatprep.subr.bf16.mxu0 0
    %1180 = vmatpush1.bf16.msra.mxu0 0
    %1181 = vmatprep.mubr.bf16.mxu0 %v1106
    %1182 = vmatmul.mubr.bf16.gmra.mrb[0].mxu0 %v1103
    %v1183 = vpop.f32.mrb[0].mxu0
    %v1184 = vadd.f32 0.0, %v1183
    %v1185 = vpop.f32.mrb[0].mxu0
    %v1186 = vadd.f32 0.0, %v1185
    %v1187 = vpop.f32.mrb[0].mxu0
    %v1188 = vpop.f32.mrb[0].mxu0
    %1189 = vdwg.mxu0
    %v1190 = vmax.f32 %v1143, %v1145
    %v1191 = vmax.f32 %v1184, %v1186
    %v1192 = vmax.f32 %v1190, %v1191
    %v1193 = vadd.f32 %v1192, %v444
    %v1194 = vmax.f32 %v1193, 0.0
    %v1195 = vpack.c.bf16 %v1194, %v1194
    %1196 = vst [vmem:[#allocation2 + $0x1c] sm:$0xf] %v1195
    %v1197 = vld [vmem:[#allocation3 + $0x18] sm:$0xff]
    %v1198 = vld [vmem:[#allocation3 + $0x20] sm:$0xff]
    %v1199 = vpack.c.bf16 %v1197, %v1197
    %v1200 = vpack.c.bf16 %v1198, %v1198
    %1203 = vrot.lane.b32.xlu0 %v1199, 64
    %v1204 = vpop.permute.xlu0 %1203
    %1205 = vrot.lane.b32.xlu0 %v1200, 64
    %v1206 = vpop.permute.xlu0 %1205
    %vm1207 = vcmask 523264
    %v1208 = vsel %vm1207, %v1204, %v1206
    %v1211 = vsel %vm338, %v1206, 0
    %1213 = vmatprep.subr.bf16.mxu0 %v255
    %1214 = vmatpush1.bf16.msra.mxu0 %v254
    %1215 = vmatprep.subr.bf16.mxu0 %v259
    %1216 = vmatpush1.bf16.msra.mxu0 %v258
    %1217 = vmatprep.subr.bf16.mxu0 %v263
    %1218 = vmatpush1.bf16.msra.mxu0 %v262
    %1219 = vmatprep.subr.bf16.mxu0 %v267
    %1220 = vmatpush1.bf16.msra.mxu0 %v266
    %1221 = vmatprep.subr.bf16.mxu0 %v271
    %1222 = vmatpush1.bf16.msra.mxu0 %v270
    %1223 = vmatprep.subr.bf16.mxu0 %v275
    %1224 = vmatpush1.bf16.msra.mxu0 %v274
    %1225 = vmatprep.subr.bf16.mxu0 %v279
    %1226 = vmatpush1.bf16.msra.mxu0 %v278
    %1227 = vmatprep.subr.bf16.mxu0 %v283
    %1228 = vmatpush1.bf16.msra.mxu0 %v282
    %1229 = vmatprep.subr.bf16.mxu0 %v287
    %1230 = vmatpush1.bf16.msra.mxu0 %v286
    %1231 = vmatprep.subr.bf16.mxu0 %v291
    %1232 = vmatpush1.bf16.msra.mxu0 %v290
    %1233 = vmatprep.subr.bf16.mxu0 %v347
    %1234 = vmatpush1.bf16.msra.mxu0 %v344
    %1235 = vmatprep.subr.bf16.mxu0 0
    %1236 = vmatpush1.bf16.msra.mxu0 0
    %1237 = vmatprep.subr.bf16.mxu0 0
    %1238 = vmatpush1.bf16.msra.mxu0 0
    %1239 = vmatprep.subr.bf16.mxu0 0
    %1240 = vmatpush1.bf16.msra.mxu0 0
    %1241 = vmatprep.subr.bf16.mxu0 0
    %1242 = vmatpush1.bf16.msra.mxu0 0
    %1243 = vmatprep.subr.bf16.mxu0 0
    %1244 = vmatpush1.bf16.msra.mxu0 0
    %1245 = vmatprep.mubr.bf16.mxu0 %v1211
    %1246 = vmatmul.mubr.bf16.gmra.mrb[0].mxu0 %v1208
    %v1247 = vpop.f32.mrb[0].mxu0
    %v1248 = vadd.f32 0.0, %v1247
    %v1249 = vpop.f32.mrb[0].mxu0
    %v1250 = vadd.f32 0.0, %v1249
    %v1251 = vpop.f32.mrb[0].mxu0
    %v1252 = vpop.f32.mrb[0].mxu0
    %1253 = vdwg.mxu0
    %1254 = vmatprep.subr.bf16.mxu0 %v257
    %1255 = vmatpush1.bf16.msra.mxu0 %v256
    %1256 = vmatprep.subr.bf16.mxu0 %v261
    %1257 = vmatpush1.bf16.msra.mxu0 %v260
    %1258 = vmatprep.subr.bf16.mxu0 %v265
    %1259 = vmatpush1.bf16.msra.mxu0 %v264
    %1260 = vmatprep.subr.bf16.mxu0 %v269
    %1261 = vmatpush1.bf16.msra.mxu0 %v268
    %1262 = vmatprep.subr.bf16.mxu0 %v273
    %1263 = vmatpush1.bf16.msra.mxu0 %v272
    %1264 = vmatprep.subr.bf16.mxu0 %v277
    %1265 = vmatpush1.bf16.msra.mxu0 %v276
    %1266 = vmatprep.subr.bf16.mxu0 %v281
    %1267 = vmatpush1.bf16.msra.mxu0 %v280
    %1268 = vmatprep.subr.bf16.mxu0 %v285
    %1269 = vmatpush1.bf16.msra.mxu0 %v284
    %1270 = vmatprep.subr.bf16.mxu0 %v289
    %1271 = vmatpush1.bf16.msra.mxu0 %v288
    %1272 = vmatprep.subr.bf16.mxu0 %v293
    %1273 = vmatpush1.bf16.msra.mxu0 %v292
    %1274 = vmatprep.subr.bf16.mxu0 %v353
    %1275 = vmatpush1.bf16.msra.mxu0 %v350
    %1276 = vmatprep.subr.bf16.mxu0 0
    %1277 = vmatpush1.bf16.msra.mxu0 0
    %1278 = vmatprep.subr.bf16.mxu0 0
    %1279 = vmatpush1.bf16.msra.mxu0 0
    %1280 = vmatprep.subr.bf16.mxu0 0
    %1281 = vmatpush1.bf16.msra.mxu0 0
    %1282 = vmatprep.subr.bf16.mxu0 0
    %1283 = vmatpush1.bf16.msra.mxu0 0
    %1284 = vmatprep.subr.bf16.mxu0 0
    %1285 = vmatpush1.bf16.msra.mxu0 0
    %1286 = vmatprep.mubr.bf16.mxu0 %v1211
    %1287 = vmatmul.mubr.bf16.gmra.mrb[0].mxu0 %v1208
    %v1288 = vpop.f32.mrb[0].mxu0
    %v1289 = vadd.f32 0.0, %v1288
    %v1290 = vpop.f32.mrb[0].mxu0
    %v1291 = vadd.f32 0.0, %v1290
    %v1292 = vpop.f32.mrb[0].mxu0
    %v1293 = vpop.f32.mrb[0].mxu0
    %1294 = vdwg.mxu0
    %v1295 = vmax.f32 %v1248, %v1250
    %v1296 = vmax.f32 %v1289, %v1291
    %v1297 = vmax.f32 %v1295, %v1296
    %v1298 = vadd.f32 %v1297, %v444
    %v1299 = vmax.f32 %v1298, 0.0
    %v1300 = vpack.c.bf16 %v1299, %v1299
    %1301 = vst [vmem:[#allocation2 + $0x20] sm:$0xf] %v1300
    %v1302 = vld [vmem:[#allocation3 + $0x18] sm:$0xff]
    %v1303 = vld [vmem:[#allocation3 + $0x20] sm:$0xff]
    %v1304 = vld [vmem:[#allocation3 + $0x28] sm:$0xff]
    %v1305 = vpack.c.bf16 %v1302, %v1302
    %v1306 = vpack.c.bf16 %v1303, %v1303
    %v1307 = vpack.c.bf16 %v1304, %v1304
    %1311 = vrot.lane.b32.xlu0 %v1305, 8
    %v1312 = vpop.permute.xlu0 %1311
    %1313 = vrot.lane.b32.xlu0 %v1306, 8
    %v1314 = vpop.permute.xlu0 %1313
    %1315 = vrot.lane.b32.xlu0 %v1307, 8
    %v1316 = vpop.permute.xlu0 %1315
    %vm1317 = vcmask 64512
    %v1318 = vsel %vm1317, %v1312, %v1314
    %v1319 = vsel %vm1317, %v1314, %v1316
    %v1322 = vsel %vm338, %v1319, 0
    %1324 = vmatprep.subr.bf16.mxu0 %v255
    %1325 = vmatpush1.bf16.msra.mxu0 %v254
    %1326 = vmatprep.subr.bf16.mxu0 %v259
    %1327 = vmatpush1.bf16.msra.mxu0 %v258
    %1328 = vmatprep.subr.bf16.mxu0 %v263
    %1329 = vmatpush1.bf16.msra.mxu0 %v262
    %1330 = vmatprep.subr.bf16.mxu0 %v267
    %1331 = vmatpush1.bf16.msra.mxu0 %v266
    %1332 = vmatprep.subr.bf16.mxu0 %v271
    %1333 = vmatpush1.bf16.msra.mxu0 %v270
    %1334 = vmatprep.subr.bf16.mxu0 %v275
    %1335 = vmatpush1.bf16.msra.mxu0 %v274
    %1336 = vmatprep.subr.bf16.mxu0 %v279
    %1337 = vmatpush1.bf16.msra.mxu0 %v278
    %1338 = vmatprep.subr.bf16.mxu0 %v283
    %1339 = vmatpush1.bf16.msra.mxu0 %v282
    %1340 = vmatprep.subr.bf16.mxu0 %v287
    %1341 = vmatpush1.bf16.msra.mxu0 %v286
    %1342 = vmatprep.subr.bf16.mxu0 %v291
    %1343 = vmatpush1.bf16.msra.mxu0 %v290
    %1344 = vmatprep.subr.bf16.mxu0 %v347
    %1345 = vmatpush1.bf16.msra.mxu0 %v344
    %1346 = vmatprep.subr.bf16.mxu0 0
    %1347 = vmatpush1.bf16.msra.mxu0 0
    %1348 = vmatprep.subr.bf16.mxu0 0
    %1349 = vmatpush1.bf16.msra.mxu0 0
    %1350 = vmatprep.subr.bf16.mxu0 0
    %1351 = vmatpush1.bf16.msra.mxu0 0
    %1352 = vmatprep.subr.bf16.mxu0 0
    %1353 = vmatpush1.bf16.msra.mxu0 0
    %1354 = vmatprep.subr.bf16.mxu0 0
    %1355 = vmatpush1.bf16.msra.mxu0 0
    %1356 = vmatprep.mubr.bf16.mxu0 %v1322
    %1357 = vmatmul.mubr.bf16.gmra.mrb[0].mxu0 %v1318
    %v1358 = vpop.f32.mrb[0].mxu0
    %v1359 = vadd.f32 0.0, %v1358
    %v1360 = vpop.f32.mrb[0].mxu0
    %v1361 = vadd.f32 0.0, %v1360
    %v1362 = vpop.f32.mrb[0].mxu0
    %v1363 = vpop.f32.mrb[0].mxu0
    %1364 = vdwg.mxu0
    %1365 = vmatprep.subr.bf16.mxu0 %v257
    %1366 = vmatpush1.bf16.msra.mxu0 %v256
    %1367 = vmatprep.subr.bf16.mxu0 %v261
    %1368 = vmatpush1.bf16.msra.mxu0 %v260
    %1369 = vmatprep.subr.bf16.mxu0 %v265
    %1370 = vmatpush1.bf16.msra.mxu0 %v264
    %1371 = vmatprep.subr.bf16.mxu0 %v269
    %1372 = vmatpush1.bf16.msra.mxu0 %v268
    %1373 = vmatprep.subr.bf16.mxu0 %v273
    %1374 = vmatpush1.bf16.msra.mxu0 %v272
    %1375 = vmatprep.subr.bf16.mxu0 %v277
    %1376 = vmatpush1.bf16.msra.mxu0 %v276
    %1377 = vmatprep.subr.bf16.mxu0 %v281
    %1378 = vmatpush1.bf16.msra.mxu0 %v280
    %1379 = vmatprep.subr.bf16.mxu0 %v285
    %1380 = vmatpush1.bf16.msra.mxu0 %v284
    %1381 = vmatprep.subr.bf16.mxu0 %v289
    %1382 = vmatpush1.bf16.msra.mxu0 %v288
    %1383 = vmatprep.subr.bf16.mxu0 %v293
    %1384 = vmatpush1.bf16.msra.mxu0 %v292
    %1385 = vmatprep.subr.bf16.mxu0 %v353
    %1386 = vmatpush1.bf16.msra.mxu0 %v350
    %1387 = vmatprep.subr.bf16.mxu0 0
    %1388 = vmatpush1.bf16.msra.mxu0 0
    %1389 = vmatprep.subr.bf16.mxu0 0
    %1390 = vmatpush1.bf16.msra.mxu0 0
    %1391 = vmatprep.subr.bf16.mxu0 0
    %1392 = vmatpush1.bf16.msra.mxu0 0
    %1393 = vmatprep.subr.bf16.mxu0 0
    %1394 = vmatpush1.bf16.msra.mxu0 0
    %1395 = vmatprep.subr.bf16.mxu0 0
    %1396 = vmatpush1.bf16.msra.mxu0 0
    %1397 = vmatprep.mubr.bf16.mxu0 %v1322
    %1398 = vmatmul.mubr.bf16.gmra.mrb[0].mxu0 %v1318
    %v1399 = vpop.f32.mrb[0].mxu0
    %v1400 = vadd.f32 0.0, %v1399
    %v1401 = vpop.f32.mrb[0].mxu0
    %v1402 = vadd.f32 0.0, %v1401
    %v1403 = vpop.f32.mrb[0].mxu0
    %v1404 = vpop.f32.mrb[0].mxu0
    %1405 = vdwg.mxu0
    %v1406 = vmax.f32 %v1359, %v1361
    %v1407 = vmax.f32 %v1400, %v1402
    %v1408 = vmax.f32 %v1406, %v1407
    %v1409 = vadd.f32 %v1408, %v444
    %v1410 = vmax.f32 %v1409, 0.0
    %v1411 = vpack.c.bf16 %v1410, %v1410
    %1412 = vst [vmem:[#allocation2 + $0x24] sm:$0xf] %v1411
    %v1413 = vld [vmem:[#allocation3 + $0x20] sm:$0xff]
    %v1414 = vld [vmem:[#allocation3 + $0x28] sm:$0xff]
    %v1415 = vpack.c.bf16 %v1413, %v1413
    %v1416 = vpack.c.bf16 %v1414, %v1414
    %1419 = vrot.lane.b32.xlu0 %v1415, 80
    %v1420 = vpop.permute.xlu0 %1419
    %1421 = vrot.lane.b32.xlu0 %v1416, 80
    %v1422 = vpop.permute.xlu0 %1421
    %vm1423 = vcmask 654336
    %v1424 = vsel %vm1423, %v1420, %v1422
    %v1427 = vsel %vm338, %v1422, 0
    %1429 = vmatprep.subr.bf16.mxu0 %v255
    %1430 = vmatpush1.bf16.msra.mxu0 %v254
    %1431 = vmatprep.subr.bf16.mxu0 %v259
    %1432 = vmatpush1.bf16.msra.mxu0 %v258
    %1433 = vmatprep.subr.bf16.mxu0 %v263
    %1434 = vmatpush1.bf16.msra.mxu0 %v262
    %1435 = vmatprep.subr.bf16.mxu0 %v267
    %1436 = vmatpush1.bf16.msra.mxu0 %v266
    %1437 = vmatprep.subr.bf16.mxu0 %v271
    %1438 = vmatpush1.bf16.msra.mxu0 %v270
    %1439 = vmatprep.subr.bf16.mxu0 %v275
    %1440 = vmatpush1.bf16.msra.mxu0 %v274
    %1441 = vmatprep.subr.bf16.mxu0 %v279
    %1442 = vmatpush1.bf16.msra.mxu0 %v278
    %1443 = vmatprep.subr.bf16.mxu0 %v283
    %1444 = vmatpush1.bf16.msra.mxu0 %v282
    %1445 = vmatprep.subr.bf16.mxu0 %v287
    %1446 = vmatpush1.bf16.msra.mxu0 %v286
    %1447 = vmatprep.subr.bf16.mxu0 %v291
    %1448 = vmatpush1.bf16.msra.mxu0 %v290
    %1449 = vmatprep.subr.bf16.mxu0 %v347
    %1450 = vmatpush1.bf16.msra.mxu0 %v344
    %1451 = vmatprep.subr.bf16.mxu0 0
    %1452 = vmatpush1.bf16.msra.mxu0 0
    %1453 = vmatprep.subr.bf16.mxu0 0
    %1454 = vmatpush1.bf16.msra.mxu0 0
    %1455 = vmatprep.subr.bf16.mxu0 0
    %1456 = vmatpush1.bf16.msra.mxu0 0
    %1457 = vmatprep.subr.bf16.mxu0 0
    %1458 = vmatpush1.bf16.msra.mxu0 0
    %1459 = vmatprep.subr.bf16.mxu0 0
    %1460 = vmatpush1.bf16.msra.mxu0 0
    %1461 = vmatprep.mubr.bf16.mxu0 %v1427
    %1462 = vmatmul.mubr.bf16.gmra.mrb[0].mxu0 %v1424
    %v1463 = vpop.f32.mrb[0].mxu0
    %v1464 = vadd.f32 0.0, %v1463
    %v1465 = vpop.f32.mrb[0].mxu0
    %v1466 = vadd.f32 0.0, %v1465
    %v1467 = vpop.f32.mrb[0].mxu0
    %v1468 = vpop.f32.mrb[0].mxu0
    %1469 = vdwg.mxu0
    %1470 = vmatprep.subr.bf16.mxu0 %v257
    %1471 = vmatpush1.bf16.msra.mxu0 %v256
    %1472 = vmatprep.subr.bf16.mxu0 %v261
    %1473 = vmatpush1.bf16.msra.mxu0 %v260
    %1474 = vmatprep.subr.bf16.mxu0 %v265
    %1475 = vmatpush1.bf16.msra.mxu0 %v264
    %1476 = vmatprep.subr.bf16.mxu0 %v269
    %1477 = vmatpush1.bf16.msra.mxu0 %v268
    %1478 = vmatprep.subr.bf16.mxu0 %v273
    %1479 = vmatpush1.bf16.msra.mxu0 %v272
    %1480 = vmatprep.subr.bf16.mxu0 %v277
    %1481 = vmatpush1.bf16.msra.mxu0 %v276
    %1482 = vmatprep.subr.bf16.mxu0 %v281
    %1483 = vmatpush1.bf16.msra.mxu0 %v280
    %1484 = vmatprep.subr.bf16.mxu0 %v285
    %1485 = vmatpush1.bf16.msra.mxu0 %v284
    %1486 = vmatprep.subr.bf16.mxu0 %v289
    %1487 = vmatpush1.bf16.msra.mxu0 %v288
    %1488 = vmatprep.subr.bf16.mxu0 %v293
    %1489 = vmatpush1.bf16.msra.mxu0 %v292
    %1490 = vmatprep.subr.bf16.mxu0 %v353
    %1491 = vmatpush1.bf16.msra.mxu0 %v350
    %1492 = vmatprep.subr.bf16.mxu0 0
    %1493 = vmatpush1.bf16.msra.mxu0 0
    %1494 = vmatprep.subr.bf16.mxu0 0
    %1495 = vmatpush1.bf16.msra.mxu0 0
    %1496 = vmatprep.subr.bf16.mxu0 0
    %1497 = vmatpush1.bf16.msra.mxu0 0
    %1498 = vmatprep.subr.bf16.mxu0 0
    %1499 = vmatpush1.bf16.msra.mxu0 0
    %1500 = vmatprep.subr.bf16.mxu0 0
    %1501 = vmatpush1.bf16.msra.mxu0 0
    %1502 = vmatprep.mubr.bf16.mxu0 %v1427
    %1503 = vmatmul.mubr.bf16.gmra.mrb[0].mxu0 %v1424
    %v1504 = vpop.f32.mrb[0].mxu0
    %v1505 = vadd.f32 0.0, %v1504
    %v1506 = vpop.f32.mrb[0].mxu0
    %v1507 = vadd.f32 0.0, %v1506
    %v1508 = vpop.f32.mrb[0].mxu0
    %v1509 = vpop.f32.mrb[0].mxu0
    %1510 = vdwg.mxu0
    %v1511 = vmax.f32 %v1464, %v1466
    %v1512 = vmax.f32 %v1505, %v1507
    %v1513 = vmax.f32 %v1511, %v1512
    %v1514 = vadd.f32 %v1513, %v444
    %v1515 = vmax.f32 %v1514, 0.0
    %v1516 = vpack.c.bf16 %v1515, %v1515
    %1517 = vst [vmem:[#allocation2 + $0x28] sm:$0xf] %v1516
    %v1518 = vld [vmem:[#allocation3 + $0x20] sm:$0xff]
    %v1519 = vld [vmem:[#allocation3 + $0x28] sm:$0xff]
    %v1520 = vld [vmem:[#allocation3 + $0x30] sm:$0xff]
    %v1521 = vpack.c.bf16 %v1518, %v1518
    %v1522 = vpack.c.bf16 %v1519, %v1519
    %v1523 = vpack.c.bf16 %v1520, %v1520
    %1527 = vrot.lane.b32.xlu0 %v1521, 24
    %v1528 = vpop.permute.xlu0 %1527
    %1529 = vrot.lane.b32.xlu0 %v1522, 24
    %v1530 = vpop.permute.xlu0 %1529
    %1531 = vrot.lane.b32.xlu0 %v1523, 24
    %v1532 = vpop.permute.xlu0 %1531
    %vm1533 = vcmask 195584
    %v1534 = vsel %vm1533, %v1528, %v1530
    %v1535 = vsel %vm1533, %v1530, %v1532
    %v1538 = vsel %vm338, %v1535, 0
    %1540 = vmatprep.subr.bf16.mxu0 %v255
    %1541 = vmatpush1.bf16.msra.mxu0 %v254
    %1542 = vmatprep.subr.bf16.mxu0 %v259
    %1543 = vmatpush1.bf16.msra.mxu0 %v258
    %1544 = vmatprep.subr.bf16.mxu0 %v263
    %1545 = vmatpush1.bf16.msra.mxu0 %v262
    %1546 = vmatprep.subr.bf16.mxu0 %v267
    %1547 = vmatpush1.bf16.msra.mxu0 %v266
    %1548 = vmatprep.subr.bf16.mxu0 %v271
    %1549 = vmatpush1.bf16.msra.mxu0 %v270
    %1550 = vmatprep.subr.bf16.mxu0 %v275
    %1551 = vmatpush1.bf16.msra.mxu0 %v274
    %1552 = vmatprep.subr.bf16.mxu0 %v279
    %1553 = vmatpush1.bf16.msra.mxu0 %v278
    %1554 = vmatprep.subr.bf16.mxu0 %v283
    %1555 = vmatpush1.bf16.msra.mxu0 %v282
    %1556 = vmatprep.subr.bf16.mxu0 %v287
    %1557 = vmatpush1.bf16.msra.mxu0 %v286
    %1558 = vmatprep.subr.bf16.mxu0 %v291
    %1559 = vmatpush1.bf16.msra.mxu0 %v290
    %1560 = vmatprep.subr.bf16.mxu0 %v347
    %1561 = vmatpush1.bf16.msra.mxu0 %v344
    %1562 = vmatprep.subr.bf16.mxu0 0
    %1563 = vmatpush1.bf16.msra.mxu0 0
    %1564 = vmatprep.subr.bf16.mxu0 0
    %1565 = vmatpush1.bf16.msra.mxu0 0
    %1566 = vmatprep.subr.bf16.mxu0 0
    %1567 = vmatpush1.bf16.msra.mxu0 0
    %1568 = vmatprep.subr.bf16.mxu0 0
    %1569 = vmatpush1.bf16.msra.mxu0 0
    %1570 = vmatprep.subr.bf16.mxu0 0
    %1571 = vmatpush1.bf16.msra.mxu0 0
    %1572 = vmatprep.mubr.bf16.mxu0 %v1538
    %1573 = vmatmul.mubr.bf16.gmra.mrb[0].mxu0 %v1534
    %v1574 = vpop.f32.mrb[0].mxu0
    %v1575 = vadd.f32 0.0, %v1574
    %v1576 = vpop.f32.mrb[0].mxu0
    %v1577 = vadd.f32 0.0, %v1576
    %v1578 = vpop.f32.mrb[0].mxu0
    %v1579 = vpop.f32.mrb[0].mxu0
    %1580 = vdwg.mxu0
    %1581 = vmatprep.subr.bf16.mxu0 %v257
    %1582 = vmatpush1.bf16.msra.mxu0 %v256
    %1583 = vmatprep.subr.bf16.mxu0 %v261
    %1584 = vmatpush1.bf16.msra.mxu0 %v260
    %1585 = vmatprep.subr.bf16.mxu0 %v265
    %1586 = vmatpush1.bf16.msra.mxu0 %v264
    %1587 = vmatprep.subr.bf16.mxu0 %v269
    %1588 = vmatpush1.bf16.msra.mxu0 %v268
    %1589 = vmatprep.subr.bf16.mxu0 %v273
    %1590 = vmatpush1.bf16.msra.mxu0 %v272
    %1591 = vmatprep.subr.bf16.mxu0 %v277
    %1592 = vmatpush1.bf16.msra.mxu0 %v276
    %1593 = vmatprep.subr.bf16.mxu0 %v281
    %1594 = vmatpush1.bf16.msra.mxu0 %v280
    %1595 = vmatprep.subr.bf16.mxu0 %v285
    %1596 = vmatpush1.bf16.msra.mxu0 %v284
    %1597 = vmatprep.subr.bf16.mxu0 %v289
    %1598 = vmatpush1.bf16.msra.mxu0 %v288
    %1599 = vmatprep.subr.bf16.mxu0 %v293
    %1600 = vmatpush1.bf16.msra.mxu0 %v292
    %1601 = vmatprep.subr.bf16.mxu0 %v353
    %1602 = vmatpush1.bf16.msra.mxu0 %v350
    %1603 = vmatprep.subr.bf16.mxu0 0
    %1604 = vmatpush1.bf16.msra.mxu0 0
    %1605 = vmatprep.subr.bf16.mxu0 0
    %1606 = vmatpush1.bf16.msra.mxu0 0
    %1607 = vmatprep.subr.bf16.mxu0 0
    %1608 = vmatpush1.bf16.msra.mxu0 0
    %1609 = vmatprep.subr.bf16.mxu0 0
    %1610 = vmatpush1.bf16.msra.mxu0 0
    %1611 = vmatprep.subr.bf16.mxu0 0
    %1612 = vmatpush1.bf16.msra.mxu0 0
    %1613 = vmatprep.mubr.bf16.mxu0 %v1538
    %1614 = vmatmul.mubr.bf16.gmra.mrb[0].mxu0 %v1534
    %v1615 = vpop.f32.mrb[0].mxu0
    %v1616 = vadd.f32 0.0, %v1615
    %v1617 = vpop.f32.mrb[0].mxu0
    %v1618 = vadd.f32 0.0, %v1617
    %v1619 = vpop.f32.mrb[0].mxu0
    %v1620 = vpop.f32.mrb[0].mxu0
    %1621 = vdwg.mxu0
    %v1622 = vmax.f32 %v1575, %v1577
    %v1623 = vmax.f32 %v1616, %v1618
    %v1624 = vmax.f32 %v1622, %v1623
    %v1625 = vadd.f32 %v1624, %v444
    %v1626 = vmax.f32 %v1625, 0.0
    %v1627 = vpack.c.bf16 %v1626, %v1626
    %1628 = vst [vmem:[#allocation2 + $0x2c] sm:$0xf] %v1627
    %v1629 = vld [vmem:[#allocation2] sm:$0xff]
    %v1630 = vld [vmem:[#allocation2 + $0x8] sm:$0xff]
    %v1631 = vld [vmem:[#allocation2 + $0x10] sm:$0xff]
    %v1632 = vld [vmem:[#allocation2 + $0x18] sm:$0xff]
    %v1633 = vld [vmem:[#allocation2 + $0x20] sm:$0xff]
    %v1634 = vld [vmem:[#allocation2 + $0x28] sm:$0xff]
    %v1635 = vld [vmem:[#allocation8] sm:$0xf]
    %v1636 = vld [vmem:[#allocation8 + $0x4] sm:$0xf]
    %v1637 = vld [vmem:[#allocation8 + $0x8] sm:$0xf]
    %v1638 = vld [vmem:[#allocation8 + $0xc] sm:$0xf]
    %v1639 = vld [vmem:[#allocation8 + $0x10] sm:$0xf]
    %v1640 = vld [vmem:[#allocation8 + $0x14] sm:$0xf]
    %v1641 = vld [vmem:[#allocation8 + $0x18] sm:$0xf]
    %v1642 = vld [vmem:[#allocation8 + $0x1c] sm:$0xf]
    %v1643 = vld [vmem:[#allocation8 + $0x20] sm:$0xf]
    %v1644 = vld [vmem:[#allocation8 + $0x24] sm:$0xf]
    %v1645 = vld [vmem:[#allocation8 + $0x28] sm:$0xf]
    %v1646 = vld [vmem:[#allocation8 + $0x2c] sm:$0xf]
    %v1647 = vld [vmem:[#allocation8 + $0x30] sm:$0xf]
    %v1648 = vld [vmem:[#allocation8 + $0x34] sm:$0xf]
    %v1649 = vld [vmem:[#allocation8 + $0x38] sm:$0xf]
    %v1650 = vld [vmem:[#allocation8 + $0x3c] sm:$0xf]
    %v1651 = vld [vmem:[#allocation8 + $0x40] sm:$0xf]
    %v1652 = vld [vmem:[#allocation8 + $0x44] sm:$0xf]
    %v1653 = vld [vmem:[#allocation8 + $0x48] sm:$0xf]
    %v1654 = vld [vmem:[#allocation8 + $0x4c] sm:$0xf]
    %v1655 = vld [vmem:[#allocation8 + $0x50] sm:$0xf]
    %v1656 = vld [vmem:[#allocation8 + $0x54] sm:$0xf]
    %v1657 = vld [vmem:[#allocation8 + $0x58] sm:$0xf]
    %v1658 = vld [vmem:[#allocation8 + $0x5c] sm:$0xf]
    %v1659 = vld [vmem:[#allocation8 + $0x60] sm:$0xf]
    %v1660 = vld [vmem:[#allocation8 + $0x64] sm:$0xf]
    %v1661 = vld [vmem:[#allocation8 + $0x68] sm:$0xf]
    %v1662 = vld [vmem:[#allocation8 + $0x6c] sm:$0xf]
    %v1663 = vld [vmem:[#allocation8 + $0x70] sm:$0xf]
    %v1664 = vld [vmem:[#allocation8 + $0x74] sm:$0xf]
    %v1665 = vld [vmem:[#allocation8 + $0x78] sm:$0xf]
    %v1666 = vld [vmem:[#allocation8 + $0x7c] sm:$0xf]
    %v1667 = vld [vmem:[#allocation8 + $0x80] sm:$0xf]
    %v1668 = vld [vmem:[#allocation8 + $0x84] sm:$0xf]
    %v1669 = vld [vmem:[#allocation8 + $0x88] sm:$0xf]
    %v1670 = vld [vmem:[#allocation8 + $0x8c] sm:$0xf]
    %v1671 = vld [vmem:[#allocation8 + $0x90] sm:$0xf]
    %v1672 = vld [vmem:[#allocation8 + $0x94] sm:$0xf]
    %v1673 = vld [vmem:[#allocation8 + $0x98] sm:$0xf]
    %v1674 = vld [vmem:[#allocation8 + $0x9c] sm:$0xf]
    %v1675 = vld [vmem:[#allocation8 + $0xa0] sm:$0xf]
    %v1676 = vld [vmem:[#allocation8 + $0xa4] sm:$0xf]
    %v1677 = vld [vmem:[#allocation8 + $0xa8] sm:$0xf]
    %v1678 = vld [vmem:[#allocation8 + $0xac] sm:$0xf]
    %v1679 = vld [vmem:[#allocation8 + $0xb0] sm:$0xf]
    %v1680 = vld [vmem:[#allocation8 + $0xb4] sm:$0xf]
    %v1681 = vld [vmem:[#allocation8 + $0xb8] sm:$0xf]
    %v1682 = vld [vmem:[#allocation8 + $0xbc] sm:$0xf]
    %v1683 = vld [vmem:[#allocation8 + $0xc0] sm:$0xf]
    %v1684 = vld [vmem:[#allocation8 + $0xc4] sm:$0xf]
    %v1685 = vld [vmem:[#allocation8 + $0xc8] sm:$0xf]
    %v1686 = vld [vmem:[#allocation8 + $0xcc] sm:$0xf]
    %v1687 = vld [vmem:[#allocation8 + $0xd0] sm:$0xf]
    %v1688 = vld [vmem:[#allocation8 + $0xd4] sm:$0xf]
    %v1689 = vld [vmem:[#allocation8 + $0xd8] sm:$0xf]
    %v1690 = vld [vmem:[#allocation8 + $0xdc] sm:$0xf]
    %v1691 = vld [vmem:[#allocation8 + $0xe0] sm:$0xf]
    %v1692 = vld [vmem:[#allocation8 + $0xe4] sm:$0xf]
    %v1693 = vld [vmem:[#allocation8 + $0xe8] sm:$0xf]
    %v1694 = vld [vmem:[#allocation8 + $0xec] sm:$0xf]
    %v1695 = vld [vmem:[#allocation8 + $0xf0] sm:$0xf]
    %v1696 = vld [vmem:[#allocation8 + $0xf4] sm:$0xf]
    %v1697 = vld [vmem:[#allocation8 + $0xf8] sm:$0xf]
    %v1698 = vld [vmem:[#allocation8 + $0xfc] sm:$0xf]
    %v1699 = vld [vmem:[#allocation8 + $0x100] sm:$0xf]
    %v1700 = vld [vmem:[#allocation8 + $0x104] sm:$0xf]
    %v1701 = vld [vmem:[#allocation8 + $0x108] sm:$0xf]
    %v1702 = vld [vmem:[#allocation8 + $0x10c] sm:$0xf]
    %v1703 = vld [vmem:[#allocation8 + $0x110] sm:$0xf]
    %v1704 = vld [vmem:[#allocation8 + $0x114] sm:$0xf]
    %v1705 = vld [vmem:[#allocation8 + $0x118] sm:$0xf]
    %v1706 = vld [vmem:[#allocation8 + $0x11c] sm:$0xf]
    %v1707 = vld [vmem:[#allocation8 + $0x120] sm:$0xf]
    %v1708 = vld [vmem:[#allocation8 + $0x124] sm:$0xf]
    %v1709 = vld [vmem:[#allocation8 + $0x128] sm:$0xf]
    %v1710 = vld [vmem:[#allocation8 + $0x12c] sm:$0xf]
    %v1711 = vld [vmem:[#allocation8 + $0x130] sm:$0xf]
    %v1712 = vld [vmem:[#allocation8 + $0x134] sm:$0xf]
    %v1713 = vld [vmem:[#allocation8 + $0x138] sm:$0xf]
    %v1714 = vld [vmem:[#allocation8 + $0x13c] sm:$0xf]
    %v1715 = vld [vmem:[#allocation8 + $0x140] sm:$0xf]
    %v1716 = vld [vmem:[#allocation8 + $0x144] sm:$0xf]
    %v1717 = vld [vmem:[#allocation8 + $0x148] sm:$0xf]
    %v1718 = vld [vmem:[#allocation8 + $0x14c] sm:$0xf]
    %v1719 = vld [vmem:[#allocation8 + $0x150] sm:$0xf]
    %v1720 = vld [vmem:[#allocation8 + $0x154] sm:$0xf]
    %v1721 = vld [vmem:[#allocation8 + $0x158] sm:$0xf]
    %v1722 = vld [vmem:[#allocation8 + $0x15c] sm:$0xf]
    %v1723 = vld [vmem:[#allocation8 + $0x160] sm:$0xf]
    %v1724 = vld [vmem:[#allocation8 + $0x164] sm:$0xf]
    %v1725 = vld [vmem:[#allocation8 + $0x168] sm:$0xf]
    %v1726 = vld [vmem:[#allocation8 + $0x16c] sm:$0xf]
    %v1727 = vld [vmem:[#allocation8 + $0x170] sm:$0xf]
    %v1728 = vld [vmem:[#allocation8 + $0x174] sm:$0xf]
    %v1729 = vld [vmem:[#allocation8 + $0x178] sm:$0xf]
    %v1730 = vld [vmem:[#allocation8 + $0x17c] sm:$0xf]
    %v1731 = vld [vmem:[#allocation8 + $0x180] sm:$0xf]
    %v1732 = vld [vmem:[#allocation8 + $0x184] sm:$0xf]
    %v1733 = vld [vmem:[#allocation8 + $0x188] sm:$0xf]
    %v1734 = vld [vmem:[#allocation8 + $0x18c] sm:$0xf]
    %v1735 = vld [vmem:[#allocation8 + $0x190] sm:$0xf]
    %v1736 = vld [vmem:[#allocation8 + $0x194] sm:$0xf]
    %v1737 = vld [vmem:[#allocation8 + $0x198] sm:$0xf]
    %v1738 = vld [vmem:[#allocation8 + $0x19c] sm:$0xf]
    %v1739 = vld [vmem:[#allocation8 + $0x1a0] sm:$0xf]
    %v1740 = vld [vmem:[#allocation8 + $0x1a4] sm:$0xf]
    %v1741 = vld [vmem:[#allocation8 + $0x1a8] sm:$0xf]
    %v1742 = vld [vmem:[#allocation8 + $0x1ac] sm:$0xf]
    %v1743 = vld [vmem:[#allocation8 + $0x1b0] sm:$0xf]
    %v1744 = vld [vmem:[#allocation8 + $0x1b4] sm:$0xf]
    %v1745 = vld [vmem:[#allocation8 + $0x1b8] sm:$0xf]
    %v1746 = vld [vmem:[#allocation8 + $0x1bc] sm:$0xf]
    %v1747 = vld [vmem:[#allocation8 + $0x1c0] sm:$0xf]
    %v1748 = vld [vmem:[#allocation8 + $0x1c4] sm:$0xf]
    %v1749 = vld [vmem:[#allocation8 + $0x1c8] sm:$0xf]
    %v1750 = vld [vmem:[#allocation8 + $0x1cc] sm:$0xf]
    %v1751 = vld [vmem:[#allocation8 + $0x1d0] sm:$0xf]
    %v1752 = vld [vmem:[#allocation8 + $0x1d4] sm:$0xf]
    %v1753 = vld [vmem:[#allocation8 + $0x1d8] sm:$0xf]
    %v1754 = vld [vmem:[#allocation8 + $0x1dc] sm:$0xf]
    %v1755 = vld [vmem:[#allocation8 + $0x1e0] sm:$0xf]
    %v1756 = vld [vmem:[#allocation8 + $0x1e4] sm:$0xf]
    %v1757 = vld [vmem:[#allocation8 + $0x1e8] sm:$0xf]
    %v1758 = vld [vmem:[#allocation8 + $0x1ec] sm:$0xf]
    %v1759 = vld [vmem:[#allocation8 + $0x1f0] sm:$0xf]
    %v1760 = vld [vmem:[#allocation8 + $0x1f4] sm:$0xf]
    %v1761 = vld [vmem:[#allocation8 + $0x1f8] sm:$0xf]
    %v1762 = vld [vmem:[#allocation8 + $0x1fc] sm:$0xf]
    %v1763 = vld [vmem:[#allocation8 + $0x200] sm:$0xf]
    %v1764 = vld [vmem:[#allocation8 + $0x204] sm:$0xf]
    %v1765 = vld [vmem:[#allocation8 + $0x208] sm:$0xf]
    %v1766 = vld [vmem:[#allocation8 + $0x20c] sm:$0xf]
    %v1767 = vld [vmem:[#allocation8 + $0x210] sm:$0xf]
    %v1768 = vld [vmem:[#allocation8 + $0x214] sm:$0xf]
    %v1769 = vld [vmem:[#allocation8 + $0x218] sm:$0xf]
    %v1770 = vld [vmem:[#allocation8 + $0x21c] sm:$0xf]
    %v1771 = vld [vmem:[#allocation8 + $0x220] sm:$0xf]
    %v1772 = vld [vmem:[#allocation8 + $0x224] sm:$0xf]
    %v1773 = vld [vmem:[#allocation8 + $0x228] sm:$0xf]
    %v1774 = vld [vmem:[#allocation8 + $0x22c] sm:$0xf]
    %v1775 = vld [vmem:[#allocation8 + $0x230] sm:$0xf]
    %v1776 = vld [vmem:[#allocation8 + $0x234] sm:$0xf]
    %v1777 = vld [vmem:[#allocation8 + $0x238] sm:$0xf]
    %v1778 = vld [vmem:[#allocation8 + $0x23c] sm:$0xf]
    %v1779 = vld [vmem:[#allocation8 + $0x240] sm:$0xf]
    %v1780 = vld [vmem:[#allocation8 + $0x244] sm:$0xf]
    %v1781 = vld [vmem:[#allocation8 + $0x248] sm:$0xf]
    %v1782 = vld [vmem:[#allocation8 + $0x24c] sm:$0xf]
    %v1783 = vld [vmem:[#allocation8 + $0x250] sm:$0xf]
    %v1784 = vld [vmem:[#allocation8 + $0x254] sm:$0xf]
    %v1785 = vld [vmem:[#allocation8 + $0x258] sm:$0xf]
    %v1786 = vld [vmem:[#allocation8 + $0x25c] sm:$0xf]
    %v1787 = vld [vmem:[#allocation8 + $0x260] sm:$0xf]
    %v1788 = vld [vmem:[#allocation8 + $0x264] sm:$0xf]
    %v1789 = vld [vmem:[#allocation8 + $0x268] sm:$0xf]
    %v1790 = vld [vmem:[#allocation8 + $0x26c] sm:$0xf]
    %v1791 = vld [vmem:[#allocation8 + $0x270] sm:$0xf]
    %v1792 = vld [vmem:[#allocation8 + $0x274] sm:$0xf]
    %v1793 = vld [vmem:[#allocation8 + $0x278] sm:$0xf]
    %v1794 = vld [vmem:[#allocation8 + $0x27c] sm:$0xf]
    %v1795 = vld [vmem:[#allocation8 + $0x280] sm:$0xf]
    %v1796 = vld [vmem:[#allocation8 + $0x284] sm:$0xf]
    %v1797 = vld [vmem:[#allocation8 + $0x288] sm:$0xf]
    %v1798 = vld [vmem:[#allocation8 + $0x28c] sm:$0xf]
    %v1799 = vld [vmem:[#allocation8 + $0x290] sm:$0xf]
    %v1800 = vld [vmem:[#allocation8 + $0x294] sm:$0xf]
    %v1801 = vld [vmem:[#allocation8 + $0x298] sm:$0xf]
    %v1802 = vld [vmem:[#allocation8 + $0x29c] sm:$0xf]
    %v1803 = vld [vmem:[#allocation8 + $0x2a0] sm:$0xf]
    %v1804 = vld [vmem:[#allocation8 + $0x2a4] sm:$0xf]
    %v1805 = vld [vmem:[#allocation8 + $0x2a8] sm:$0xf]
    %v1806 = vld [vmem:[#allocation8 + $0x2ac] sm:$0xf]
    %v1807 = vld [vmem:[#allocation8 + $0x2b0] sm:$0xf]
    %v1808 = vld [vmem:[#allocation8 + $0x2b4] sm:$0xf]
    %v1809 = vld [vmem:[#allocation8 + $0x2b8] sm:$0xf]
    %v1810 = vld [vmem:[#allocation8 + $0x2bc] sm:$0xf]
    %v1811 = vld [vmem:[#allocation8 + $0x2c0] sm:$0xf]
    %v1812 = vld [vmem:[#allocation8 + $0x2c4] sm:$0xf]
    %v1813 = vld [vmem:[#allocation8 + $0x2c8] sm:$0xf]
    %v1814 = vld [vmem:[#allocation8 + $0x2cc] sm:$0xf]
    %v1815 = vld [vmem:[#allocation8 + $0x2d0] sm:$0xf]
    %v1816 = vld [vmem:[#allocation8 + $0x2d4] sm:$0xf]
    %v1817 = vld [vmem:[#allocation8 + $0x2d8] sm:$0xf]
    %v1818 = vld [vmem:[#allocation8 + $0x2dc] sm:$0xf]
    %v1819 = vld [vmem:[#allocation8 + $0x2e0] sm:$0xf]
    %v1820 = vld [vmem:[#allocation8 + $0x2e4] sm:$0xf]
    %v1821 = vld [vmem:[#allocation8 + $0x2e8] sm:$0xf]
    %v1822 = vld [vmem:[#allocation8 + $0x2ec] sm:$0xf]
    %v1823 = vld [vmem:[#allocation8 + $0x2f0] sm:$0xf]
    %v1824 = vld [vmem:[#allocation8 + $0x2f4] sm:$0xf]
    %v1825 = vld [vmem:[#allocation8 + $0x2f8] sm:$0xf]
    %v1826 = vld [vmem:[#allocation8 + $0x2fc] sm:$0xf]
    %v1827 = vld [vmem:[%s4] sm:$0x1]
    %v1829 = vlaneseq
    %v1830 = vshrl.u32 %v1829, 7
    %v1831 = vsub.s32 0, %v1830
    %v1832 = vrot.slane %v1827, %v1831
    %v1840 = vunpack.c.l.b16 %v1629
    %v1841 = vunpack.c.h.b16 %v1629
    %v1842 = vunpack.c.l.b16 %v1630
    %v1843 = vunpack.c.h.b16 %v1630
    %v1844 = vunpack.c.l.b16 %v1631
    %v1845 = vunpack.c.h.b16 %v1631
    %v1846 = vunpack.c.l.b16 %v1632
    %v1847 = vunpack.c.h.b16 %v1632
    %v1848 = vunpack.c.l.b16 %v1633
    %v1849 = vunpack.c.h.b16 %v1633
    %v1850 = vunpack.c.l.b16 %v1634
    %v1851 = vunpack.c.h.b16 %v1634
    %v1852 = vpack.c.b16 %v1840, %v1840
    %v1853 = vpack.c.b16 %v1841, %v1841
    %v1854 = vpack.c.b16 %v1842, %v1842
    %v1855 = vpack.c.b16 %v1843, %v1843
    %v1856 = vpack.c.b16 %v1844, %v1844
    %v1857 = vpack.c.b16 %v1845, %v1845
    %v1858 = vpack.c.b16 %v1846, %v1846
    %v1859 = vpack.c.b16 %v1847, %v1847
    %v1860 = vpack.c.b16 %v1848, %v1848
    %v1861 = vpack.c.b16 %v1849, %v1849
    %v1862 = vpack.c.b16 %v1850, %v1850
    %v1863 = vpack.c.b16 %v1851, %v1851
    %v2068 = vunpack.c.l.b16 %v1635
    %v2069 = vunpack.c.l.b16 %v1636
    %v2070 = vunpack.c.l.b16 %v1637
    %v2071 = vunpack.c.l.b16 %v1638
    %v2072 = vunpack.c.l.b16 %v1639
    %v2073 = vunpack.c.l.b16 %v1640
    %v2074 = vunpack.c.l.b16 %v1641
    %v2075 = vunpack.c.l.b16 %v1642
    %v2076 = vunpack.c.l.b16 %v1643
    %v2077 = vunpack.c.l.b16 %v1644
    %v2078 = vunpack.c.l.b16 %v1645
    %v2079 = vunpack.c.l.b16 %v1646
    %v2080 = vunpack.c.l.b16 %v1647
    %v2081 = vunpack.c.l.b16 %v1648
    %v2082 = vunpack.c.l.b16 %v1649
    %v2083 = vunpack.c.l.b16 %v1650
    %v2084 = vunpack.c.l.b16 %v1651
    %v2085 = vunpack.c.l.b16 %v1652
    %v2086 = vunpack.c.l.b16 %v1653
    %v2087 = vunpack.c.l.b16 %v1654
    %v2088 = vunpack.c.l.b16 %v1655
    %v2089 = vunpack.c.l.b16 %v1656
    %v2090 = vunpack.c.l.b16 %v1657
    %v2091 = vunpack.c.l.b16 %v1658
    %v2092 = vunpack.c.l.b16 %v1659
    %v2093 = vunpack.c.l.b16 %v1660
    %v2094 = vunpack.c.l.b16 %v1661
    %v2095 = vunpack.c.l.b16 %v1662
    %v2096 = vunpack.c.l.b16 %v1663
    %v2097 = vunpack.c.l.b16 %v1664
    %v2098 = vunpack.c.l.b16 %v1665
    %v2099 = vunpack.c.l.b16 %v1666
    %v2100 = vunpack.c.l.b16 %v1667
    %v2101 = vunpack.c.l.b16 %v1668
    %v2102 = vunpack.c.l.b16 %v1669
    %v2103 = vunpack.c.l.b16 %v1670
    %v2104 = vunpack.c.l.b16 %v1671
    %v2105 = vunpack.c.l.b16 %v1672
    %v2106 = vunpack.c.l.b16 %v1673
    %v2107 = vunpack.c.l.b16 %v1674
    %v2108 = vunpack.c.l.b16 %v1675
    %v2109 = vunpack.c.l.b16 %v1676
    %v2110 = vunpack.c.l.b16 %v1677
    %v2111 = vunpack.c.l.b16 %v1678
    %v2112 = vunpack.c.l.b16 %v1679
    %v2113 = vunpack.c.l.b16 %v1680
    %v2114 = vunpack.c.l.b16 %v1681
    %v2115 = vunpack.c.l.b16 %v1682
    %v2116 = vunpack.c.l.b16 %v1683
    %v2117 = vunpack.c.l.b16 %v1684
    %v2118 = vunpack.c.l.b16 %v1685
    %v2119 = vunpack.c.l.b16 %v1686
    %v2120 = vunpack.c.l.b16 %v1687
    %v2121 = vunpack.c.l.b16 %v1688
    %v2122 = vunpack.c.l.b16 %v1689
    %v2123 = vunpack.c.l.b16 %v1690
    %v2124 = vunpack.c.l.b16 %v1691
    %v2125 = vunpack.c.l.b16 %v1692
    %v2126 = vunpack.c.l.b16 %v1693
    %v2127 = vunpack.c.l.b16 %v1694
    %v2128 = vunpack.c.l.b16 %v1695
    %v2129 = vunpack.c.l.b16 %v1696
    %v2130 = vunpack.c.l.b16 %v1697
    %v2131 = vunpack.c.l.b16 %v1698
    %v2132 = vunpack.c.l.b16 %v1699
    %v2133 = vunpack.c.l.b16 %v1700
    %v2134 = vunpack.c.l.b16 %v1701
    %v2135 = vunpack.c.l.b16 %v1702
    %v2136 = vunpack.c.l.b16 %v1703
    %v2137 = vunpack.c.l.b16 %v1704
    %v2138 = vunpack.c.l.b16 %v1705
    %v2139 = vunpack.c.l.b16 %v1706
    %v2140 = vunpack.c.l.b16 %v1707
    %v2141 = vunpack.c.l.b16 %v1708
    %v2142 = vunpack.c.l.b16 %v1709
    %v2143 = vunpack.c.l.b16 %v1710
    %v2144 = vunpack.c.l.b16 %v1711
    %v2145 = vunpack.c.l.b16 %v1712
    %v2146 = vunpack.c.l.b16 %v1713
    %v2147 = vunpack.c.l.b16 %v1714
    %v2148 = vunpack.c.l.b16 %v1715
    %v2149 = vunpack.c.l.b16 %v1716
    %v2150 = vunpack.c.l.b16 %v1717
    %v2151 = vunpack.c.l.b16 %v1718
    %v2152 = vunpack.c.l.b16 %v1719
    %v2153 = vunpack.c.l.b16 %v1720
    %v2154 = vunpack.c.l.b16 %v1721
    %v2155 = vunpack.c.l.b16 %v1722
    %v2156 = vunpack.c.l.b16 %v1723
    %v2157 = vunpack.c.l.b16 %v1724
    %v2158 = vunpack.c.l.b16 %v1725
    %v2159 = vunpack.c.l.b16 %v1726
    %v2160 = vunpack.c.l.b16 %v1727
    %v2161 = vunpack.c.l.b16 %v1728
    %v2162 = vunpack.c.l.b16 %v1729
    %v2163 = vunpack.c.l.b16 %v1730
    %v2164 = vunpack.c.l.b16 %v1731
    %v2165 = vunpack.c.l.b16 %v1732
    %v2166 = vunpack.c.l.b16 %v1733
    %v2167 = vunpack.c.l.b16 %v1734
    %v2168 = vunpack.c.l.b16 %v1735
    %v2169 = vunpack.c.l.b16 %v1736
    %v2170 = vunpack.c.l.b16 %v1737
    %v2171 = vunpack.c.l.b16 %v1738
    %v2172 = vunpack.c.l.b16 %v1739
    %v2173 = vunpack.c.l.b16 %v1740
    %v2174 = vunpack.c.l.b16 %v1741
    %v2175 = vunpack.c.l.b16 %v1742
    %v2176 = vunpack.c.l.b16 %v1743
    %v2177 = vunpack.c.l.b16 %v1744
    %v2178 = vunpack.c.l.b16 %v1745
    %v2179 = vunpack.c.l.b16 %v1746
    %v2180 = vunpack.c.l.b16 %v1747
    %v2181 = vunpack.c.l.b16 %v1748
    %v2182 = vunpack.c.l.b16 %v1749
    %v2183 = vunpack.c.l.b16 %v1750
    %v2184 = vunpack.c.l.b16 %v1751
    %v2185 = vunpack.c.l.b16 %v1752
    %v2186 = vunpack.c.l.b16 %v1753
    %v2187 = vunpack.c.l.b16 %v1754
    %v2188 = vunpack.c.l.b16 %v1755
    %v2189 = vunpack.c.l.b16 %v1756
    %v2190 = vunpack.c.l.b16 %v1757
    %v2191 = vunpack.c.l.b16 %v1758
    %v2192 = vunpack.c.l.b16 %v1759
    %v2193 = vunpack.c.l.b16 %v1760
    %v2194 = vunpack.c.l.b16 %v1761
    %v2195 = vunpack.c.l.b16 %v1762
    %v2196 = vunpack.c.l.b16 %v1763
    %v2197 = vunpack.c.l.b16 %v1764
    %v2198 = vunpack.c.l.b16 %v1765
    %v2199 = vunpack.c.l.b16 %v1766
    %v2200 = vunpack.c.l.b16 %v1767
    %v2201 = vunpack.c.l.b16 %v1768
    %v2202 = vunpack.c.l.b16 %v1769
    %v2203 = vunpack.c.l.b16 %v1770
    %v2204 = vunpack.c.l.b16 %v1771
    %v2205 = vunpack.c.l.b16 %v1772
    %v2206 = vunpack.c.l.b16 %v1773
    %v2207 = vunpack.c.l.b16 %v1774
    %v2208 = vunpack.c.l.b16 %v1775
    %v2209 = vunpack.c.l.b16 %v1776
    %v2210 = vunpack.c.l.b16 %v1777
    %v2211 = vunpack.c.l.b16 %v1778
    %v2212 = vunpack.c.l.b16 %v1779
    %v2213 = vunpack.c.l.b16 %v1780
    %v2214 = vunpack.c.l.b16 %v1781
    %v2215 = vunpack.c.l.b16 %v1782
    %v2216 = vunpack.c.l.b16 %v1783
    %v2217 = vunpack.c.l.b16 %v1784
    %v2218 = vunpack.c.l.b16 %v1785
    %v2219 = vunpack.c.l.b16 %v1786
    %v2220 = vunpack.c.l.b16 %v1787
    %v2221 = vunpack.c.l.b16 %v1788
    %v2222 = vunpack.c.l.b16 %v1789
    %v2223 = vunpack.c.l.b16 %v1790
    %v2224 = vunpack.c.l.b16 %v1791
    %v2225 = vunpack.c.l.b16 %v1792
    %v2226 = vunpack.c.l.b16 %v1793
    %v2227 = vunpack.c.l.b16 %v1794
    %v2228 = vunpack.c.l.b16 %v1795
    %v2229 = vunpack.c.l.b16 %v1796
    %v2230 = vunpack.c.l.b16 %v1797
    %v2231 = vunpack.c.l.b16 %v1798
    %v2232 = vunpack.c.l.b16 %v1799
    %v2233 = vunpack.c.l.b16 %v1800
    %v2234 = vunpack.c.l.b16 %v1801
    %v2235 = vunpack.c.l.b16 %v1802
    %v2236 = vunpack.c.l.b16 %v1803
    %v2237 = vunpack.c.l.b16 %v1804
    %v2238 = vunpack.c.l.b16 %v1805
    %v2239 = vunpack.c.l.b16 %v1806
    %v2240 = vunpack.c.l.b16 %v1807
    %v2241 = vunpack.c.l.b16 %v1808
    %v2242 = vunpack.c.l.b16 %v1809
    %v2243 = vunpack.c.l.b16 %v1810
    %v2244 = vunpack.c.l.b16 %v1811
    %v2245 = vunpack.c.l.b16 %v1812
    %v2246 = vunpack.c.l.b16 %v1813
    %v2247 = vunpack.c.l.b16 %v1814
    %v2248 = vunpack.c.l.b16 %v1815
    %v2249 = vunpack.c.l.b16 %v1816
    %v2250 = vunpack.c.l.b16 %v1817
    %v2251 = vunpack.c.l.b16 %v1818
    %v2252 = vunpack.c.l.b16 %v1819
    %v2253 = vunpack.c.l.b16 %v1820
    %v2254 = vunpack.c.l.b16 %v1821
    %v2255 = vunpack.c.l.b16 %v1822
    %v2256 = vunpack.c.l.b16 %v1823
    %v2257 = vunpack.c.l.b16 %v1824
    %v2258 = vunpack.c.l.b16 %v1825
    %v2259 = vunpack.c.l.b16 %v1826
    %v2260 = vpack.c.b16 %v2069, %v2068
    %v2261 = vpack.c.b16 %v2071, %v2070
    %v2262 = vpack.c.b16 %v2073, %v2072
    %v2263 = vpack.c.b16 %v2075, %v2074
    %v2264 = vpack.c.b16 %v2077, %v2076
    %v2265 = vpack.c.b16 %v2079, %v2078
    %v2266 = vpack.c.b16 %v2081, %v2080
    %v2267 = vpack.c.b16 %v2083, %v2082
    %v2268 = vpack.c.b16 %v2085, %v2084
    %v2269 = vpack.c.b16 %v2087, %v2086
    %v2270 = vpack.c.b16 %v2089, %v2088
    %v2271 = vpack.c.b16 %v2091, %v2090
    %v2272 = vpack.c.b16 %v2093, %v2092
    %v2273 = vpack.c.b16 %v2095, %v2094
    %v2274 = vpack.c.b16 %v2097, %v2096
    %v2275 = vpack.c.b16 %v2099, %v2098
    %v2276 = vpack.c.b16 %v2101, %v2100
    %v2277 = vpack.c.b16 %v2103, %v2102
    %v2278 = vpack.c.b16 %v2105, %v2104
    %v2279 = vpack.c.b16 %v2107, %v2106
    %v2280 = vpack.c.b16 %v2109, %v2108
    %v2281 = vpack.c.b16 %v2111, %v2110
    %v2282 = vpack.c.b16 %v2113, %v2112
    %v2283 = vpack.c.b16 %v2115, %v2114
    %v2284 = vpack.c.b16 %v2117, %v2116
    %v2285 = vpack.c.b16 %v2119, %v2118
    %v2286 = vpack.c.b16 %v2121, %v2120
    %v2287 = vpack.c.b16 %v2123, %v2122
    %v2288 = vpack.c.b16 %v2125, %v2124
    %v2289 = vpack.c.b16 %v2127, %v2126
    %v2290 = vpack.c.b16 %v2129, %v2128
    %v2291 = vpack.c.b16 %v2131, %v2130
    %v2292 = vpack.c.b16 %v2133, %v2132
    %v2293 = vpack.c.b16 %v2135, %v2134
    %v2294 = vpack.c.b16 %v2137, %v2136
    %v2295 = vpack.c.b16 %v2139, %v2138
    %v2296 = vpack.c.b16 %v2141, %v2140
    %v2297 = vpack.c.b16 %v2143, %v2142
    %v2298 = vpack.c.b16 %v2145, %v2144
    %v2299 = vpack.c.b16 %v2147, %v2146
    %v2300 = vpack.c.b16 %v2149, %v2148
    %v2301 = vpack.c.b16 %v2151, %v2150
    %v2302 = vpack.c.b16 %v2153, %v2152
    %v2303 = vpack.c.b16 %v2155, %v2154
    %v2304 = vpack.c.b16 %v2157, %v2156
    %v2305 = vpack.c.b16 %v2159, %v2158
    %v2306 = vpack.c.b16 %v2161, %v2160
    %v2307 = vpack.c.b16 %v2163, %v2162
    %v2308 = vpack.c.b16 %v2165, %v2164
    %v2309 = vpack.c.b16 %v2167, %v2166
    %v2310 = vpack.c.b16 %v2169, %v2168
    %v2311 = vpack.c.b16 %v2171, %v2170
    %v2312 = vpack.c.b16 %v2173, %v2172
    %v2313 = vpack.c.b16 %v2175, %v2174
    %v2314 = vpack.c.b16 %v2177, %v2176
    %v2315 = vpack.c.b16 %v2179, %v2178
    %v2316 = vpack.c.b16 %v2181, %v2180
    %v2317 = vpack.c.b16 %v2183, %v2182
    %v2318 = vpack.c.b16 %v2185, %v2184
    %v2319 = vpack.c.b16 %v2187, %v2186
    %v2320 = vpack.c.b16 %v2189, %v2188
    %v2321 = vpack.c.b16 %v2191, %v2190
    %v2322 = vpack.c.b16 %v2193, %v2192
    %v2323 = vpack.c.b16 %v2195, %v2194
    %v2324 = vpack.c.b16 %v2197, %v2196
    %v2325 = vpack.c.b16 %v2199, %v2198
    %v2326 = vpack.c.b16 %v2201, %v2200
    %v2327 = vpack.c.b16 %v2203, %v2202
    %v2328 = vpack.c.b16 %v2205, %v2204
    %v2329 = vpack.c.b16 %v2207, %v2206
    %v2330 = vpack.c.b16 %v2209, %v2208
    %v2331 = vpack.c.b16 %v2211, %v2210
    %v2332 = vpack.c.b16 %v2213, %v2212
    %v2333 = vpack.c.b16 %v2215, %v2214
    %v2334 = vpack.c.b16 %v2217, %v2216
    %v2335 = vpack.c.b16 %v2219, %v2218
    %v2336 = vpack.c.b16 %v2221, %v2220
    %v2337 = vpack.c.b16 %v2223, %v2222
    %v2338 = vpack.c.b16 %v2225, %v2224
    %v2339 = vpack.c.b16 %v2227, %v2226
    %v2340 = vpack.c.b16 %v2229, %v2228
    %v2341 = vpack.c.b16 %v2231, %v2230
    %v2342 = vpack.c.b16 %v2233, %v2232
    %v2343 = vpack.c.b16 %v2235, %v2234
    %v2344 = vpack.c.b16 %v2237, %v2236
    %v2345 = vpack.c.b16 %v2239, %v2238
    %v2346 = vpack.c.b16 %v2241, %v2240
    %v2347 = vpack.c.b16 %v2243, %v2242
    %v2348 = vpack.c.b16 %v2245, %v2244
    %v2349 = vpack.c.b16 %v2247, %v2246
    %v2350 = vpack.c.b16 %v2249, %v2248
    %v2351 = vpack.c.b16 %v2251, %v2250
    %v2352 = vpack.c.b16 %v2253, %v2252
    %v2353 = vpack.c.b16 %v2255, %v2254
    %v2354 = vpack.c.b16 %v2257, %v2256
    %v2355 = vpack.c.b16 %v2259, %v2258
    %2452 = vmatprep.subr.bf16.mxu0 0
    %2453 = vmatpush1.bf16.msra.mxu0 %v2260
    %2454 = vmatprep.subr.bf16.mxu0 0
    %2455 = vmatpush1.bf16.msra.mxu0 %v2261
    %2456 = vmatprep.subr.bf16.mxu0 0
    %2457 = vmatpush1.bf16.msra.mxu0 %v2262
    %2458 = vmatprep.subr.bf16.mxu0 0
    %2459 = vmatpush1.bf16.msra.mxu0 %v2263
    %2460 = vmatprep.subr.bf16.mxu0 0
    %2461 = vmatpush1.bf16.msra.mxu0 %v2264
    %2462 = vmatprep.subr.bf16.mxu0 0
    %2463 = vmatpush1.bf16.msra.mxu0 %v2265
    %2464 = vmatprep.subr.bf16.mxu0 0
    %2465 = vmatpush1.bf16.msra.mxu0 %v2266
    %2466 = vmatprep.subr.bf16.mxu0 0
    %2467 = vmatpush1.bf16.msra.mxu0 %v2267
    %2468 = vmatprep.subr.bf16.mxu0 0
    %2469 = vmatpush1.bf16.msra.mxu0 %v2268
    %2470 = vmatprep.subr.bf16.mxu0 0
    %2471 = vmatpush1.bf16.msra.mxu0 %v2269
    %2472 = vmatprep.subr.bf16.mxu0 0
    %2473 = vmatpush1.bf16.msra.mxu0 %v2270
    %2474 = vmatprep.subr.bf16.mxu0 0
    %2475 = vmatpush1.bf16.msra.mxu0 %v2271
    %2476 = vmatprep.subr.bf16.mxu0 0
    %2477 = vmatpush1.bf16.msra.mxu0 %v2272
    %2478 = vmatprep.subr.bf16.mxu0 0
    %2479 = vmatpush1.bf16.msra.mxu0 %v2273
    %2480 = vmatprep.subr.bf16.mxu0 0
    %2481 = vmatpush1.bf16.msra.mxu0 %v2274
    %2482 = vmatprep.subr.bf16.mxu0 0
    %2483 = vmatpush1.bf16.msra.mxu0 %v2275
    %2484 = vmatprep.mubr.bf16.mxu0 %v1853
    %2485 = vmatmul.mubr.bf16.gmra.mrb[0].mxu0 %v1852
    %v2486 = vpop.f32.mrb[0].mxu0
    %v2487 = vadd.f32 %v1832, %v2486
    %v2488 = vpop.f32.mrb[0].mxu0
    %v2489 = vpop.f32.mrb[0].mxu0
    %v2490 = vpop.f32.mrb[0].mxu0
    %2491 = vdwg.mxu0
    %2492 = vmatprep.subr.bf16.mxu0 0
    %2493 = vmatpush1.bf16.msra.mxu0 %v2276
    %2494 = vmatprep.subr.bf16.mxu0 0
    %2495 = vmatpush1.bf16.msra.mxu0 %v2277
    %2496 = vmatprep.subr.bf16.mxu0 0
    %2497 = vmatpush1.bf16.msra.mxu0 %v2278
    %2498 = vmatprep.subr.bf16.mxu0 0
    %2499 = vmatpush1.bf16.msra.mxu0 %v2279
    %2500 = vmatprep.subr.bf16.mxu0 0
    %2501 = vmatpush1.bf16.msra.mxu0 %v2280
    %2502 = vmatprep.subr.bf16.mxu0 0
    %2503 = vmatpush1.bf16.msra.mxu0 %v2281
    %2504 = vmatprep.subr.bf16.mxu0 0
    %2505 = vmatpush1.bf16.msra.mxu0 %v2282
    %2506 = vmatprep.subr.bf16.mxu0 0
    %2507 = vmatpush1.bf16.msra.mxu0 %v2283
    %2508 = vmatprep.subr.bf16.mxu0 0
    %2509 = vmatpush1.bf16.msra.mxu0 %v2284
    %2510 = vmatprep.subr.bf16.mxu0 0
    %2511 = vmatpush1.bf16.msra.mxu0 %v2285
    %2512 = vmatprep.subr.bf16.mxu0 0
    %2513 = vmatpush1.bf16.msra.mxu0 %v2286
    %2514 = vmatprep.subr.bf16.mxu0 0
    %2515 = vmatpush1.bf16.msra.mxu0 %v2287
    %2516 = vmatprep.subr.bf16.mxu0 0
    %2517 = vmatpush1.bf16.msra.mxu0 %v2288
    %2518 = vmatprep.subr.bf16.mxu0 0
    %2519 = vmatpush1.bf16.msra.mxu0 %v2289
    %2520 = vmatprep.subr.bf16.mxu0 0
    %2521 = vmatpush1.bf16.msra.mxu0 %v2290
    %2522 = vmatprep.subr.bf16.mxu0 0
    %2523 = vmatpush1.bf16.msra.mxu0 %v2291
    %2524 = vmatprep.mubr.bf16.mxu0 %v1855
    %2525 = vmatmul.mubr.bf16.gmra.mrb[0].mxu0 %v1854
    %v2526 = vpop.f32.mrb[0].mxu0
    %v2527 = vadd.f32 %v2487, %v2526
    %v2528 = vpop.f32.mrb[0].mxu0
    %v2529 = vpop.f32.mrb[0].mxu0
    %v2530 = vpop.f32.mrb[0].mxu0
    %2531 = vdwg.mxu0
    %2532 = vmatprep.subr.bf16.mxu0 0
    %2533 = vmatpush1.bf16.msra.mxu0 %v2292
    %2534 = vmatprep.subr.bf16.mxu0 0
    %2535 = vmatpush1.bf16.msra.mxu0 %v2293
    %2536 = vmatprep.subr.bf16.mxu0 0
    %2537 = vmatpush1.bf16.msra.mxu0 %v2294
    %2538 = vmatprep.subr.bf16.mxu0 0
    %2539 = vmatpush1.bf16.msra.mxu0 %v2295
    %2540 = vmatprep.subr.bf16.mxu0 0
    %2541 = vmatpush1.bf16.msra.mxu0 %v2296
    %2542 = vmatprep.subr.bf16.mxu0 0
    %2543 = vmatpush1.bf16.msra.mxu0 %v2297
    %2544 = vmatprep.subr.bf16.mxu0 0
    %2545 = vmatpush1.bf16.msra.mxu0 %v2298
    %2546 = vmatprep.subr.bf16.mxu0 0
    %2547 = vmatpush1.bf16.msra.mxu0 %v2299
    %2548 = vmatprep.subr.bf16.mxu0 0
    %2549 = vmatpush1.bf16.msra.mxu0 %v2300
    %2550 = vmatprep.subr.bf16.mxu0 0
    %2551 = vmatpush1.bf16.msra.mxu0 %v2301
    %2552 = vmatprep.subr.bf16.mxu0 0
    %2553 = vmatpush1.bf16.msra.mxu0 %v2302
    %2554 = vmatprep.subr.bf16.mxu0 0
    %2555 = vmatpush1.bf16.msra.mxu0 %v2303
    %2556 = vmatprep.subr.bf16.mxu0 0
    %2557 = vmatpush1.bf16.msra.mxu0 %v2304
    %2558 = vmatprep.subr.bf16.mxu0 0
    %2559 = vmatpush1.bf16.msra.mxu0 %v2305
    %2560 = vmatprep.subr.bf16.mxu0 0
    %2561 = vmatpush1.bf16.msra.mxu0 %v2306
    %2562 = vmatprep.subr.bf16.mxu0 0
    %2563 = vmatpush1.bf16.msra.mxu0 %v2307
    %2564 = vmatprep.mubr.bf16.mxu0 %v1857
    %2565 = vmatmul.mubr.bf16.gmra.mrb[0].mxu0 %v1856
    %v2566 = vpop.f32.mrb[0].mxu0
    %v2567 = vadd.f32 %v2527, %v2566
    %v2568 = vpop.f32.mrb[0].mxu0
    %v2569 = vpop.f32.mrb[0].mxu0
    %v2570 = vpop.f32.mrb[0].mxu0
    %2571 = vdwg.mxu0
    %2572 = vmatprep.subr.bf16.mxu0 0
    %2573 = vmatpush1.bf16.msra.mxu0 %v2308
    %2574 = vmatprep.subr.bf16.mxu0 0
    %2575 = vmatpush1.bf16.msra.mxu0 %v2309
    %2576 = vmatprep.subr.bf16.mxu0 0
    %2577 = vmatpush1.bf16.msra.mxu0 %v2310
    %2578 = vmatprep.subr.bf16.mxu0 0
    %2579 = vmatpush1.bf16.msra.mxu0 %v2311
    %2580 = vmatprep.subr.bf16.mxu0 0
    %2581 = vmatpush1.bf16.msra.mxu0 %v2312
    %2582 = vmatprep.subr.bf16.mxu0 0
    %2583 = vmatpush1.bf16.msra.mxu0 %v2313
    %2584 = vmatprep.subr.bf16.mxu0 0
    %2585 = vmatpush1.bf16.msra.mxu0 %v2314
    %2586 = vmatprep.subr.bf16.mxu0 0
    %2587 = vmatpush1.bf16.msra.mxu0 %v2315
    %2588 = vmatprep.subr.bf16.mxu0 0
    %2589 = vmatpush1.bf16.msra.mxu0 %v2316
    %2590 = vmatprep.subr.bf16.mxu0 0
    %2591 = vmatpush1.bf16.msra.mxu0 %v2317
    %2592 = vmatprep.subr.bf16.mxu0 0
    %2593 = vmatpush1.bf16.msra.mxu0 %v2318
    %2594 = vmatprep.subr.bf16.mxu0 0
    %2595 = vmatpush1.bf16.msra.mxu0 %v2319
    %2596 = vmatprep.subr.bf16.mxu0 0
    %2597 = vmatpush1.bf16.msra.mxu0 %v2320
    %2598 = vmatprep.subr.bf16.mxu0 0
    %2599 = vmatpush1.bf16.msra.mxu0 %v2321
    %2600 = vmatprep.subr.bf16.mxu0 0
    %2601 = vmatpush1.bf16.msra.mxu0 %v2322
    %2602 = vmatprep.subr.bf16.mxu0 0
    %2603 = vmatpush1.bf16.msra.mxu0 %v2323
    %2604 = vmatprep.mubr.bf16.mxu0 %v1859
    %2605 = vmatmul.mubr.bf16.gmra.mrb[0].mxu0 %v1858
    %v2606 = vpop.f32.mrb[0].mxu0
    %v2607 = vadd.f32 %v2567, %v2606
    %v2608 = vpop.f32.mrb[0].mxu0
    %v2609 = vpop.f32.mrb[0].mxu0
    %v2610 = vpop.f32.mrb[0].mxu0
    %2611 = vdwg.mxu0
    %2612 = vmatprep.subr.bf16.mxu0 0
    %2613 = vmatpush1.bf16.msra.mxu0 %v2324
    %2614 = vmatprep.subr.bf16.mxu0 0
    %2615 = vmatpush1.bf16.msra.mxu0 %v2325
    %2616 = vmatprep.subr.bf16.mxu0 0
    %2617 = vmatpush1.bf16.msra.mxu0 %v2326
    %2618 = vmatprep.subr.bf16.mxu0 0
    %2619 = vmatpush1.bf16.msra.mxu0 %v2327
    %2620 = vmatprep.subr.bf16.mxu0 0
    %2621 = vmatpush1.bf16.msra.mxu0 %v2328
    %2622 = vmatprep.subr.bf16.mxu0 0
    %2623 = vmatpush1.bf16.msra.mxu0 %v2329
    %2624 = vmatprep.subr.bf16.mxu0 0
    %2625 = vmatpush1.bf16.msra.mxu0 %v2330
    %2626 = vmatprep.subr.bf16.mxu0 0
    %2627 = vmatpush1.bf16.msra.mxu0 %v2331
    %2628 = vmatprep.subr.bf16.mxu0 0
    %2629 = vmatpush1.bf16.msra.mxu0 %v2332
    %2630 = vmatprep.subr.bf16.mxu0 0
    %2631 = vmatpush1.bf16.msra.mxu0 %v2333
    %2632 = vmatprep.subr.bf16.mxu0 0
    %2633 = vmatpush1.bf16.msra.mxu0 %v2334
    %2634 = vmatprep.subr.bf16.mxu0 0
    %2635 = vmatpush1.bf16.msra.mxu0 %v2335
    %2636 = vmatprep.subr.bf16.mxu0 0
    %2637 = vmatpush1.bf16.msra.mxu0 %v2336
    %2638 = vmatprep.subr.bf16.mxu0 0
    %2639 = vmatpush1.bf16.msra.mxu0 %v2337
    %2640 = vmatprep.subr.bf16.mxu0 0
    %2641 = vmatpush1.bf16.msra.mxu0 %v2338
    %2642 = vmatprep.subr.bf16.mxu0 0
    %2643 = vmatpush1.bf16.msra.mxu0 %v2339
    %2644 = vmatprep.mubr.bf16.mxu0 %v1861
    %2645 = vmatmul.mubr.bf16.gmra.mrb[0].mxu0 %v1860
    %v2646 = vpop.f32.mrb[0].mxu0
    %v2647 = vadd.f32 %v2607, %v2646
    %v2648 = vpop.f32.mrb[0].mxu0
    %v2649 = vpop.f32.mrb[0].mxu0
    %v2650 = vpop.f32.mrb[0].mxu0
    %2651 = vdwg.mxu0
    %2652 = vmatprep.subr.bf16.mxu0 0
    %2653 = vmatpush1.bf16.msra.mxu0 %v2340
    %2654 = vmatprep.subr.bf16.mxu0 0
    %2655 = vmatpush1.bf16.msra.mxu0 %v2341
    %2656 = vmatprep.subr.bf16.mxu0 0
    %2657 = vmatpush1.bf16.msra.mxu0 %v2342
    %2658 = vmatprep.subr.bf16.mxu0 0
    %2659 = vmatpush1.bf16.msra.mxu0 %v2343
    %2660 = vmatprep.subr.bf16.mxu0 0
    %2661 = vmatpush1.bf16.msra.mxu0 %v2344
    %2662 = vmatprep.subr.bf16.mxu0 0
    %2663 = vmatpush1.bf16.msra.mxu0 %v2345
    %2664 = vmatprep.subr.bf16.mxu0 0
    %2665 = vmatpush1.bf16.msra.mxu0 %v2346
    %2666 = vmatprep.subr.bf16.mxu0 0
    %2667 = vmatpush1.bf16.msra.mxu0 %v2347
    %2668 = vmatprep.subr.bf16.mxu0 0
    %2669 = vmatpush1.bf16.msra.mxu0 %v2348
    %2670 = vmatprep.subr.bf16.mxu0 0
    %2671 = vmatpush1.bf16.msra.mxu0 %v2349
    %2672 = vmatprep.subr.bf16.mxu0 0
    %2673 = vmatpush1.bf16.msra.mxu0 %v2350
    %2674 = vmatprep.subr.bf16.mxu0 0
    %2675 = vmatpush1.bf16.msra.mxu0 %v2351
    %2676 = vmatprep.subr.bf16.mxu0 0
    %2677 = vmatpush1.bf16.msra.mxu0 %v2352
    %2678 = vmatprep.subr.bf16.mxu0 0
    %2679 = vmatpush1.bf16.msra.mxu0 %v2353
    %2680 = vmatprep.subr.bf16.mxu0 0
    %2681 = vmatpush1.bf16.msra.mxu0 %v2354
    %2682 = vmatprep.subr.bf16.mxu0 0
    %2683 = vmatpush1.bf16.msra.mxu0 %v2355
    %2684 = vmatprep.mubr.bf16.mxu0 %v1863
    %2685 = vmatmul.mubr.bf16.gmra.mrb[0].mxu0 %v1862
    %v2686 = vpop.f32.mrb[0].mxu0
    %v2687 = vadd.f32 %v2647, %v2686
    %v2688 = vpop.f32.mrb[0].mxu0
    %v2689 = vpop.f32.mrb[0].mxu0
    %v2690 = vpop.f32.mrb[0].mxu0
    %2691 = vdwg.mxu0
    %v2692 = vmax.f32 %v2687, 0.0
    %v2693 = vpack.c.bf16 %v2692, %v2692
    %v2694 = vld [vmem:[#allocation9] sm:$0xf]
    %v2695 = vld [vmem:[#allocation9 + $0x4] sm:$0xf]
    %v2696 = vld [vmem:[#allocation9 + $0x8] sm:$0xf]
    %v2697 = vld [vmem:[#allocation9 + $0xc] sm:$0xf]
    %v2698 = vld [vmem:[#allocation9 + $0x10] sm:$0xf]
    %v2699 = vld [vmem:[#allocation9 + $0x14] sm:$0xf]
    %v2700 = vld [vmem:[#allocation9 + $0x18] sm:$0xf]
    %v2701 = vld [vmem:[#allocation9 + $0x1c] sm:$0xf]
    %v2702 = vld [vmem:[#allocation9 + $0x20] sm:$0xf]
    %v2703 = vld [vmem:[#allocation9 + $0x24] sm:$0xf]
    %v2704 = vld [vmem:[#allocation9 + $0x28] sm:$0xf]
    %v2705 = vld [vmem:[#allocation9 + $0x2c] sm:$0xf]
    %v2706 = vld [vmem:[#allocation9 + $0x30] sm:$0xf]
    %v2707 = vld [vmem:[#allocation9 + $0x34] sm:$0xf]
    %v2708 = vld [vmem:[#allocation9 + $0x38] sm:$0xf]
    %v2709 = vld [vmem:[#allocation9 + $0x3c] sm:$0xf]
    %v2710 = vld [vmem:[%s6] sm:$0x1]
    %v2712 = vlaneseq
    %v2713 = vshrl.u32 %v2712, 7
    %v2714 = vsub.s32 0, %v2713
    %v2715 = vrot.slane %v2710, %v2714
    %v2733 = vunpack.c.l.b16 %v2694
    %v2734 = vunpack.c.l.b16 %v2695
    %v2735 = vunpack.c.l.b16 %v2696
    %v2736 = vunpack.c.l.b16 %v2697
    %v2737 = vunpack.c.l.b16 %v2698
    %v2738 = vunpack.c.l.b16 %v2699
    %v2739 = vunpack.c.l.b16 %v2700
    %v2740 = vunpack.c.l.b16 %v2701
    %v2741 = vunpack.c.l.b16 %v2702
    %v2742 = vunpack.c.l.b16 %v2703
    %v2743 = vunpack.c.l.b16 %v2704
    %v2744 = vunpack.c.l.b16 %v2705
    %v2745 = vunpack.c.l.b16 %v2706
    %v2746 = vunpack.c.l.b16 %v2707
    %v2747 = vunpack.c.l.b16 %v2708
    %v2748 = vunpack.c.l.b16 %v2709
    %v2749 = vpack.c.b16 %v2734, %v2733
    %v2750 = vpack.c.b16 %v2736, %v2735
    %v2751 = vpack.c.b16 %v2738, %v2737
    %v2752 = vpack.c.b16 %v2740, %v2739
    %v2753 = vpack.c.b16 %v2742, %v2741
    %v2754 = vpack.c.b16 %v2744, %v2743
    %v2755 = vpack.c.b16 %v2746, %v2745
    %v2756 = vpack.c.b16 %v2748, %v2747
    %2765 = vmatprep.subr.bf16.mxu0 0
    %2766 = vmatpush1.bf16.msra.mxu0 %v2749
    %2767 = vmatprep.subr.bf16.mxu0 0
    %2768 = vmatpush1.bf16.msra.mxu0 %v2750
    %2769 = vmatprep.subr.bf16.mxu0 0
    %2770 = vmatpush1.bf16.msra.mxu0 %v2751
    %2771 = vmatprep.subr.bf16.mxu0 0
    %2772 = vmatpush1.bf16.msra.mxu0 %v2752
    %2773 = vmatprep.subr.bf16.mxu0 0
    %2774 = vmatpush1.bf16.msra.mxu0 %v2753
    %2775 = vmatprep.subr.bf16.mxu0 0
    %2776 = vmatpush1.bf16.msra.mxu0 %v2754
    %2777 = vmatprep.subr.bf16.mxu0 0
    %2778 = vmatpush1.bf16.msra.mxu0 %v2755
    %2779 = vmatprep.subr.bf16.mxu0 0
    %2780 = vmatpush1.bf16.msra.mxu0 %v2756
    %2781 = vmatprep.subr.bf16.mxu0 0
    %2782 = vmatpush1.bf16.msra.mxu0 0
    %2783 = vmatprep.subr.bf16.mxu0 0
    %2784 = vmatpush1.bf16.msra.mxu0 0
    %2785 = vmatprep.subr.bf16.mxu0 0
    %2786 = vmatpush1.bf16.msra.mxu0 0
    %2787 = vmatprep.subr.bf16.mxu0 0
    %2788 = vmatpush1.bf16.msra.mxu0 0
    %2789 = vmatprep.subr.bf16.mxu0 0
    %2790 = vmatpush1.bf16.msra.mxu0 0
    %2791 = vmatprep.subr.bf16.mxu0 0
    %2792 = vmatpush1.bf16.msra.mxu0 0
    %2793 = vmatprep.subr.bf16.mxu0 0
    %2794 = vmatpush1.bf16.msra.mxu0 0
    %2795 = vmatprep.subr.bf16.mxu0 0
    %2796 = vmatpush1.bf16.msra.mxu0 0
    %2797 = vmatprep.mubr.bf16.mxu0 0
    %2798 = vmatmul.mubr.bf16.gmra.mrb[0].mxu0 %v2693
    %v2799 = vpop.f32.mrb[0].mxu0
    %v2800 = vadd.f32 %v2715, %v2799
    %v2801 = vpop.f32.mrb[0].mxu0
    %v2802 = vpop.f32.mrb[0].mxu0
    %v2803 = vpop.f32.mrb[0].mxu0
    %2804 = vdwg.mxu0
    %2805 = vst [vmem:[#allocation11] sm:$0xff] %v2800
    // Predicated region
    $region46: #{tpu_custom_call.1} parent=1 // pred_check
      _
    $region47: #{tpu_custom_call.1} parent=1 // pred_check_branch
      %2807 = sbr.rel (0) target = $region49
    $region48: #{tpu_custom_call.1} parent=1 // pred_region
      %s2809 = ssub.s32 128, 128
      %2810 = vsyncadd [#allocation5], %s2809
      %s2812 = sshll.u32 [#allocation11], 4
      %s2813 = int_to_ptr.vmem [resolvable:$true] %s2812
      %2815 = dma.vmem_to_hbm [thread:$0]  %s2813, 128, %s7, [#allocation5]
    $region49: #{tpu_custom_call.1} parent=1 // pred_fallthru
      _
    // Predicated region
    $region50: #{tpu_custom_call.1} parent=1 // pred_check
      _
    $region51: #{tpu_custom_call.1} parent=1 // pred_check_branch
      %2817 = sbr.rel (0) target = $region53
    $region52: #{tpu_custom_call.1} parent=1 // pred_region
      %2818 = dma.done [#allocation5], 128
    $region53: #{tpu_custom_call.1} parent=1 // pred_fallthru
      _
    %2819 = vsyncpa [#allocation4], 1
    %2820 = vsyncpa [#allocation7], 1
    %2821 = vsyncpa [#allocation10], 1
    %2822 = vsyncpa [#allocation5], 1

</llo_original>
